<compile_context>
chip_gen: v7x
topology: tpu7x:2x2x1
jax: 0.10.0
libtpu: 0.0.40
codegen_flags: <defaults>
</compile_context>

<pallas_src>
import functools
import math

import numpy as np
import jax
import jax.numpy as jnp
from jax.experimental import pallas as pl
from jax.experimental.pallas import tpu as pltpu


# --------------------------- small helpers ----------------------------------

def _layernorm(x, g, b, eps):
    # f32 LayerNorm over the last dim (torch eps=1e-5, biased variance).
    mu = jnp.mean(x, axis=-1, keepdims=True)
    var = jnp.mean(jnp.square(x - mu), axis=-1, keepdims=True)
    return (x - mu) * jax.lax.rsqrt(var + eps) * g + b


def _head_selector(dim, heads):
    # (dim, heads) 0/1 indicator: G[d, h] = 1 iff column d belongs to head h.
    # Built with numpy at trace time -> baked as a jit constant (no per-call ops).
    dh = dim // heads
    d = np.arange(dim)[:, None]
    h = np.arange(heads)[None, :]
    g = (d // dh == h).astype(np.float32)
    return (jnp.asarray(g, dtype=jnp.bfloat16),       # (D, H)
            jnp.asarray(g.T, dtype=jnp.bfloat16))     # (H, D)


# ----------------------------- fused kernel ---------------------------------

def _fused_stack_kernel(
    h0_ref, hsel_ref, hselt_ref,
    w_qkv_ref, w_out_ref, w_ff1_ref, b_ff1_ref, w_ff2_ref, vecs_ref,
    w_logits_ref, b_logits_ref,
    logits_ref,
    *, depth, L, N, eps,
):
    x = h0_ref[...]                       # (M, D) f32, M = L*N
    G = hsel_ref[...]                     # (D, H) bf16 head indicator (exact 0/1)
    Gt = hselt_ref[...]                   # (H, D) bf16

    for layer in range(depth):            # unrolled: depth is small and static
        wqkv = w_qkv_ref[layer]           # (3, D, D) bf16 (Q slice pre-scaled)
        vecs = vecs_ref[layer]            # (9, D) f32 packed small vectors
        xb = x.astype(jnp.bfloat16)

        # ---------- multi-head self-attention over the L axis ----------------
        q_full = jnp.dot(xb, wqkv[0], preferred_element_type=jnp.float32) + vecs[0:1]
        k_full = jnp.dot(xb, wqkv[1], preferred_element_type=jnp.float32) + vecs[1:2]
        v_full = jnp.dot(xb, wqkv[2], preferred_element_type=jnp.float32) + vecs[2:3]

        q = [q_full[l * N:(l + 1) * N, :] for l in range(L)]
        k = [k_full[l * N:(l + 1) * N, :] for l in range(L)]
        v = [v_full[l * N:(l + 1) * N, :] for l in range(L)]

        attn_rows = []
        for l in range(L):
            # per-head scores: sum of q_l*k_m within each head's columns -> (N, H)
            s = [jnp.dot((q[l] * k[m]).astype(jnp.bfloat16), G,
                         preferred_element_type=jnp.float32) for m in range(L)]
            s_max = s[0]
            for m in range(1, L):
                s_max = jnp.maximum(s_max, s[m])
            p = [jnp.exp(s[m] - s_max) for m in range(L)]
            denom = p[0]
            for m in range(1, L):
                denom = denom + p[m]
            inv = 1.0 / denom             # exact softmax normalization
            # weighted value sum: broadcast per-head prob back over D columns
            o_l = jnp.dot((p[0] * inv).astype(jnp.bfloat16), Gt,
                          preferred_element_type=jnp.float32) * v[0]
            for m in range(1, L):
                o_l = o_l + jnp.dot((p[m] * inv).astype(jnp.bfloat16), Gt,
                                    preferred_element_type=jnp.float32) * v[m]
            attn_rows.append(o_l)

        attn_o = jnp.concatenate(attn_rows, axis=0) if L > 1 else attn_rows[0]
        attn_o = (jnp.dot(attn_o.astype(jnp.bfloat16), w_out_ref[layer],
                          preferred_element_type=jnp.float32) + vecs[3:4])

        # ---------- add & norm 1 ----------------------------------------------
        x = _layernorm(x + attn_o, vecs[4:5], vecs[5:6], eps)

        # ---------- feed-forward (bias + ReLU + bf16 cast fused) --------------
        h_ff = jnp.dot(x.astype(jnp.bfloat16), w_ff1_ref[layer],
                       preferred_element_type=jnp.float32)
        h_ff = jnp.maximum(h_ff + b_ff1_ref[layer], 0.0).astype(jnp.bfloat16)
        ff = (jnp.dot(h_ff, w_ff2_ref[layer],
                      preferred_element_type=jnp.float32) + vecs[6:7])

        # ---------- add & norm 2 ----------------------------------------------
        x = _layernorm(x + ff, vecs[7:8], vecs[8:9], eps)

    # ---------- final logits: lane-dense (M, V=128) HBM store ------------------
    logits_ref[...] = (jnp.dot(x.astype(jnp.bfloat16), w_logits_ref[...],
                               preferred_element_type=jnp.float32)
                       + b_logits_ref[...])


# --------------------------- model wrapper -----------------------------------

def music_transformer_forward(params, tokens, heads):
    B, S = tokens.shape
    D = params["token_emb"].shape[1]
    V = params["w_logits"].shape[1]
    depth = params["w_qkv"].shape[0]
    M = B * S
    L, N = B, S        # batch_first=False: attention runs along the B axis

    # Embedding gather + positional add stay in XLA (single fused gather/add).
    h0 = (jnp.take(params["token_emb"], tokens, axis=0)
          + params["pos_emb"][:, :S]).reshape(M, D).astype(jnp.float32)

    hsel, hselt = _head_selector(D, heads)

    def vmem():
        return pl.BlockSpec(memory_space=pltpu.MemorySpace.VMEM)

    logits = pl.pallas_call(
        functools.partial(_fused_stack_kernel, depth=depth, L=L, N=N, eps=1e-5),
        out_shape=jax.ShapeDtypeStruct((M, V), jnp.float32),
        in_specs=[vmem() for _ in range(11)],
        out_specs=vmem(),
    )(h0, hsel, hselt,
      params["w_qkv"], params["w_out"], params["w_ff1"], params["b_ff1"],
      params["w_ff2"], params["vecs"], params["w_logits"], params["b_logits"])

    return logits.reshape(B, S, V)


def init_params(key, vocab, dim, depth, heads, ff):
    kk = jax.random.split(key, 3 + 4 * depth)

    def nrm(k, shape, scale=0.02):
        return scale * jax.random.normal(k, shape, dtype=jnp.float32)

    dh = dim // heads
    q_scale = 1.0 / math.sqrt(dh)

    w_qkv = jnp.stack([nrm(kk[3 + 4 * i + 0], (3, dim, dim)) for i in range(depth)])
    # Fold the attention 1/sqrt(dh) scale into the Q projection weights.
    w_qkv = w_qkv.at[:, 0].multiply(q_scale)

    # Packed per-layer small vectors (depth, 9, dim); row layout:
    #   0: b_q (pre-scaled by 1/sqrt(dh))  1: b_k   2: b_v   3: b_out
    #   4: ln1_g   5: ln1_b   6: b_ff2   7: ln2_g   8: ln2_b
    vecs = jnp.zeros((depth, 9, dim), jnp.float32)
    vecs = vecs.at[:, 4].set(1.0)
    vecs = vecs.at[:, 7].set(1.0)

    params = {
        "token_emb": jax.random.normal(kk[0], (vocab, dim), dtype=jnp.float32),
        "pos_emb": jax.random.normal(kk[1], (1, 2048, dim), dtype=jnp.float32),
        "w_logits": nrm(kk[2], (dim, vocab)).astype(jnp.bfloat16),
        "b_logits": jnp.zeros((1, vocab), jnp.float32),
        # per-layer matmul weights stacked along a leading depth axis (bf16)
        "w_qkv": w_qkv.astype(jnp.bfloat16),
        "w_out": jnp.stack([nrm(kk[3 + 4 * i + 1], (dim, dim))
                            for i in range(depth)]).astype(jnp.bfloat16),
        "w_ff1": jnp.stack([nrm(kk[3 + 4 * i + 2], (dim, ff))
                            for i in range(depth)]).astype(jnp.bfloat16),
        "b_ff1": jnp.zeros((depth, 1, ff), jnp.float32),
        "w_ff2": jnp.stack([nrm(kk[3 + 4 * i + 3], (ff, dim))
                            for i in range(depth)]).astype(jnp.bfloat16),
        "vecs": vecs,
    }
    return params


if __name__ == "__main__":
    B, S = 2, 8
    VOCAB, DIM, DEPTH, HEADS = 128, 32, 2, 4
    FF = 2048  # PyTorch TransformerEncoderLayer default dim_feedforward

    key = jax.random.PRNGKey(0)
    pkey, xkey = jax.random.split(key)
    params = init_params(pkey, VOCAB, DIM, DEPTH, HEADS, FF)
    tokens = jax.random.randint(xkey, (B, S), 0, VOCAB, dtype=jnp.int32)

    fwd = jax.jit(functools.partial(music_transformer_forward, heads=HEADS))
    logits = jax.block_until_ready(fwd(params, tokens))

    assert logits.shape == (B, S, VOCAB), logits.shape
    assert logits.dtype == jnp.float32
    assert bool(jnp.all(jnp.isfinite(logits)))
    print("KERNEL_OK")
</pallas_src>

<mosaic_0001>
module attributes {stable_mosaic.version = 11 : i64} {
  func.func @_fused_stack_kernel(%arg0: memref<16x32xf32, #tpu.memory_space<vmem>>, %arg1: memref<32x4xbf16, #tpu.memory_space<vmem>>, %arg2: memref<4x32xbf16, #tpu.memory_space<vmem>>, %arg3: memref<2x3x32x32xbf16, #tpu.memory_space<vmem>>, %arg4: memref<2x32x32xbf16, #tpu.memory_space<vmem>>, %arg5: memref<2x32x2048xbf16, #tpu.memory_space<vmem>>, %arg6: memref<2x1x2048xf32, #tpu.memory_space<vmem>>, %arg7: memref<2x2048x32xbf16, #tpu.memory_space<vmem>>, %arg8: memref<2x9x32xf32, #tpu.memory_space<vmem>>, %arg9: memref<32x128xbf16, #tpu.memory_space<vmem>>, %arg10: memref<1x128xf32, #tpu.memory_space<vmem>>, %arg11: memref<16x128xf32, #tpu.memory_space<vmem>>) attributes {dimension_semantics = [], scalar_prefetch = 0 : i64, scratch_operands = 0 : i64, tpu.core_type = #tpu.core_type<tc>} {
    %c0 = arith.constant 0 : index
    %c0_0 = arith.constant 0 : index
    %0 = vector.load %arg0[%c0, %c0_0] : memref<16x32xf32, #tpu.memory_space<vmem>>, vector<16x32xf32>
    %c0_1 = arith.constant 0 : index
    %c0_2 = arith.constant 0 : index
    %1 = vector.load %arg1[%c0_1, %c0_2] : memref<32x4xbf16, #tpu.memory_space<vmem>>, vector<32x4xbf16>
    %c0_3 = arith.constant 0 : index
    %c0_4 = arith.constant 0 : index
    %2 = vector.load %arg2[%c0_3, %c0_4] : memref<4x32xbf16, #tpu.memory_space<vmem>>, vector<4x32xbf16>
    %c0_5 = arith.constant 0 : index
    %c0_6 = arith.constant 0 : index
    %c0_7 = arith.constant 0 : index
    %c0_8 = arith.constant 0 : index
    %3 = vector.load %arg3[%c0_5, %c0_6, %c0_7, %c0_8] : memref<2x3x32x32xbf16, #tpu.memory_space<vmem>>, vector<1x3x32x32xbf16>
    %4 = vector.shape_cast %3 : vector<1x3x32x32xbf16> to vector<3x32x32xbf16>
    %c0_9 = arith.constant 0 : index
    %c0_10 = arith.constant 0 : index
    %c0_11 = arith.constant 0 : index
    %5 = vector.load %arg8[%c0_9, %c0_10, %c0_11] : memref<2x9x32xf32, #tpu.memory_space<vmem>>, vector<1x9x32xf32>
    %6 = vector.shape_cast %5 : vector<1x9x32xf32> to vector<9x32xf32>
    %7 = arith.truncf %0 : vector<16x32xf32> to vector<16x32xbf16>
    %8 = vector.extract_strided_slice %4 {offsets = [0, 0, 0], sizes = [1, 32, 32], strides = [1, 1, 1]} : vector<3x32x32xbf16> to vector<1x32x32xbf16>
    %9 = vector.shape_cast %8 : vector<1x32x32xbf16> to vector<32x32xbf16>
    %cst = arith.constant dense<0.000000e+00> : vector<16x32xf32>
    %10 = tpu.matmul %7, %9, %cst {dimension_numbers = #tpu.dot_dimension_numbers<[1], [0], [0], [1], [0, 0, 1, 1], [], []>} : vector<16x32xbf16>, vector<32x32xbf16>, vector<16x32xf32> -> vector<16x32xf32>
    %11 = vector.extract_strided_slice %6 {offsets = [0, 0], sizes = [1, 32], strides = [1, 1]} : vector<9x32xf32> to vector<1x32xf32>
    %12 = vector.broadcast %11 : vector<1x32xf32> to vector<16x32xf32>
    %13 = arith.addf %10, %12 : vector<16x32xf32>
    %14 = vector.extract_strided_slice %4 {offsets = [1, 0, 0], sizes = [1, 32, 32], strides = [1, 1, 1]} : vector<3x32x32xbf16> to vector<1x32x32xbf16>
    %15 = vector.shape_cast %14 : vector<1x32x32xbf16> to vector<32x32xbf16>
    %cst_12 = arith.constant dense<0.000000e+00> : vector<16x32xf32>
    %16 = tpu.matmul %7, %15, %cst_12 {dimension_numbers = #tpu.dot_dimension_numbers<[1], [0], [0], [1], [0, 0, 1, 1], [], []>} : vector<16x32xbf16>, vector<32x32xbf16>, vector<16x32xf32> -> vector<16x32xf32>
    %17 = vector.extract_strided_slice %6 {offsets = [1, 0], sizes = [1, 32], strides = [1, 1]} : vector<9x32xf32> to vector<1x32xf32>
    %18 = vector.broadcast %17 : vector<1x32xf32> to vector<16x32xf32>
    %19 = arith.addf %16, %18 : vector<16x32xf32>
    %20 = vector.extract_strided_slice %4 {offsets = [2, 0, 0], sizes = [1, 32, 32], strides = [1, 1, 1]} : vector<3x32x32xbf16> to vector<1x32x32xbf16>
    %21 = vector.shape_cast %20 : vector<1x32x32xbf16> to vector<32x32xbf16>
    %cst_13 = arith.constant dense<0.000000e+00> : vector<16x32xf32>
    %22 = tpu.matmul %7, %21, %cst_13 {dimension_numbers = #tpu.dot_dimension_numbers<[1], [0], [0], [1], [0, 0, 1, 1], [], []>} : vector<16x32xbf16>, vector<32x32xbf16>, vector<16x32xf32> -> vector<16x32xf32>
    %23 = vector.extract_strided_slice %6 {offsets = [2, 0], sizes = [1, 32], strides = [1, 1]} : vector<9x32xf32> to vector<1x32xf32>
    %24 = vector.broadcast %23 : vector<1x32xf32> to vector<16x32xf32>
    %25 = arith.addf %22, %24 : vector<16x32xf32>
    %26 = vector.extract_strided_slice %13 {offsets = [0, 0], sizes = [8, 32], strides = [1, 1]} : vector<16x32xf32> to vector<8x32xf32>
    %27 = vector.extract_strided_slice %13 {offsets = [8, 0], sizes = [8, 32], strides = [1, 1]} : vector<16x32xf32> to vector<8x32xf32>
    %28 = vector.extract_strided_slice %19 {offsets = [0, 0], sizes = [8, 32], strides = [1, 1]} : vector<16x32xf32> to vector<8x32xf32>
    %29 = vector.extract_strided_slice %19 {offsets = [8, 0], sizes = [8, 32], strides = [1, 1]} : vector<16x32xf32> to vector<8x32xf32>
    %30 = vector.extract_strided_slice %25 {offsets = [0, 0], sizes = [8, 32], strides = [1, 1]} : vector<16x32xf32> to vector<8x32xf32>
    %31 = vector.extract_strided_slice %25 {offsets = [8, 0], sizes = [8, 32], strides = [1, 1]} : vector<16x32xf32> to vector<8x32xf32>
    %32 = arith.mulf %26, %28 : vector<8x32xf32>
    %33 = arith.truncf %32 : vector<8x32xf32> to vector<8x32xbf16>
    %cst_14 = arith.constant dense<0.000000e+00> : vector<8x4xf32>
    %34 = tpu.matmul %33, %1, %cst_14 {dimension_numbers = #tpu.dot_dimension_numbers<[1], [0], [0], [1], [0, 0, 1, 1], [], []>} : vector<8x32xbf16>, vector<32x4xbf16>, vector<8x4xf32> -> vector<8x4xf32>
    %35 = arith.mulf %26, %29 : vector<8x32xf32>
    %36 = arith.truncf %35 : vector<8x32xf32> to vector<8x32xbf16>
    %cst_15 = arith.constant dense<0.000000e+00> : vector<8x4xf32>
    %37 = tpu.matmul %36, %1, %cst_15 {dimension_numbers = #tpu.dot_dimension_numbers<[1], [0], [0], [1], [0, 0, 1, 1], [], []>} : vector<8x32xbf16>, vector<32x4xbf16>, vector<8x4xf32> -> vector<8x4xf32>
    %38 = arith.maximumf %34, %37 : vector<8x4xf32>
    %39 = arith.subf %34, %38 : vector<8x4xf32>
    %40 = math.exp %39 : vector<8x4xf32>
    %41 = arith.subf %37, %38 : vector<8x4xf32>
    %42 = math.exp %41 : vector<8x4xf32>
    %43 = arith.addf %40, %42 : vector<8x4xf32>
    %cst_16 = arith.constant 1.000000e+00 : f32
    %44 = vector.broadcast %cst_16 : f32 to vector<8x4xf32>
    %45 = arith.divf %44, %43 : vector<8x4xf32>
    %46 = arith.mulf %40, %45 : vector<8x4xf32>
    %47 = arith.truncf %46 : vector<8x4xf32> to vector<8x4xbf16>
    %cst_17 = arith.constant dense<0.000000e+00> : vector<8x32xf32>
    %48 = tpu.matmul %47, %2, %cst_17 {dimension_numbers = #tpu.dot_dimension_numbers<[1], [0], [0], [1], [0, 0, 1, 1], [], []>} : vector<8x4xbf16>, vector<4x32xbf16>, vector<8x32xf32> -> vector<8x32xf32>
    %49 = arith.mulf %48, %30 : vector<8x32xf32>
    %50 = arith.mulf %42, %45 : vector<8x4xf32>
    %51 = arith.truncf %50 : vector<8x4xf32> to vector<8x4xbf16>
    %cst_18 = arith.constant dense<0.000000e+00> : vector<8x32xf32>
    %52 = tpu.matmul %51, %2, %cst_18 {dimension_numbers = #tpu.dot_dimension_numbers<[1], [0], [0], [1], [0, 0, 1, 1], [], []>} : vector<8x4xbf16>, vector<4x32xbf16>, vector<8x32xf32> -> vector<8x32xf32>
    %53 = arith.mulf %52, %31 : vector<8x32xf32>
    %54 = arith.addf %49, %53 : vector<8x32xf32>
    %55 = arith.mulf %27, %28 : vector<8x32xf32>
    %56 = arith.truncf %55 : vector<8x32xf32> to vector<8x32xbf16>
    %cst_19 = arith.constant dense<0.000000e+00> : vector<8x4xf32>
    %57 = tpu.matmul %56, %1, %cst_19 {dimension_numbers = #tpu.dot_dimension_numbers<[1], [0], [0], [1], [0, 0, 1, 1], [], []>} : vector<8x32xbf16>, vector<32x4xbf16>, vector<8x4xf32> -> vector<8x4xf32>
    %58 = arith.mulf %27, %29 : vector<8x32xf32>
    %59 = arith.truncf %58 : vector<8x32xf32> to vector<8x32xbf16>
    %cst_20 = arith.constant dense<0.000000e+00> : vector<8x4xf32>
    %60 = tpu.matmul %59, %1, %cst_20 {dimension_numbers = #tpu.dot_dimension_numbers<[1], [0], [0], [1], [0, 0, 1, 1], [], []>} : vector<8x32xbf16>, vector<32x4xbf16>, vector<8x4xf32> -> vector<8x4xf32>
    %61 = arith.maximumf %57, %60 : vector<8x4xf32>
    %62 = arith.subf %57, %61 : vector<8x4xf32>
    %63 = math.exp %62 : vector<8x4xf32>
    %64 = arith.subf %60, %61 : vector<8x4xf32>
    %65 = math.exp %64 : vector<8x4xf32>
    %66 = arith.addf %63, %65 : vector<8x4xf32>
    %cst_21 = arith.constant 1.000000e+00 : f32
    %67 = vector.broadcast %cst_21 : f32 to vector<8x4xf32>
    %68 = arith.divf %67, %66 : vector<8x4xf32>
    %69 = arith.mulf %63, %68 : vector<8x4xf32>
    %70 = arith.truncf %69 : vector<8x4xf32> to vector<8x4xbf16>
    %cst_22 = arith.constant dense<0.000000e+00> : vector<8x32xf32>
    %71 = tpu.matmul %70, %2, %cst_22 {dimension_numbers = #tpu.dot_dimension_numbers<[1], [0], [0], [1], [0, 0, 1, 1], [], []>} : vector<8x4xbf16>, vector<4x32xbf16>, vector<8x32xf32> -> vector<8x32xf32>
    %72 = arith.mulf %71, %30 : vector<8x32xf32>
    %73 = arith.mulf %65, %68 : vector<8x4xf32>
    %74 = arith.truncf %73 : vector<8x4xf32> to vector<8x4xbf16>
    %cst_23 = arith.constant dense<0.000000e+00> : vector<8x32xf32>
    %75 = tpu.matmul %74, %2, %cst_23 {dimension_numbers = #tpu.dot_dimension_numbers<[1], [0], [0], [1], [0, 0, 1, 1], [], []>} : vector<8x4xbf16>, vector<4x32xbf16>, vector<8x32xf32> -> vector<8x32xf32>
    %76 = arith.mulf %75, %31 : vector<8x32xf32>
    %77 = arith.addf %72, %76 : vector<8x32xf32>
    %78 = tpu.concatenate %54, %77 in 0 : vector<8x32xf32>, vector<8x32xf32> -> vector<16x32xf32>
    %79 = arith.truncf %78 : vector<16x32xf32> to vector<16x32xbf16>
    %c0_24 = arith.constant 0 : index
    %c0_25 = arith.constant 0 : index
    %c0_26 = arith.constant 0 : index
    %80 = vector.load %arg4[%c0_24, %c0_25, %c0_26] : memref<2x32x32xbf16, #tpu.memory_space<vmem>>, vector<1x32x32xbf16>
    %81 = vector.shape_cast %80 : vector<1x32x32xbf16> to vector<32x32xbf16>
    %cst_27 = arith.constant dense<0.000000e+00> : vector<16x32xf32>
    %82 = tpu.matmul %79, %81, %cst_27 {dimension_numbers = #tpu.dot_dimension_numbers<[1], [0], [0], [1], [0, 0, 1, 1], [], []>} : vector<16x32xbf16>, vector<32x32xbf16>, vector<16x32xf32> -> vector<16x32xf32>
    %83 = vector.extract_strided_slice %6 {offsets = [3, 0], sizes = [1, 32], strides = [1, 1]} : vector<9x32xf32> to vector<1x32xf32>
    %84 = vector.broadcast %83 : vector<1x32xf32> to vector<16x32xf32>
    %85 = arith.addf %82, %84 : vector<16x32xf32>
    %86 = arith.addf %0, %85 : vector<16x32xf32>
    %87 = vector.extract_strided_slice %6 {offsets = [4, 0], sizes = [1, 32], strides = [1, 1]} : vector<9x32xf32> to vector<1x32xf32>
    %88 = vector.extract_strided_slice %6 {offsets = [5, 0], sizes = [1, 32], strides = [1, 1]} : vector<9x32xf32> to vector<1x32xf32>
    %cst_28 = arith.constant dense<0.000000e+00> : vector<16xf32>
    %89 = vector.multi_reduction <add>, %86, %cst_28 [1] : vector<16x32xf32> to vector<16xf32>
    %90 = vector.shape_cast %89 : vector<16xf32> to vector<16x1xf32>
    %cst_29 = arith.constant 3.200000e+01 : f32
    %91 = vector.broadcast %cst_29 : f32 to vector<16x1xf32>
    %92 = arith.divf %90, %91 : vector<16x1xf32>
    %93 = vector.broadcast %92 : vector<16x1xf32> to vector<16x32xf32>
    %94 = arith.subf %86, %93 : vector<16x32xf32>
    %95 = arith.mulf %94, %94 : vector<16x32xf32>
    %cst_30 = arith.constant dense<0.000000e+00> : vector<16xf32>
    %96 = vector.multi_reduction <add>, %95, %cst_30 [1] : vector<16x32xf32> to vector<16xf32>
    %97 = vector.shape_cast %96 : vector<16xf32> to vector<16x1xf32>
    %cst_31 = arith.constant 3.200000e+01 : f32
    %98 = vector.broadcast %cst_31 : f32 to vector<16x1xf32>
    %99 = arith.divf %97, %98 : vector<16x1xf32>
    %100 = vector.broadcast %92 : vector<16x1xf32> to vector<16x32xf32>
    %101 = arith.subf %86, %100 : vector<16x32xf32>
    %cst_32 = arith.constant 9.99999974E-6 : f32
    %102 = vector.broadcast %cst_32 : f32 to vector<16x1xf32>
    %103 = arith.addf %99, %102 : vector<16x1xf32>
    %104 = math.rsqrt %103 : vector<16x1xf32>
    %105 = vector.broadcast %104 : vector<16x1xf32> to vector<16x32xf32>
    %106 = arith.mulf %101, %105 : vector<16x32xf32>
    %107 = vector.broadcast %87 : vector<1x32xf32> to vector<16x32xf32>
    %108 = arith.mulf %106, %107 : vector<16x32xf32>
    %109 = vector.broadcast %88 : vector<1x32xf32> to vector<16x32xf32>
    %110 = arith.addf %108, %109 : vector<16x32xf32>
    %111 = arith.truncf %110 : vector<16x32xf32> to vector<16x32xbf16>
    %c0_33 = arith.constant 0 : index
    %c0_34 = arith.constant 0 : index
    %c0_35 = arith.constant 0 : index
    %112 = vector.load %arg5[%c0_33, %c0_34, %c0_35] : memref<2x32x2048xbf16, #tpu.memory_space<vmem>>, vector<1x32x2048xbf16>
    %113 = vector.shape_cast %112 : vector<1x32x2048xbf16> to vector<32x2048xbf16>
    %cst_36 = arith.constant dense<0.000000e+00> : vector<16x2048xf32>
    %114 = tpu.matmul %111, %113, %cst_36 {dimension_numbers = #tpu.dot_dimension_numbers<[1], [0], [0], [1], [0, 0, 1, 1], [], []>} : vector<16x32xbf16>, vector<32x2048xbf16>, vector<16x2048xf32> -> vector<16x2048xf32>
    %c0_37 = arith.constant 0 : index
    %c0_38 = arith.constant 0 : index
    %c0_39 = arith.constant 0 : index
    %115 = vector.load %arg6[%c0_37, %c0_38, %c0_39] : memref<2x1x2048xf32, #tpu.memory_space<vmem>>, vector<1x1x2048xf32>
    %116 = vector.shape_cast %115 : vector<1x1x2048xf32> to vector<1x2048xf32>
    %117 = vector.broadcast %116 : vector<1x2048xf32> to vector<16x2048xf32>
    %118 = arith.addf %114, %117 : vector<16x2048xf32>
    %cst_40 = arith.constant 0.000000e+00 : f32
    %119 = vector.broadcast %cst_40 : f32 to vector<16x2048xf32>
    %120 = arith.maximumf %118, %119 : vector<16x2048xf32>
    %121 = arith.truncf %120 : vector<16x2048xf32> to vector<16x2048xbf16>
    %c0_41 = arith.constant 0 : index
    %c0_42 = arith.constant 0 : index
    %c0_43 = arith.constant 0 : index
    %122 = vector.load %arg7[%c0_41, %c0_42, %c0_43] : memref<2x2048x32xbf16, #tpu.memory_space<vmem>>, vector<1x2048x32xbf16>
    %123 = vector.shape_cast %122 : vector<1x2048x32xbf16> to vector<2048x32xbf16>
    %cst_44 = arith.constant dense<0.000000e+00> : vector<16x32xf32>
    %124 = tpu.matmul %121, %123, %cst_44 {dimension_numbers = #tpu.dot_dimension_numbers<[1], [0], [0], [1], [0, 0, 1, 1], [], []>} : vector<16x2048xbf16>, vector<2048x32xbf16>, vector<16x32xf32> -> vector<16x32xf32>
    %125 = vector.extract_strided_slice %6 {offsets = [6, 0], sizes = [1, 32], strides = [1, 1]} : vector<9x32xf32> to vector<1x32xf32>
    %126 = vector.broadcast %125 : vector<1x32xf32> to vector<16x32xf32>
    %127 = arith.addf %124, %126 : vector<16x32xf32>
    %128 = arith.addf %110, %127 : vector<16x32xf32>
    %129 = vector.extract_strided_slice %6 {offsets = [7, 0], sizes = [1, 32], strides = [1, 1]} : vector<9x32xf32> to vector<1x32xf32>
    %130 = vector.extract_strided_slice %6 {offsets = [8, 0], sizes = [1, 32], strides = [1, 1]} : vector<9x32xf32> to vector<1x32xf32>
    %cst_45 = arith.constant dense<0.000000e+00> : vector<16xf32>
    %131 = vector.multi_reduction <add>, %128, %cst_45 [1] : vector<16x32xf32> to vector<16xf32>
    %132 = vector.shape_cast %131 : vector<16xf32> to vector<16x1xf32>
    %cst_46 = arith.constant 3.200000e+01 : f32
    %133 = vector.broadcast %cst_46 : f32 to vector<16x1xf32>
    %134 = arith.divf %132, %133 : vector<16x1xf32>
    %135 = vector.broadcast %134 : vector<16x1xf32> to vector<16x32xf32>
    %136 = arith.subf %128, %135 : vector<16x32xf32>
    %137 = arith.mulf %136, %136 : vector<16x32xf32>
    %cst_47 = arith.constant dense<0.000000e+00> : vector<16xf32>
    %138 = vector.multi_reduction <add>, %137, %cst_47 [1] : vector<16x32xf32> to vector<16xf32>
    %139 = vector.shape_cast %138 : vector<16xf32> to vector<16x1xf32>
    %cst_48 = arith.constant 3.200000e+01 : f32
    %140 = vector.broadcast %cst_48 : f32 to vector<16x1xf32>
    %141 = arith.divf %139, %140 : vector<16x1xf32>
    %142 = vector.broadcast %134 : vector<16x1xf32> to vector<16x32xf32>
    %143 = arith.subf %128, %142 : vector<16x32xf32>
    %cst_49 = arith.constant 9.99999974E-6 : f32
    %144 = vector.broadcast %cst_49 : f32 to vector<16x1xf32>
    %145 = arith.addf %141, %144 : vector<16x1xf32>
    %146 = math.rsqrt %145 : vector<16x1xf32>
    %147 = vector.broadcast %146 : vector<16x1xf32> to vector<16x32xf32>
    %148 = arith.mulf %143, %147 : vector<16x32xf32>
    %149 = vector.broadcast %129 : vector<1x32xf32> to vector<16x32xf32>
    %150 = arith.mulf %148, %149 : vector<16x32xf32>
    %151 = vector.broadcast %130 : vector<1x32xf32> to vector<16x32xf32>
    %152 = arith.addf %150, %151 : vector<16x32xf32>
    %c1 = arith.constant 1 : index
    %c0_50 = arith.constant 0 : index
    %c0_51 = arith.constant 0 : index
    %c0_52 = arith.constant 0 : index
    %153 = vector.load %arg3[%c1, %c0_50, %c0_51, %c0_52] : memref<2x3x32x32xbf16, #tpu.memory_space<vmem>>, vector<1x3x32x32xbf16>
    %154 = vector.shape_cast %153 : vector<1x3x32x32xbf16> to vector<3x32x32xbf16>
    %c1_53 = arith.constant 1 : index
    %c0_54 = arith.constant 0 : index
    %c0_55 = arith.constant 0 : index
    %155 = vector.load %arg8[%c1_53, %c0_54, %c0_55] : memref<2x9x32xf32, #tpu.memory_space<vmem>>, vector<1x9x32xf32>
    %156 = vector.shape_cast %155 : vector<1x9x32xf32> to vector<9x32xf32>
    %157 = arith.truncf %152 : vector<16x32xf32> to vector<16x32xbf16>
    %158 = vector.extract_strided_slice %154 {offsets = [0, 0, 0], sizes = [1, 32, 32], strides = [1, 1, 1]} : vector<3x32x32xbf16> to vector<1x32x32xbf16>
    %159 = vector.shape_cast %158 : vector<1x32x32xbf16> to vector<32x32xbf16>
    %cst_56 = arith.constant dense<0.000000e+00> : vector<16x32xf32>
    %160 = tpu.matmul %157, %159, %cst_56 {dimension_numbers = #tpu.dot_dimension_numbers<[1], [0], [0], [1], [0, 0, 1, 1], [], []>} : vector<16x32xbf16>, vector<32x32xbf16>, vector<16x32xf32> -> vector<16x32xf32>
    %161 = vector.extract_strided_slice %156 {offsets = [0, 0], sizes = [1, 32], strides = [1, 1]} : vector<9x32xf32> to vector<1x32xf32>
    %162 = vector.broadcast %161 : vector<1x32xf32> to vector<16x32xf32>
    %163 = arith.addf %160, %162 : vector<16x32xf32>
    %164 = vector.extract_strided_slice %154 {offsets = [1, 0, 0], sizes = [1, 32, 32], strides = [1, 1, 1]} : vector<3x32x32xbf16> to vector<1x32x32xbf16>
    %165 = vector.shape_cast %164 : vector<1x32x32xbf16> to vector<32x32xbf16>
    %cst_57 = arith.constant dense<0.000000e+00> : vector<16x32xf32>
    %166 = tpu.matmul %157, %165, %cst_57 {dimension_numbers = #tpu.dot_dimension_numbers<[1], [0], [0], [1], [0, 0, 1, 1], [], []>} : vector<16x32xbf16>, vector<32x32xbf16>, vector<16x32xf32> -> vector<16x32xf32>
    %167 = vector.extract_strided_slice %156 {offsets = [1, 0], sizes = [1, 32], strides = [1, 1]} : vector<9x32xf32> to vector<1x32xf32>
    %168 = vector.broadcast %167 : vector<1x32xf32> to vector<16x32xf32>
    %169 = arith.addf %166, %168 : vector<16x32xf32>
    %170 = vector.extract_strided_slice %154 {offsets = [2, 0, 0], sizes = [1, 32, 32], strides = [1, 1, 1]} : vector<3x32x32xbf16> to vector<1x32x32xbf16>
    %171 = vector.shape_cast %170 : vector<1x32x32xbf16> to vector<32x32xbf16>
    %cst_58 = arith.constant dense<0.000000e+00> : vector<16x32xf32>
    %172 = tpu.matmul %157, %171, %cst_58 {dimension_numbers = #tpu.dot_dimension_numbers<[1], [0], [0], [1], [0, 0, 1, 1], [], []>} : vector<16x32xbf16>, vector<32x32xbf16>, vector<16x32xf32> -> vector<16x32xf32>
    %173 = vector.extract_strided_slice %156 {offsets = [2, 0], sizes = [1, 32], strides = [1, 1]} : vector<9x32xf32> to vector<1x32xf32>
    %174 = vector.broadcast %173 : vector<1x32xf32> to vector<16x32xf32>
    %175 = arith.addf %172, %174 : vector<16x32xf32>
    %176 = vector.extract_strided_slice %163 {offsets = [0, 0], sizes = [8, 32], strides = [1, 1]} : vector<16x32xf32> to vector<8x32xf32>
    %177 = vector.extract_strided_slice %163 {offsets = [8, 0], sizes = [8, 32], strides = [1, 1]} : vector<16x32xf32> to vector<8x32xf32>
    %178 = vector.extract_strided_slice %169 {offsets = [0, 0], sizes = [8, 32], strides = [1, 1]} : vector<16x32xf32> to vector<8x32xf32>
    %179 = vector.extract_strided_slice %169 {offsets = [8, 0], sizes = [8, 32], strides = [1, 1]} : vector<16x32xf32> to vector<8x32xf32>
    %180 = vector.extract_strided_slice %175 {offsets = [0, 0], sizes = [8, 32], strides = [1, 1]} : vector<16x32xf32> to vector<8x32xf32>
    %181 = vector.extract_strided_slice %175 {offsets = [8, 0], sizes = [8, 32], strides = [1, 1]} : vector<16x32xf32> to vector<8x32xf32>
    %182 = arith.mulf %176, %178 : vector<8x32xf32>
    %183 = arith.truncf %182 : vector<8x32xf32> to vector<8x32xbf16>
    %cst_59 = arith.constant dense<0.000000e+00> : vector<8x4xf32>
    %184 = tpu.matmul %183, %1, %cst_59 {dimension_numbers = #tpu.dot_dimension_numbers<[1], [0], [0], [1], [0, 0, 1, 1], [], []>} : vector<8x32xbf16>, vector<32x4xbf16>, vector<8x4xf32> -> vector<8x4xf32>
    %185 = arith.mulf %176, %179 : vector<8x32xf32>
    %186 = arith.truncf %185 : vector<8x32xf32> to vector<8x32xbf16>
    %cst_60 = arith.constant dense<0.000000e+00> : vector<8x4xf32>
    %187 = tpu.matmul %186, %1, %cst_60 {dimension_numbers = #tpu.dot_dimension_numbers<[1], [0], [0], [1], [0, 0, 1, 1], [], []>} : vector<8x32xbf16>, vector<32x4xbf16>, vector<8x4xf32> -> vector<8x4xf32>
    %188 = arith.maximumf %184, %187 : vector<8x4xf32>
    %189 = arith.subf %184, %188 : vector<8x4xf32>
    %190 = math.exp %189 : vector<8x4xf32>
    %191 = arith.subf %187, %188 : vector<8x4xf32>
    %192 = math.exp %191 : vector<8x4xf32>
    %193 = arith.addf %190, %192 : vector<8x4xf32>
    %cst_61 = arith.constant 1.000000e+00 : f32
    %194 = vector.broadcast %cst_61 : f32 to vector<8x4xf32>
    %195 = arith.divf %194, %193 : vector<8x4xf32>
    %196 = arith.mulf %190, %195 : vector<8x4xf32>
    %197 = arith.truncf %196 : vector<8x4xf32> to vector<8x4xbf16>
    %cst_62 = arith.constant dense<0.000000e+00> : vector<8x32xf32>
    %198 = tpu.matmul %197, %2, %cst_62 {dimension_numbers = #tpu.dot_dimension_numbers<[1], [0], [0], [1], [0, 0, 1, 1], [], []>} : vector<8x4xbf16>, vector<4x32xbf16>, vector<8x32xf32> -> vector<8x32xf32>
    %199 = arith.mulf %198, %180 : vector<8x32xf32>
    %200 = arith.mulf %192, %195 : vector<8x4xf32>
    %201 = arith.truncf %200 : vector<8x4xf32> to vector<8x4xbf16>
    %cst_63 = arith.constant dense<0.000000e+00> : vector<8x32xf32>
    %202 = tpu.matmul %201, %2, %cst_63 {dimension_numbers = #tpu.dot_dimension_numbers<[1], [0], [0], [1], [0, 0, 1, 1], [], []>} : vector<8x4xbf16>, vector<4x32xbf16>, vector<8x32xf32> -> vector<8x32xf32>
    %203 = arith.mulf %202, %181 : vector<8x32xf32>
    %204 = arith.addf %199, %203 : vector<8x32xf32>
    %205 = arith.mulf %177, %178 : vector<8x32xf32>
    %206 = arith.truncf %205 : vector<8x32xf32> to vector<8x32xbf16>
    %cst_64 = arith.constant dense<0.000000e+00> : vector<8x4xf32>
    %207 = tpu.matmul %206, %1, %cst_64 {dimension_numbers = #tpu.dot_dimension_numbers<[1], [0], [0], [1], [0, 0, 1, 1], [], []>} : vector<8x32xbf16>, vector<32x4xbf16>, vector<8x4xf32> -> vector<8x4xf32>
    %208 = arith.mulf %177, %179 : vector<8x32xf32>
    %209 = arith.truncf %208 : vector<8x32xf32> to vector<8x32xbf16>
    %cst_65 = arith.constant dense<0.000000e+00> : vector<8x4xf32>
    %210 = tpu.matmul %209, %1, %cst_65 {dimension_numbers = #tpu.dot_dimension_numbers<[1], [0], [0], [1], [0, 0, 1, 1], [], []>} : vector<8x32xbf16>, vector<32x4xbf16>, vector<8x4xf32> -> vector<8x4xf32>
    %211 = arith.maximumf %207, %210 : vector<8x4xf32>
    %212 = arith.subf %207, %211 : vector<8x4xf32>
    %213 = math.exp %212 : vector<8x4xf32>
    %214 = arith.subf %210, %211 : vector<8x4xf32>
    %215 = math.exp %214 : vector<8x4xf32>
    %216 = arith.addf %213, %215 : vector<8x4xf32>
    %cst_66 = arith.constant 1.000000e+00 : f32
    %217 = vector.broadcast %cst_66 : f32 to vector<8x4xf32>
    %218 = arith.divf %217, %216 : vector<8x4xf32>
    %219 = arith.mulf %213, %218 : vector<8x4xf32>
    %220 = arith.truncf %219 : vector<8x4xf32> to vector<8x4xbf16>
    %cst_67 = arith.constant dense<0.000000e+00> : vector<8x32xf32>
    %221 = tpu.matmul %220, %2, %cst_67 {dimension_numbers = #tpu.dot_dimension_numbers<[1], [0], [0], [1], [0, 0, 1, 1], [], []>} : vector<8x4xbf16>, vector<4x32xbf16>, vector<8x32xf32> -> vector<8x32xf32>
    %222 = arith.mulf %221, %180 : vector<8x32xf32>
    %223 = arith.mulf %215, %218 : vector<8x4xf32>
    %224 = arith.truncf %223 : vector<8x4xf32> to vector<8x4xbf16>
    %cst_68 = arith.constant dense<0.000000e+00> : vector<8x32xf32>
    %225 = tpu.matmul %224, %2, %cst_68 {dimension_numbers = #tpu.dot_dimension_numbers<[1], [0], [0], [1], [0, 0, 1, 1], [], []>} : vector<8x4xbf16>, vector<4x32xbf16>, vector<8x32xf32> -> vector<8x32xf32>
    %226 = arith.mulf %225, %181 : vector<8x32xf32>
    %227 = arith.addf %222, %226 : vector<8x32xf32>
    %228 = tpu.concatenate %204, %227 in 0 : vector<8x32xf32>, vector<8x32xf32> -> vector<16x32xf32>
    %229 = arith.truncf %228 : vector<16x32xf32> to vector<16x32xbf16>
    %c1_69 = arith.constant 1 : index
    %c0_70 = arith.constant 0 : index
    %c0_71 = arith.constant 0 : index
    %230 = vector.load %arg4[%c1_69, %c0_70, %c0_71] : memref<2x32x32xbf16, #tpu.memory_space<vmem>>, vector<1x32x32xbf16>
    %231 = vector.shape_cast %230 : vector<1x32x32xbf16> to vector<32x32xbf16>
    %cst_72 = arith.constant dense<0.000000e+00> : vector<16x32xf32>
    %232 = tpu.matmul %229, %231, %cst_72 {dimension_numbers = #tpu.dot_dimension_numbers<[1], [0], [0], [1], [0, 0, 1, 1], [], []>} : vector<16x32xbf16>, vector<32x32xbf16>, vector<16x32xf32> -> vector<16x32xf32>
    %233 = vector.extract_strided_slice %156 {offsets = [3, 0], sizes = [1, 32], strides = [1, 1]} : vector<9x32xf32> to vector<1x32xf32>
    %234 = vector.broadcast %233 : vector<1x32xf32> to vector<16x32xf32>
    %235 = arith.addf %232, %234 : vector<16x32xf32>
    %236 = arith.addf %152, %235 : vector<16x32xf32>
    %237 = vector.extract_strided_slice %156 {offsets = [4, 0], sizes = [1, 32], strides = [1, 1]} : vector<9x32xf32> to vector<1x32xf32>
    %238 = vector.extract_strided_slice %156 {offsets = [5, 0], sizes = [1, 32], strides = [1, 1]} : vector<9x32xf32> to vector<1x32xf32>
    %cst_73 = arith.constant dense<0.000000e+00> : vector<16xf32>
    %239 = vector.multi_reduction <add>, %236, %cst_73 [1] : vector<16x32xf32> to vector<16xf32>
    %240 = vector.shape_cast %239 : vector<16xf32> to vector<16x1xf32>
    %cst_74 = arith.constant 3.200000e+01 : f32
    %241 = vector.broadcast %cst_74 : f32 to vector<16x1xf32>
    %242 = arith.divf %240, %241 : vector<16x1xf32>
    %243 = vector.broadcast %242 : vector<16x1xf32> to vector<16x32xf32>
    %244 = arith.subf %236, %243 : vector<16x32xf32>
    %245 = arith.mulf %244, %244 : vector<16x32xf32>
    %cst_75 = arith.constant dense<0.000000e+00> : vector<16xf32>
    %246 = vector.multi_reduction <add>, %245, %cst_75 [1] : vector<16x32xf32> to vector<16xf32>
    %247 = vector.shape_cast %246 : vector<16xf32> to vector<16x1xf32>
    %cst_76 = arith.constant 3.200000e+01 : f32
    %248 = vector.broadcast %cst_76 : f32 to vector<16x1xf32>
    %249 = arith.divf %247, %248 : vector<16x1xf32>
    %250 = vector.broadcast %242 : vector<16x1xf32> to vector<16x32xf32>
    %251 = arith.subf %236, %250 : vector<16x32xf32>
    %cst_77 = arith.constant 9.99999974E-6 : f32
    %252 = vector.broadcast %cst_77 : f32 to vector<16x1xf32>
    %253 = arith.addf %249, %252 : vector<16x1xf32>
    %254 = math.rsqrt %253 : vector<16x1xf32>
    %255 = vector.broadcast %254 : vector<16x1xf32> to vector<16x32xf32>
    %256 = arith.mulf %251, %255 : vector<16x32xf32>
    %257 = vector.broadcast %237 : vector<1x32xf32> to vector<16x32xf32>
    %258 = arith.mulf %256, %257 : vector<16x32xf32>
    %259 = vector.broadcast %238 : vector<1x32xf32> to vector<16x32xf32>
    %260 = arith.addf %258, %259 : vector<16x32xf32>
    %261 = arith.truncf %260 : vector<16x32xf32> to vector<16x32xbf16>
    %c1_78 = arith.constant 1 : index
    %c0_79 = arith.constant 0 : index
    %c0_80 = arith.constant 0 : index
    %262 = vector.load %arg5[%c1_78, %c0_79, %c0_80] : memref<2x32x2048xbf16, #tpu.memory_space<vmem>>, vector<1x32x2048xbf16>
    %263 = vector.shape_cast %262 : vector<1x32x2048xbf16> to vector<32x2048xbf16>
    %cst_81 = arith.constant dense<0.000000e+00> : vector<16x2048xf32>
    %264 = tpu.matmul %261, %263, %cst_81 {dimension_numbers = #tpu.dot_dimension_numbers<[1], [0], [0], [1], [0, 0, 1, 1], [], []>} : vector<16x32xbf16>, vector<32x2048xbf16>, vector<16x2048xf32> -> vector<16x2048xf32>
    %c1_82 = arith.constant 1 : index
    %c0_83 = arith.constant 0 : index
    %c0_84 = arith.constant 0 : index
    %265 = vector.load %arg6[%c1_82, %c0_83, %c0_84] : memref<2x1x2048xf32, #tpu.memory_space<vmem>>, vector<1x1x2048xf32>
    %266 = vector.shape_cast %265 : vector<1x1x2048xf32> to vector<1x2048xf32>
    %267 = vector.broadcast %266 : vector<1x2048xf32> to vector<16x2048xf32>
    %268 = arith.addf %264, %267 : vector<16x2048xf32>
    %cst_85 = arith.constant 0.000000e+00 : f32
    %269 = vector.broadcast %cst_85 : f32 to vector<16x2048xf32>
    %270 = arith.maximumf %268, %269 : vector<16x2048xf32>
    %271 = arith.truncf %270 : vector<16x2048xf32> to vector<16x2048xbf16>
    %c1_86 = arith.constant 1 : index
    %c0_87 = arith.constant 0 : index
    %c0_88 = arith.constant 0 : index
    %272 = vector.load %arg7[%c1_86, %c0_87, %c0_88] : memref<2x2048x32xbf16, #tpu.memory_space<vmem>>, vector<1x2048x32xbf16>
    %273 = vector.shape_cast %272 : vector<1x2048x32xbf16> to vector<2048x32xbf16>
    %cst_89 = arith.constant dense<0.000000e+00> : vector<16x32xf32>
    %274 = tpu.matmul %271, %273, %cst_89 {dimension_numbers = #tpu.dot_dimension_numbers<[1], [0], [0], [1], [0, 0, 1, 1], [], []>} : vector<16x2048xbf16>, vector<2048x32xbf16>, vector<16x32xf32> -> vector<16x32xf32>
    %275 = vector.extract_strided_slice %156 {offsets = [6, 0], sizes = [1, 32], strides = [1, 1]} : vector<9x32xf32> to vector<1x32xf32>
    %276 = vector.broadcast %275 : vector<1x32xf32> to vector<16x32xf32>
    %277 = arith.addf %274, %276 : vector<16x32xf32>
    %278 = arith.addf %260, %277 : vector<16x32xf32>
    %279 = vector.extract_strided_slice %156 {offsets = [7, 0], sizes = [1, 32], strides = [1, 1]} : vector<9x32xf32> to vector<1x32xf32>
    %280 = vector.extract_strided_slice %156 {offsets = [8, 0], sizes = [1, 32], strides = [1, 1]} : vector<9x32xf32> to vector<1x32xf32>
    %cst_90 = arith.constant dense<0.000000e+00> : vector<16xf32>
    %281 = vector.multi_reduction <add>, %278, %cst_90 [1] : vector<16x32xf32> to vector<16xf32>
    %282 = vector.shape_cast %281 : vector<16xf32> to vector<16x1xf32>
    %cst_91 = arith.constant 3.200000e+01 : f32
    %283 = vector.broadcast %cst_91 : f32 to vector<16x1xf32>
    %284 = arith.divf %282, %283 : vector<16x1xf32>
    %285 = vector.broadcast %284 : vector<16x1xf32> to vector<16x32xf32>
    %286 = arith.subf %278, %285 : vector<16x32xf32>
    %287 = arith.mulf %286, %286 : vector<16x32xf32>
    %cst_92 = arith.constant dense<0.000000e+00> : vector<16xf32>
    %288 = vector.multi_reduction <add>, %287, %cst_92 [1] : vector<16x32xf32> to vector<16xf32>
    %289 = vector.shape_cast %288 : vector<16xf32> to vector<16x1xf32>
    %cst_93 = arith.constant 3.200000e+01 : f32
    %290 = vector.broadcast %cst_93 : f32 to vector<16x1xf32>
    %291 = arith.divf %289, %290 : vector<16x1xf32>
    %292 = vector.broadcast %284 : vector<16x1xf32> to vector<16x32xf32>
    %293 = arith.subf %278, %292 : vector<16x32xf32>
    %cst_94 = arith.constant 9.99999974E-6 : f32
    %294 = vector.broadcast %cst_94 : f32 to vector<16x1xf32>
    %295 = arith.addf %291, %294 : vector<16x1xf32>
    %296 = math.rsqrt %295 : vector<16x1xf32>
    %297 = vector.broadcast %296 : vector<16x1xf32> to vector<16x32xf32>
    %298 = arith.mulf %293, %297 : vector<16x32xf32>
    %299 = vector.broadcast %279 : vector<1x32xf32> to vector<16x32xf32>
    %300 = arith.mulf %298, %299 : vector<16x32xf32>
    %301 = vector.broadcast %280 : vector<1x32xf32> to vector<16x32xf32>
    %302 = arith.addf %300, %301 : vector<16x32xf32>
    %303 = arith.truncf %302 : vector<16x32xf32> to vector<16x32xbf16>
    %c0_95 = arith.constant 0 : index
    %c0_96 = arith.constant 0 : index
    %304 = vector.load %arg9[%c0_95, %c0_96] : memref<32x128xbf16, #tpu.memory_space<vmem>>, vector<32x128xbf16>
    %cst_97 = arith.constant dense<0.000000e+00> : vector<16x128xf32>
    %305 = tpu.matmul %303, %304, %cst_97 {dimension_numbers = #tpu.dot_dimension_numbers<[1], [0], [0], [1], [0, 0, 1, 1], [], []>} : vector<16x32xbf16>, vector<32x128xbf16>, vector<16x128xf32> -> vector<16x128xf32>
    %c0_98 = arith.constant 0 : index
    %c0_99 = arith.constant 0 : index
    %306 = vector.load %arg10[%c0_98, %c0_99] : memref<1x128xf32, #tpu.memory_space<vmem>>, vector<1x128xf32>
    %307 = vector.broadcast %306 : vector<1x128xf32> to vector<16x128xf32>
    %308 = arith.addf %305, %307 : vector<16x128xf32>
    %c0_100 = arith.constant 0 : index
    %c0_101 = arith.constant 0 : index
    %309 = vector.load %arg11[%c0_100, %c0_101] : memref<16x128xf32, #tpu.memory_space<vmem>>, vector<16x128xf32>
    tpu.vector_store %arg11[%c0_100, %c0_101], %308 {strides = array<i32>} : memref<16x128xf32, #tpu.memory_space<vmem>>, vector<16x128xf32>,
    return
  }
}

</mosaic_0001>

<llo_original>
// kernel: music_transformer_forward.1
$region0: #{music_transformer_forward.1}
  #allocation0 [shape = 'u32[]', space=smem, size = 0x4, offset = 0x4, fixed_abs, tag = 'smem constant byte address 0x4 - core index']
  #allocation1 [shape = 'u32[144,128]{1,0:T(1,128)}', space=vmem, size = 0x12000, scoped, tag = 'internal scratch']
  %s0 = inlined_call_operand.vmem [shape: f32[16,32], index: 0, kind: input, shape index: {}]
  %s1 = inlined_call_operand.vmem [shape: bf16[32,4], index: 1, kind: input, shape index: {}]
  %s2 = inlined_call_operand.vmem [shape: bf16[4,32], index: 2, kind: input, shape index: {}]
  %s3 = inlined_call_operand.vmem [shape: bf16[2,3,32,32], index: 3, kind: input, shape index: {}]
  %s4 = inlined_call_operand.vmem [shape: bf16[2,32,32], index: 4, kind: input, shape index: {}]
  %s5 = inlined_call_operand.vmem [shape: bf16[2,32,2048], index: 5, kind: input, shape index: {}]
  %s6 = inlined_call_operand.vmem [shape: f32[2,1,2048], index: 6, kind: input, shape index: {}]
  %s7 = inlined_call_operand.vmem [shape: bf16[2,2048,32], index: 7, kind: input, shape index: {}]
  %s8 = inlined_call_operand.vmem [shape: f32[2,9,32], index: 8, kind: input, shape index: {}]
  %s9 = inlined_call_operand.vmem [shape: bf16[32,128], index: 9, kind: input, shape index: {}]
  %s10 = inlined_call_operand.vmem [shape: f32[1,128], index: 10, kind: input, shape index: {}]
  %s11 = inlined_call_operand.hbm [shape: f32[16,128], index: 11, kind: output, shape index: {}]
  %s12 = sld [smem:[#allocation0]]
  $region54: #{music_transformer_forward.1} parent=0
    _
  %s14 = ssub.s32 1, %s12
  %s15 = scalar_select 0, %s14, %s12
  $region1: #{music_transformer_forward.1} parent=0
    #allocation2 [shape = 'u8[8192]{0}', space=vmem, size = 0x2000, scoped, tag = 'output window, operand 0, single buffered']
    #allocation3 [shape = 's32[1]{0}', space=sflag, size = 0x4, scoped, tag = 'scoped memory for music_transformer_forward.1']
    %16 = vsyncpa [#allocation3], 0
    // Predicated region
    $region2: #{music_transformer_forward.1} parent=1 // pred_check
      _
    $region3: #{music_transformer_forward.1} parent=1 // pred_check_branch
      %18 = sbr.rel (0) target = $region5
    $region4: #{music_transformer_forward.1} parent=1 // pred_region
      _
    $region5: #{music_transformer_forward.1} parent=1 // pred_fallthru
      _
    // Predicated region
    $region6: #{music_transformer_forward.1} parent=1 // pred_check
      _
    $region7: #{music_transformer_forward.1} parent=1 // pred_check_branch
      %20 = sbr.rel (0) target = $region9
    $region8: #{music_transformer_forward.1} parent=1 // pred_region
      _
    $region9: #{music_transformer_forward.1} parent=1 // pred_fallthru
      _
    // Predicated region
    $region10: #{music_transformer_forward.1} parent=1 // pred_check
      _
    $region11: #{music_transformer_forward.1} parent=1 // pred_check_branch
      %22 = sbr.rel (0) target = $region13
    $region12: #{music_transformer_forward.1} parent=1 // pred_region
      _
    $region13: #{music_transformer_forward.1} parent=1 // pred_fallthru
      _
    // Predicated region
    $region14: #{music_transformer_forward.1} parent=1 // pred_check
      _
    $region15: #{music_transformer_forward.1} parent=1 // pred_check_branch
      %24 = sbr.rel (0) target = $region17
    $region16: #{music_transformer_forward.1} parent=1 // pred_region
      _
    $region17: #{music_transformer_forward.1} parent=1 // pred_fallthru
      _
    // Predicated region
    $region18: #{music_transformer_forward.1} parent=1 // pred_check
      _
    $region19: #{music_transformer_forward.1} parent=1 // pred_check_branch
      %26 = sbr.rel (0) target = $region21
    $region20: #{music_transformer_forward.1} parent=1 // pred_region
      _
    $region21: #{music_transformer_forward.1} parent=1 // pred_fallthru
      _
    // Predicated region
    $region22: #{music_transformer_forward.1} parent=1 // pred_check
      _
    $region23: #{music_transformer_forward.1} parent=1 // pred_check_branch
      %28 = sbr.rel (0) target = $region25
    $region24: #{music_transformer_forward.1} parent=1 // pred_region
      _
    $region25: #{music_transformer_forward.1} parent=1 // pred_fallthru
      _
    // Predicated region
    $region26: #{music_transformer_forward.1} parent=1 // pred_check
      _
    $region27: #{music_transformer_forward.1} parent=1 // pred_check_branch
      %30 = sbr.rel (0) target = $region29
    $region28: #{music_transformer_forward.1} parent=1 // pred_region
      _
    $region29: #{music_transformer_forward.1} parent=1 // pred_fallthru
      _
    // Predicated region
    $region30: #{music_transformer_forward.1} parent=1 // pred_check
      _
    $region31: #{music_transformer_forward.1} parent=1 // pred_check_branch
      %32 = sbr.rel (0) target = $region33
    $region32: #{music_transformer_forward.1} parent=1 // pred_region
      _
    $region33: #{music_transformer_forward.1} parent=1 // pred_fallthru
      _
    // Predicated region
    $region34: #{music_transformer_forward.1} parent=1 // pred_check
      _
    $region35: #{music_transformer_forward.1} parent=1 // pred_check_branch
      %34 = sbr.rel (0) target = $region37
    $region36: #{music_transformer_forward.1} parent=1 // pred_region
      _
    $region37: #{music_transformer_forward.1} parent=1 // pred_fallthru
      _
    // Predicated region
    $region38: #{music_transformer_forward.1} parent=1 // pred_check
      _
    $region39: #{music_transformer_forward.1} parent=1 // pred_check_branch
      %36 = sbr.rel (0) target = $region41
    $region40: #{music_transformer_forward.1} parent=1 // pred_region
      _
    $region41: #{music_transformer_forward.1} parent=1 // pred_fallthru
      _
    // Predicated region
    $region42: #{music_transformer_forward.1} parent=1 // pred_check
      _
    $region43: #{music_transformer_forward.1} parent=1 // pred_check_branch
      %38 = sbr.rel (0) target = $region45
    $region44: #{music_transformer_forward.1} parent=1 // pred_region
      _
    $region45: #{music_transformer_forward.1} parent=1 // pred_fallthru
      _
    %v40 = vld [vmem:[%s0] sm:$0xff]
    %v41 = vld [vmem:[%s0 + $0x8] sm:$0xff]
    %v42 = vld [vmem:[%s1] sm:$0xf]
    %v43 = vld [vmem:[%s1 + $0x4] sm:$0xf]
    %v44 = vld [vmem:[%s1 + $0x8] sm:$0xf]
    %v45 = vld [vmem:[%s1 + $0xc] sm:$0xf]
    %v46 = vld [vmem:[%s2] sm:$0x3]
    %v47 = vld [vmem:[%s3] sm:$0xf]
    %v48 = vld [vmem:[%s3 + $0x4] sm:$0xf]
    %v49 = vld [vmem:[%s3 + $0x8] sm:$0xf]
    %v50 = vld [vmem:[%s3 + $0xc] sm:$0xf]
    %v51 = vld [vmem:[%s3 + $0x10] sm:$0xf]
    %v52 = vld [vmem:[%s3 + $0x14] sm:$0xf]
    %v53 = vld [vmem:[%s3 + $0x18] sm:$0xf]
    %v54 = vld [vmem:[%s3 + $0x1c] sm:$0xf]
    %v55 = vld [vmem:[%s3 + $0x20] sm:$0xf]
    %v56 = vld [vmem:[%s3 + $0x24] sm:$0xf]
    %v57 = vld [vmem:[%s3 + $0x28] sm:$0xf]
    %v58 = vld [vmem:[%s3 + $0x2c] sm:$0xf]
    %v59 = vld [vmem:[%s8] sm:$0xff]
    %v60 = vld [vmem:[%s8 + $0x8] sm:$0x1]
    %v61 = vpack.c.bf16 %v41, %v40
    %v62 = vlaneseq
    %v63 = vshrl.u32 %v62, 7
    %v64 = vsub.s32 0, %v63
    %v65 = vrot.slane %v59, %v64
    %v70 = vunpack.c.l.b16 %v47
    %v71 = vunpack.c.l.b16 %v48
    %v72 = vunpack.c.l.b16 %v49
    %v73 = vunpack.c.l.b16 %v50
    %v74 = vpack.c.b16 %v71, %v70
    %v75 = vpack.c.b16 %v73, %v72
    %vm78 = vcmask 261120
    %v80 = vsel %vm78, %v61, 0
    %82 = vmatprep.subr.bf16.mxu0 0
    %83 = vmatpush1.bf16.msra.mxu0 %v74
    %84 = vmatprep.subr.bf16.mxu0 0
    %85 = vmatpush1.bf16.msra.mxu0 %v75
    %86 = vmatprep.subr.bf16.mxu0 0
    %87 = vmatpush1.bf16.msra.mxu0 0
    %88 = vmatprep.subr.bf16.mxu0 0
    %89 = vmatpush1.bf16.msra.mxu0 0
    %90 = vmatprep.subr.bf16.mxu0 0
    %91 = vmatpush1.bf16.msra.mxu0 0
    %92 = vmatprep.subr.bf16.mxu0 0
    %93 = vmatpush1.bf16.msra.mxu0 0
    %94 = vmatprep.subr.bf16.mxu0 0
    %95 = vmatpush1.bf16.msra.mxu0 0
    %96 = vmatprep.subr.bf16.mxu0 0
    %97 = vmatpush1.bf16.msra.mxu0 0
    %98 = vmatprep.subr.bf16.mxu0 0
    %99 = vmatpush1.bf16.msra.mxu0 0
    %100 = vmatprep.subr.bf16.mxu0 0
    %101 = vmatpush1.bf16.msra.mxu0 0
    %102 = vmatprep.subr.bf16.mxu0 0
    %103 = vmatpush1.bf16.msra.mxu0 0
    %104 = vmatprep.subr.bf16.mxu0 0
    %105 = vmatpush1.bf16.msra.mxu0 0
    %106 = vmatprep.subr.bf16.mxu0 0
    %107 = vmatpush1.bf16.msra.mxu0 0
    %108 = vmatprep.subr.bf16.mxu0 0
    %109 = vmatpush1.bf16.msra.mxu0 0
    %110 = vmatprep.subr.bf16.mxu0 0
    %111 = vmatpush1.bf16.msra.mxu0 0
    %112 = vmatprep.subr.bf16.mxu0 0
    %113 = vmatpush1.bf16.msra.mxu0 0
    %114 = vmatprep.mubr.bf16.mxu0 0
    %115 = vmatmul.mubr.bf16.gmra.mrb[0].mxu0 %v80
    %v116 = vpop.f32.mrb[0].mxu0
    %v117 = vadd.f32 %v65, %v116
    %v118 = vpop.f32.mrb[0].mxu0
    %v119 = vpop.f32.mrb[0].mxu0
    %v120 = vadd.f32 %v65, %v119
    %v121 = vpop.f32.mrb[0].mxu0
    %122 = vdwg.mxu0
    %v123 = vlaneseq
    %v124 = vshrl.u32 %v123, 7
    %v125 = vsub.s32 1, %v124
    %v126 = vrot.slane %v59, %v125
    %v131 = vunpack.c.l.b16 %v51
    %v132 = vunpack.c.l.b16 %v52
    %v133 = vunpack.c.l.b16 %v53
    %v134 = vunpack.c.l.b16 %v54
    %v135 = vpack.c.b16 %v132, %v131
    %v136 = vpack.c.b16 %v134, %v133
    %139 = vmatprep.subr.bf16.mxu0 0
    %140 = vmatpush1.bf16.msra.mxu0 %v135
    %141 = vmatprep.subr.bf16.mxu0 0
    %142 = vmatpush1.bf16.msra.mxu0 %v136
    %143 = vmatprep.subr.bf16.mxu0 0
    %144 = vmatpush1.bf16.msra.mxu0 0
    %145 = vmatprep.subr.bf16.mxu0 0
    %146 = vmatpush1.bf16.msra.mxu0 0
    %147 = vmatprep.subr.bf16.mxu0 0
    %148 = vmatpush1.bf16.msra.mxu0 0
    %149 = vmatprep.subr.bf16.mxu0 0
    %150 = vmatpush1.bf16.msra.mxu0 0
    %151 = vmatprep.subr.bf16.mxu0 0
    %152 = vmatpush1.bf16.msra.mxu0 0
    %153 = vmatprep.subr.bf16.mxu0 0
    %154 = vmatpush1.bf16.msra.mxu0 0
    %155 = vmatprep.subr.bf16.mxu0 0
    %156 = vmatpush1.bf16.msra.mxu0 0
    %157 = vmatprep.subr.bf16.mxu0 0
    %158 = vmatpush1.bf16.msra.mxu0 0
    %159 = vmatprep.subr.bf16.mxu0 0
    %160 = vmatpush1.bf16.msra.mxu0 0
    %161 = vmatprep.subr.bf16.mxu0 0
    %162 = vmatpush1.bf16.msra.mxu0 0
    %163 = vmatprep.subr.bf16.mxu0 0
    %164 = vmatpush1.bf16.msra.mxu0 0
    %165 = vmatprep.subr.bf16.mxu0 0
    %166 = vmatpush1.bf16.msra.mxu0 0
    %167 = vmatprep.subr.bf16.mxu0 0
    %168 = vmatpush1.bf16.msra.mxu0 0
    %169 = vmatprep.subr.bf16.mxu0 0
    %170 = vmatpush1.bf16.msra.mxu0 0
    %171 = vmatprep.mubr.bf16.mxu0 0
    %172 = vmatmul.mubr.bf16.gmra.mrb[0].mxu0 %v80
    %v173 = vpop.f32.mrb[0].mxu0
    %v174 = vadd.f32 %v126, %v173
    %v175 = vpop.f32.mrb[0].mxu0
    %v176 = vpop.f32.mrb[0].mxu0
    %v177 = vadd.f32 %v126, %v176
    %v178 = vpop.f32.mrb[0].mxu0
    %179 = vdwg.mxu0
    %v180 = vlaneseq
    %v181 = vshrl.u32 %v180, 7
    %v182 = vsub.s32 2, %v181
    %v183 = vrot.slane %v59, %v182
    %v188 = vunpack.c.l.b16 %v55
    %v189 = vunpack.c.l.b16 %v56
    %v190 = vunpack.c.l.b16 %v57
    %v191 = vunpack.c.l.b16 %v58
    %v192 = vpack.c.b16 %v189, %v188
    %v193 = vpack.c.b16 %v191, %v190
    %196 = vmatprep.subr.bf16.mxu0 0
    %197 = vmatpush1.bf16.msra.mxu0 %v192
    %198 = vmatprep.subr.bf16.mxu0 0
    %199 = vmatpush1.bf16.msra.mxu0 %v193
    %200 = vmatprep.subr.bf16.mxu0 0
    %201 = vmatpush1.bf16.msra.mxu0 0
    %202 = vmatprep.subr.bf16.mxu0 0
    %203 = vmatpush1.bf16.msra.mxu0 0
    %204 = vmatprep.subr.bf16.mxu0 0
    %205 = vmatpush1.bf16.msra.mxu0 0
    %206 = vmatprep.subr.bf16.mxu0 0
    %207 = vmatpush1.bf16.msra.mxu0 0
    %208 = vmatprep.subr.bf16.mxu0 0
    %209 = vmatpush1.bf16.msra.mxu0 0
    %210 = vmatprep.subr.bf16.mxu0 0
    %211 = vmatpush1.bf16.msra.mxu0 0
    %212 = vmatprep.subr.bf16.mxu0 0
    %213 = vmatpush1.bf16.msra.mxu0 0
    %214 = vmatprep.subr.bf16.mxu0 0
    %215 = vmatpush1.bf16.msra.mxu0 0
    %216 = vmatprep.subr.bf16.mxu0 0
    %217 = vmatpush1.bf16.msra.mxu0 0
    %218 = vmatprep.subr.bf16.mxu0 0
    %219 = vmatpush1.bf16.msra.mxu0 0
    %220 = vmatprep.subr.bf16.mxu0 0
    %221 = vmatpush1.bf16.msra.mxu0 0
    %222 = vmatprep.subr.bf16.mxu0 0
    %223 = vmatpush1.bf16.msra.mxu0 0
    %224 = vmatprep.subr.bf16.mxu0 0
    %225 = vmatpush1.bf16.msra.mxu0 0
    %226 = vmatprep.subr.bf16.mxu0 0
    %227 = vmatpush1.bf16.msra.mxu0 0
    %228 = vmatprep.mubr.bf16.mxu0 0
    %229 = vmatmul.mubr.bf16.gmra.mrb[0].mxu0 %v80
    %v230 = vpop.f32.mrb[0].mxu0
    %v231 = vadd.f32 %v183, %v230
    %v232 = vpop.f32.mrb[0].mxu0
    %v233 = vpop.f32.mrb[0].mxu0
    %v234 = vadd.f32 %v183, %v233
    %v235 = vpop.f32.mrb[0].mxu0
    %236 = vdwg.mxu0
    %v237 = vmul.f32 %v117, %v174
    %v238 = vpack.c.bf16 %v237, %v237
    %v243 = vunpack.c.l.b16 %v42
    %v244 = vunpack.c.l.b16 %v43
    %v245 = vunpack.c.l.b16 %v44
    %v246 = vunpack.c.l.b16 %v45
    %v247 = vpack.c.b16 %v244, %v243
    %v248 = vpack.c.b16 %v246, %v245
    %v252 = vsel %vm78, %v238, 0
    %254 = vmatprep.subr.bf16.mxu0 0
    %255 = vmatpush1.bf16.msra.mxu0 %v247
    %256 = vmatprep.subr.bf16.mxu0 0
    %257 = vmatpush1.bf16.msra.mxu0 %v248
    %258 = vmatprep.subr.bf16.mxu0 0
    %259 = vmatpush1.bf16.msra.mxu0 0
    %260 = vmatprep.subr.bf16.mxu0 0
    %261 = vmatpush1.bf16.msra.mxu0 0
    %262 = vmatprep.subr.bf16.mxu0 0
    %263 = vmatpush1.bf16.msra.mxu0 0
    %264 = vmatprep.subr.bf16.mxu0 0
    %265 = vmatpush1.bf16.msra.mxu0 0
    %266 = vmatprep.subr.bf16.mxu0 0
    %267 = vmatpush1.bf16.msra.mxu0 0
    %268 = vmatprep.subr.bf16.mxu0 0
    %269 = vmatpush1.bf16.msra.mxu0 0
    %270 = vmatprep.subr.bf16.mxu0 0
    %271 = vmatpush1.bf16.msra.mxu0 0
    %272 = vmatprep.subr.bf16.mxu0 0
    %273 = vmatpush1.bf16.msra.mxu0 0
    %274 = vmatprep.subr.bf16.mxu0 0
    %275 = vmatpush1.bf16.msra.mxu0 0
    %276 = vmatprep.subr.bf16.mxu0 0
    %277 = vmatpush1.bf16.msra.mxu0 0
    %278 = vmatprep.subr.bf16.mxu0 0
    %279 = vmatpush1.bf16.msra.mxu0 0
    %280 = vmatprep.subr.bf16.mxu0 0
    %281 = vmatpush1.bf16.msra.mxu0 0
    %282 = vmatprep.subr.bf16.mxu0 0
    %283 = vmatpush1.bf16.msra.mxu0 0
    %284 = vmatprep.subr.bf16.mxu0 0
    %285 = vmatpush1.bf16.msra.mxu0 0
    %286 = vmatprep.mubr.bf16.mxu0 0
    %287 = vmatmul.mubr.bf16.gmra.mrb[0].mxu0 %v252
    %v288 = vpop.f32.mrb[0].mxu0
    %v289 = vadd.f32 0.0, %v288
    %v290 = vpop.f32.mrb[0].mxu0
    %v291 = vpop.f32.mrb[0].mxu0
    %v292 = vpop.f32.mrb[0].mxu0
    %293 = vdwg.mxu0
    %v294 = vmul.f32 %v117, %v177
    %v295 = vpack.c.bf16 %v294, %v294
    %v297 = vsel %vm78, %v295, 0
    %299 = vmatprep.subr.bf16.mxu0 0
    %300 = vmatpush1.bf16.msra.mxu0 %v247
    %301 = vmatprep.subr.bf16.mxu0 0
    %302 = vmatpush1.bf16.msra.mxu0 %v248
    %303 = vmatprep.subr.bf16.mxu0 0
    %304 = vmatpush1.bf16.msra.mxu0 0
    %305 = vmatprep.subr.bf16.mxu0 0
    %306 = vmatpush1.bf16.msra.mxu0 0
    %307 = vmatprep.subr.bf16.mxu0 0
    %308 = vmatpush1.bf16.msra.mxu0 0
    %309 = vmatprep.subr.bf16.mxu0 0
    %310 = vmatpush1.bf16.msra.mxu0 0
    %311 = vmatprep.subr.bf16.mxu0 0
    %312 = vmatpush1.bf16.msra.mxu0 0
    %313 = vmatprep.subr.bf16.mxu0 0
    %314 = vmatpush1.bf16.msra.mxu0 0
    %315 = vmatprep.subr.bf16.mxu0 0
    %316 = vmatpush1.bf16.msra.mxu0 0
    %317 = vmatprep.subr.bf16.mxu0 0
    %318 = vmatpush1.bf16.msra.mxu0 0
    %319 = vmatprep.subr.bf16.mxu0 0
    %320 = vmatpush1.bf16.msra.mxu0 0
    %321 = vmatprep.subr.bf16.mxu0 0
    %322 = vmatpush1.bf16.msra.mxu0 0
    %323 = vmatprep.subr.bf16.mxu0 0
    %324 = vmatpush1.bf16.msra.mxu0 0
    %325 = vmatprep.subr.bf16.mxu0 0
    %326 = vmatpush1.bf16.msra.mxu0 0
    %327 = vmatprep.subr.bf16.mxu0 0
    %328 = vmatpush1.bf16.msra.mxu0 0
    %329 = vmatprep.subr.bf16.mxu0 0
    %330 = vmatpush1.bf16.msra.mxu0 0
    %331 = vmatprep.mubr.bf16.mxu0 0
    %332 = vmatmul.mubr.bf16.gmra.mrb[0].mxu0 %v297
    %v333 = vpop.f32.mrb[0].mxu0
    %v334 = vadd.f32 0.0, %v333
    %v335 = vpop.f32.mrb[0].mxu0
    %v336 = vpop.f32.mrb[0].mxu0
    %v337 = vpop.f32.mrb[0].mxu0
    %338 = vdwg.mxu0
    %v339 = vmax.f32 %v289, %v334
    %v340 = vsub.f32 %v289, %v339
    %v341 = vmul.f32 %v340, 1.442695
    %v342 = vpow.pop %v341
    %v343 = vsub.f32 %v334, %v339
    %v344 = vmul.f32 %v343, 1.442695
    %v345 = vpow.pop %v344
    %v346 = vadd.f32 %v342, %v345
    %v347 = vrcp.pop %v346
    %v348 = vmul.f32 1.0, %v347
    %v349 = vmul.f32 %v342, %v348
    %v350 = vpack.c.bf16 %v349, %v349
    %vm351 = vcmask 31744
    %v353 = vsel %vm351, %v350, 0
    %vm355 = vcmask 1041408
    %v357 = vsel %vm355, %v46, 0
    %359 = vmatprep.subr.bf16.mxu0 0
    %360 = vmatpush1.bf16.msra.mxu0 %v357
    %361 = vmatprep.subr.bf16.mxu0 0
    %362 = vmatpush1.bf16.msra.mxu0 0
    %363 = vmatprep.subr.bf16.mxu0 0
    %364 = vmatpush1.bf16.msra.mxu0 0
    %365 = vmatprep.subr.bf16.mxu0 0
    %366 = vmatpush1.bf16.msra.mxu0 0
    %367 = vmatprep.subr.bf16.mxu0 0
    %368 = vmatpush1.bf16.msra.mxu0 0
    %369 = vmatprep.subr.bf16.mxu0 0
    %370 = vmatpush1.bf16.msra.mxu0 0
    %371 = vmatprep.subr.bf16.mxu0 0
    %372 = vmatpush1.bf16.msra.mxu0 0
    %373 = vmatprep.subr.bf16.mxu0 0
    %374 = vmatpush1.bf16.msra.mxu0 0
    %375 = vmatprep.subr.bf16.mxu0 0
    %376 = vmatpush1.bf16.msra.mxu0 0
    %377 = vmatprep.subr.bf16.mxu0 0
    %378 = vmatpush1.bf16.msra.mxu0 0
    %379 = vmatprep.subr.bf16.mxu0 0
    %380 = vmatpush1.bf16.msra.mxu0 0
    %381 = vmatprep.subr.bf16.mxu0 0
    %382 = vmatpush1.bf16.msra.mxu0 0
    %383 = vmatprep.subr.bf16.mxu0 0
    %384 = vmatpush1.bf16.msra.mxu0 0
    %385 = vmatprep.subr.bf16.mxu0 0
    %386 = vmatpush1.bf16.msra.mxu0 0
    %387 = vmatprep.subr.bf16.mxu0 0
    %388 = vmatpush1.bf16.msra.mxu0 0
    %389 = vmatprep.subr.bf16.mxu0 0
    %390 = vmatpush1.bf16.msra.mxu0 0
    %391 = vmatprep.mubr.bf16.mxu0 0
    %392 = vmatmul.mubr.bf16.gmra.mrb[0].mxu0 %v353
    %v393 = vpop.f32.mrb[0].mxu0
    %v394 = vadd.f32 0.0, %v393
    %v395 = vpop.f32.mrb[0].mxu0
    %v396 = vpop.f32.mrb[0].mxu0
    %v397 = vpop.f32.mrb[0].mxu0
    %398 = vdwg.mxu0
    %v399 = vmul.f32 %v394, %v231
    %v400 = vmul.f32 %v345, %v348
    %v401 = vpack.c.bf16 %v400, %v400
    %v403 = vsel %vm351, %v401, 0
    %405 = vmatprep.subr.bf16.mxu0 0
    %406 = vmatpush1.bf16.msra.mxu0 %v357
    %407 = vmatprep.subr.bf16.mxu0 0
    %408 = vmatpush1.bf16.msra.mxu0 0
    %409 = vmatprep.subr.bf16.mxu0 0
    %410 = vmatpush1.bf16.msra.mxu0 0
    %411 = vmatprep.subr.bf16.mxu0 0
    %412 = vmatpush1.bf16.msra.mxu0 0
    %413 = vmatprep.subr.bf16.mxu0 0
    %414 = vmatpush1.bf16.msra.mxu0 0
    %415 = vmatprep.subr.bf16.mxu0 0
    %416 = vmatpush1.bf16.msra.mxu0 0
    %417 = vmatprep.subr.bf16.mxu0 0
    %418 = vmatpush1.bf16.msra.mxu0 0
    %419 = vmatprep.subr.bf16.mxu0 0
    %420 = vmatpush1.bf16.msra.mxu0 0
    %421 = vmatprep.subr.bf16.mxu0 0
    %422 = vmatpush1.bf16.msra.mxu0 0
    %423 = vmatprep.subr.bf16.mxu0 0
    %424 = vmatpush1.bf16.msra.mxu0 0
    %425 = vmatprep.subr.bf16.mxu0 0
    %426 = vmatpush1.bf16.msra.mxu0 0
    %427 = vmatprep.subr.bf16.mxu0 0
    %428 = vmatpush1.bf16.msra.mxu0 0
    %429 = vmatprep.subr.bf16.mxu0 0
    %430 = vmatpush1.bf16.msra.mxu0 0
    %431 = vmatprep.subr.bf16.mxu0 0
    %432 = vmatpush1.bf16.msra.mxu0 0
    %433 = vmatprep.subr.bf16.mxu0 0
    %434 = vmatpush1.bf16.msra.mxu0 0
    %435 = vmatprep.subr.bf16.mxu0 0
    %436 = vmatpush1.bf16.msra.mxu0 0
    %437 = vmatprep.mubr.bf16.mxu0 0
    %438 = vmatmul.mubr.bf16.gmra.mrb[0].mxu0 %v403
    %v439 = vpop.f32.mrb[0].mxu0
    %v440 = vadd.f32 0.0, %v439
    %v441 = vpop.f32.mrb[0].mxu0
    %v442 = vpop.f32.mrb[0].mxu0
    %v443 = vpop.f32.mrb[0].mxu0
    %444 = vdwg.mxu0
    %v445 = vmul.f32 %v440, %v234
    %v446 = vadd.f32 %v399, %v445
    %v447 = vmul.f32 %v120, %v174
    %v448 = vpack.c.bf16 %v447, %v447
    %v450 = vsel %vm78, %v448, 0
    %452 = vmatprep.subr.bf16.mxu0 0
    %453 = vmatpush1.bf16.msra.mxu0 %v247
    %454 = vmatprep.subr.bf16.mxu0 0
    %455 = vmatpush1.bf16.msra.mxu0 %v248
    %456 = vmatprep.subr.bf16.mxu0 0
    %457 = vmatpush1.bf16.msra.mxu0 0
    %458 = vmatprep.subr.bf16.mxu0 0
    %459 = vmatpush1.bf16.msra.mxu0 0
    %460 = vmatprep.subr.bf16.mxu0 0
    %461 = vmatpush1.bf16.msra.mxu0 0
    %462 = vmatprep.subr.bf16.mxu0 0
    %463 = vmatpush1.bf16.msra.mxu0 0
    %464 = vmatprep.subr.bf16.mxu0 0
    %465 = vmatpush1.bf16.msra.mxu0 0
    %466 = vmatprep.subr.bf16.mxu0 0
    %467 = vmatpush1.bf16.msra.mxu0 0
    %468 = vmatprep.subr.bf16.mxu0 0
    %469 = vmatpush1.bf16.msra.mxu0 0
    %470 = vmatprep.subr.bf16.mxu0 0
    %471 = vmatpush1.bf16.msra.mxu0 0
    %472 = vmatprep.subr.bf16.mxu0 0
    %473 = vmatpush1.bf16.msra.mxu0 0
    %474 = vmatprep.subr.bf16.mxu0 0
    %475 = vmatpush1.bf16.msra.mxu0 0
    %476 = vmatprep.subr.bf16.mxu0 0
    %477 = vmatpush1.bf16.msra.mxu0 0
    %478 = vmatprep.subr.bf16.mxu0 0
    %479 = vmatpush1.bf16.msra.mxu0 0
    %480 = vmatprep.subr.bf16.mxu0 0
    %481 = vmatpush1.bf16.msra.mxu0 0
    %482 = vmatprep.subr.bf16.mxu0 0
    %483 = vmatpush1.bf16.msra.mxu0 0
    %484 = vmatprep.mubr.bf16.mxu0 0
    %485 = vmatmul.mubr.bf16.gmra.mrb[0].mxu0 %v450
    %v486 = vpop.f32.mrb[0].mxu0
    %v487 = vadd.f32 0.0, %v486
    %v488 = vpop.f32.mrb[0].mxu0
    %v489 = vpop.f32.mrb[0].mxu0
    %v490 = vpop.f32.mrb[0].mxu0
    %491 = vdwg.mxu0
    %v492 = vmul.f32 %v120, %v177
    %v493 = vpack.c.bf16 %v492, %v492
    %v495 = vsel %vm78, %v493, 0
    %497 = vmatprep.subr.bf16.mxu0 0
    %498 = vmatpush1.bf16.msra.mxu0 %v247
    %499 = vmatprep.subr.bf16.mxu0 0
    %500 = vmatpush1.bf16.msra.mxu0 %v248
    %501 = vmatprep.subr.bf16.mxu0 0
    %502 = vmatpush1.bf16.msra.mxu0 0
    %503 = vmatprep.subr.bf16.mxu0 0
    %504 = vmatpush1.bf16.msra.mxu0 0
    %505 = vmatprep.subr.bf16.mxu0 0
    %506 = vmatpush1.bf16.msra.mxu0 0
    %507 = vmatprep.subr.bf16.mxu0 0
    %508 = vmatpush1.bf16.msra.mxu0 0
    %509 = vmatprep.subr.bf16.mxu0 0
    %510 = vmatpush1.bf16.msra.mxu0 0
    %511 = vmatprep.subr.bf16.mxu0 0
    %512 = vmatpush1.bf16.msra.mxu0 0
    %513 = vmatprep.subr.bf16.mxu0 0
    %514 = vmatpush1.bf16.msra.mxu0 0
    %515 = vmatprep.subr.bf16.mxu0 0
    %516 = vmatpush1.bf16.msra.mxu0 0
    %517 = vmatprep.subr.bf16.mxu0 0
    %518 = vmatpush1.bf16.msra.mxu0 0
    %519 = vmatprep.subr.bf16.mxu0 0
    %520 = vmatpush1.bf16.msra.mxu0 0
    %521 = vmatprep.subr.bf16.mxu0 0
    %522 = vmatpush1.bf16.msra.mxu0 0
    %523 = vmatprep.subr.bf16.mxu0 0
    %524 = vmatpush1.bf16.msra.mxu0 0
    %525 = vmatprep.subr.bf16.mxu0 0
    %526 = vmatpush1.bf16.msra.mxu0 0
    %527 = vmatprep.subr.bf16.mxu0 0
    %528 = vmatpush1.bf16.msra.mxu0 0
    %529 = vmatprep.mubr.bf16.mxu0 0
    %530 = vmatmul.mubr.bf16.gmra.mrb[0].mxu0 %v495
    %v531 = vpop.f32.mrb[0].mxu0
    %v532 = vadd.f32 0.0, %v531
    %v533 = vpop.f32.mrb[0].mxu0
    %v534 = vpop.f32.mrb[0].mxu0
    %v535 = vpop.f32.mrb[0].mxu0
    %536 = vdwg.mxu0
    %v537 = vmax.f32 %v487, %v532
    %v538 = vsub.f32 %v487, %v537
    %v539 = vmul.f32 %v538, 1.442695
    %v540 = vpow.pop %v539
    %v541 = vsub.f32 %v532, %v537
    %v542 = vmul.f32 %v541, 1.442695
    %v543 = vpow.pop %v542
    %v544 = vadd.f32 %v540, %v543
    %v545 = vrcp.pop %v544
    %v546 = vmul.f32 1.0, %v545
    %v547 = vmul.f32 %v540, %v546
    %v548 = vpack.c.bf16 %v547, %v547
    %v550 = vsel %vm351, %v548, 0
    %552 = vmatprep.subr.bf16.mxu0 0
    %553 = vmatpush1.bf16.msra.mxu0 %v357
    %554 = vmatprep.subr.bf16.mxu0 0
    %555 = vmatpush1.bf16.msra.mxu0 0
    %556 = vmatprep.subr.bf16.mxu0 0
    %557 = vmatpush1.bf16.msra.mxu0 0
    %558 = vmatprep.subr.bf16.mxu0 0
    %559 = vmatpush1.bf16.msra.mxu0 0
    %560 = vmatprep.subr.bf16.mxu0 0
    %561 = vmatpush1.bf16.msra.mxu0 0
    %562 = vmatprep.subr.bf16.mxu0 0
    %563 = vmatpush1.bf16.msra.mxu0 0
    %564 = vmatprep.subr.bf16.mxu0 0
    %565 = vmatpush1.bf16.msra.mxu0 0
    %566 = vmatprep.subr.bf16.mxu0 0
    %567 = vmatpush1.bf16.msra.mxu0 0
    %568 = vmatprep.subr.bf16.mxu0 0
    %569 = vmatpush1.bf16.msra.mxu0 0
    %570 = vmatprep.subr.bf16.mxu0 0
    %571 = vmatpush1.bf16.msra.mxu0 0
    %572 = vmatprep.subr.bf16.mxu0 0
    %573 = vmatpush1.bf16.msra.mxu0 0
    %574 = vmatprep.subr.bf16.mxu0 0
    %575 = vmatpush1.bf16.msra.mxu0 0
    %576 = vmatprep.subr.bf16.mxu0 0
    %577 = vmatpush1.bf16.msra.mxu0 0
    %578 = vmatprep.subr.bf16.mxu0 0
    %579 = vmatpush1.bf16.msra.mxu0 0
    %580 = vmatprep.subr.bf16.mxu0 0
    %581 = vmatpush1.bf16.msra.mxu0 0
    %582 = vmatprep.subr.bf16.mxu0 0
    %583 = vmatpush1.bf16.msra.mxu0 0
    %584 = vmatprep.mubr.bf16.mxu0 0
    %585 = vmatmul.mubr.bf16.gmra.mrb[0].mxu0 %v550
    %v586 = vpop.f32.mrb[0].mxu0
    %v587 = vadd.f32 0.0, %v586
    %v588 = vpop.f32.mrb[0].mxu0
    %v589 = vpop.f32.mrb[0].mxu0
    %v590 = vpop.f32.mrb[0].mxu0
    %591 = vdwg.mxu0
    %v592 = vmul.f32 %v587, %v231
    %v593 = vmul.f32 %v543, %v546
    %v594 = vpack.c.bf16 %v593, %v593
    %v596 = vsel %vm351, %v594, 0
    %598 = vmatprep.subr.bf16.mxu0 0
    %599 = vmatpush1.bf16.msra.mxu0 %v357
    %600 = vmatprep.subr.bf16.mxu0 0
    %601 = vmatpush1.bf16.msra.mxu0 0
    %602 = vmatprep.subr.bf16.mxu0 0
    %603 = vmatpush1.bf16.msra.mxu0 0
    %604 = vmatprep.subr.bf16.mxu0 0
    %605 = vmatpush1.bf16.msra.mxu0 0
    %606 = vmatprep.subr.bf16.mxu0 0
    %607 = vmatpush1.bf16.msra.mxu0 0
    %608 = vmatprep.subr.bf16.mxu0 0
    %609 = vmatpush1.bf16.msra.mxu0 0
    %610 = vmatprep.subr.bf16.mxu0 0
    %611 = vmatpush1.bf16.msra.mxu0 0
    %612 = vmatprep.subr.bf16.mxu0 0
    %613 = vmatpush1.bf16.msra.mxu0 0
    %614 = vmatprep.subr.bf16.mxu0 0
    %615 = vmatpush1.bf16.msra.mxu0 0
    %616 = vmatprep.subr.bf16.mxu0 0
    %617 = vmatpush1.bf16.msra.mxu0 0
    %618 = vmatprep.subr.bf16.mxu0 0
    %619 = vmatpush1.bf16.msra.mxu0 0
    %620 = vmatprep.subr.bf16.mxu0 0
    %621 = vmatpush1.bf16.msra.mxu0 0
    %622 = vmatprep.subr.bf16.mxu0 0
    %623 = vmatpush1.bf16.msra.mxu0 0
    %624 = vmatprep.subr.bf16.mxu0 0
    %625 = vmatpush1.bf16.msra.mxu0 0
    %626 = vmatprep.subr.bf16.mxu0 0
    %627 = vmatpush1.bf16.msra.mxu0 0
    %628 = vmatprep.subr.bf16.mxu0 0
    %629 = vmatpush1.bf16.msra.mxu0 0
    %630 = vmatprep.mubr.bf16.mxu0 0
    %631 = vmatmul.mubr.bf16.gmra.mrb[0].mxu0 %v596
    %v632 = vpop.f32.mrb[0].mxu0
    %v633 = vadd.f32 0.0, %v632
    %v634 = vpop.f32.mrb[0].mxu0
    %v635 = vpop.f32.mrb[0].mxu0
    %v636 = vpop.f32.mrb[0].mxu0
    %637 = vdwg.mxu0
    %v638 = vmul.f32 %v633, %v234
    %v639 = vadd.f32 %v592, %v638
    %v640 = vpack.c.bf16 %v639, %v446
    %v641 = vld [vmem:[%s4] sm:$0xf]
    %v642 = vld [vmem:[%s4 + $0x4] sm:$0xf]
    %v643 = vld [vmem:[%s4 + $0x8] sm:$0xf]
    %v644 = vld [vmem:[%s4 + $0xc] sm:$0xf]
    %v645 = vlaneseq
    %v646 = vshrl.u32 %v645, 7
    %v647 = vsub.s32 3, %v646
    %v648 = vrot.slane %v59, %v647
    %v653 = vunpack.c.l.b16 %v641
    %v654 = vunpack.c.l.b16 %v642
    %v655 = vunpack.c.l.b16 %v643
    %v656 = vunpack.c.l.b16 %v644
    %v657 = vpack.c.b16 %v654, %v653
    %v658 = vpack.c.b16 %v656, %v655
    %v662 = vsel %vm78, %v640, 0
    %664 = vmatprep.subr.bf16.mxu0 0
    %665 = vmatpush1.bf16.msra.mxu0 %v657
    %666 = vmatprep.subr.bf16.mxu0 0
    %667 = vmatpush1.bf16.msra.mxu0 %v658
    %668 = vmatprep.subr.bf16.mxu0 0
    %669 = vmatpush1.bf16.msra.mxu0 0
    %670 = vmatprep.subr.bf16.mxu0 0
    %671 = vmatpush1.bf16.msra.mxu0 0
    %672 = vmatprep.subr.bf16.mxu0 0
    %673 = vmatpush1.bf16.msra.mxu0 0
    %674 = vmatprep.subr.bf16.mxu0 0
    %675 = vmatpush1.bf16.msra.mxu0 0
    %676 = vmatprep.subr.bf16.mxu0 0
    %677 = vmatpush1.bf16.msra.mxu0 0
    %678 = vmatprep.subr.bf16.mxu0 0
    %679 = vmatpush1.bf16.msra.mxu0 0
    %680 = vmatprep.subr.bf16.mxu0 0
    %681 = vmatpush1.bf16.msra.mxu0 0
    %682 = vmatprep.subr.bf16.mxu0 0
    %683 = vmatpush1.bf16.msra.mxu0 0
    %684 = vmatprep.subr.bf16.mxu0 0
    %685 = vmatpush1.bf16.msra.mxu0 0
    %686 = vmatprep.subr.bf16.mxu0 0
    %687 = vmatpush1.bf16.msra.mxu0 0
    %688 = vmatprep.subr.bf16.mxu0 0
    %689 = vmatpush1.bf16.msra.mxu0 0
    %690 = vmatprep.subr.bf16.mxu0 0
    %691 = vmatpush1.bf16.msra.mxu0 0
    %692 = vmatprep.subr.bf16.mxu0 0
    %693 = vmatpush1.bf16.msra.mxu0 0
    %694 = vmatprep.subr.bf16.mxu0 0
    %695 = vmatpush1.bf16.msra.mxu0 0
    %696 = vmatprep.mubr.bf16.mxu0 0
    %697 = vmatmul.mubr.bf16.gmra.mrb[0].mxu0 %v662
    %v698 = vpop.f32.mrb[0].mxu0
    %v699 = vadd.f32 %v648, %v698
    %v700 = vpop.f32.mrb[0].mxu0
    %v701 = vpop.f32.mrb[0].mxu0
    %v702 = vadd.f32 %v648, %v701
    %v703 = vpop.f32.mrb[0].mxu0
    %704 = vdwg.mxu0
    %v705 = vadd.f32 %v40, %v699
    %v706 = vadd.f32 %v41, %v702
    %v707 = vsel %vm78, %v705, 0.0
    %708 = vadd.xlane.f32.xlu0 %v707
    %v709 = vpop.xlane.xlu0 %708
    %v710 = vsel %vm78, %v706, 0.0
    %711 = vadd.xlane.f32.xlu0 %v710
    %v712 = vpop.xlane.xlu0 %711
    %v713 = vrcp.pop 32.0
    %v714 = vmul.f32 %v709, %v713
    %v715 = vmul.f32 %v712, %v713
    %v716 = vsub.f32 %v705, %v714
    %v717 = vsub.f32 %v706, %v715
    %v718 = vmul.f32 %v716, %v716
    %v719 = vmul.f32 %v717, %v717
    %v720 = vsel %vm78, %v718, 0.0
    %721 = vadd.xlane.f32.xlu0 %v720
    %v722 = vpop.xlane.xlu0 %721
    %v723 = vsel %vm78, %v719, 0.0
    %724 = vadd.xlane.f32.xlu0 %v723
    %v725 = vpop.xlane.xlu0 %724
    %v726 = vmul.f32 %v722, %v713
    %v727 = vmul.f32 %v725, %v713
    %v728 = vadd.f32 %v726, 1e-05
    %v729 = vadd.f32 %v727, 1e-05
    %v730 = vrsqrt.pop %v728
    %v731 = vrsqrt.pop %v729
    %v732 = vmul.f32 %v716, %v730
    %v733 = vmul.f32 %v717, %v731
    %v734 = vlaneseq
    %v735 = vshrl.u32 %v734, 7
    %v736 = vsub.s32 4, %v735
    %v737 = vrot.slane %v59, %v736
    %v738 = vmul.f32 %v732, %v737
    %v739 = vmul.f32 %v733, %v737
    %v740 = vlaneseq
    %v741 = vshrl.u32 %v740, 7
    %v742 = vsub.s32 5, %v741
    %v743 = vrot.slane %v59, %v742
    %v744 = vadd.f32 %v738, %v743
    %v745 = vadd.f32 %v739, %v743
    %v746 = vpack.c.bf16 %v745, %v744
    %v747 = vld [vmem:[%s5] sm:$0xff]
    %v748 = vld [vmem:[%s5 + $0x8] sm:$0xff]
    %v749 = vld [vmem:[%s5 + $0x10] sm:$0xff]
    %v750 = vld [vmem:[%s5 + $0x18] sm:$0xff]
    %v751 = vld [vmem:[%s5 + $0x20] sm:$0xff]
    %v752 = vld [vmem:[%s5 + $0x28] sm:$0xff]
    %v753 = vld [vmem:[%s5 + $0x30] sm:$0xff]
    %v754 = vld [vmem:[%s5 + $0x38] sm:$0xff]
    %v755 = vld [vmem:[%s5 + $0x40] sm:$0xff]
    %v756 = vld [vmem:[%s5 + $0x48] sm:$0xff]
    %v757 = vld [vmem:[%s5 + $0x50] sm:$0xff]
    %v758 = vld [vmem:[%s5 + $0x58] sm:$0xff]
    %v759 = vld [vmem:[%s5 + $0x60] sm:$0xff]
    %v760 = vld [vmem:[%s5 + $0x68] sm:$0xff]
    %v761 = vld [vmem:[%s5 + $0x70] sm:$0xff]
    %v762 = vld [vmem:[%s5 + $0x78] sm:$0xff]
    %v763 = vld [vmem:[%s5 + $0x80] sm:$0xff]
    %v764 = vld [vmem:[%s5 + $0x88] sm:$0xff]
    %v765 = vld [vmem:[%s5 + $0x90] sm:$0xff]
    %v766 = vld [vmem:[%s5 + $0x98] sm:$0xff]
    %v767 = vld [vmem:[%s5 + $0xa0] sm:$0xff]
    %v768 = vld [vmem:[%s5 + $0xa8] sm:$0xff]
    %v769 = vld [vmem:[%s5 + $0xb0] sm:$0xff]
    %v770 = vld [vmem:[%s5 + $0xb8] sm:$0xff]
    %v771 = vld [vmem:[%s5 + $0xc0] sm:$0xff]
    %v772 = vld [vmem:[%s5 + $0xc8] sm:$0xff]
    %v773 = vld [vmem:[%s5 + $0xd0] sm:$0xff]
    %v774 = vld [vmem:[%s5 + $0xd8] sm:$0xff]
    %v775 = vld [vmem:[%s5 + $0xe0] sm:$0xff]
    %v776 = vld [vmem:[%s5 + $0xe8] sm:$0xff]
    %v777 = vld [vmem:[%s5 + $0xf0] sm:$0xff]
    %v778 = vld [vmem:[%s5 + $0xf8] sm:$0xff]
    %v779 = vld [vmem:[%s6] sm:$0xff]
    %v780 = vld [vmem:[%s6 + $0x8] sm:$0xff]
    %v783 = vlaneseq
    %v784 = vshrl.u32 %v783, 7
    %v785 = vsub.s32 0, %v784
    %v786 = vrot.slane %v779, %v785
    %v787 = vlaneseq
    %v788 = vshrl.u32 %v787, 7
    %v789 = vsub.s32 1, %v788
    %v790 = vrot.slane %v779, %v789
    %v791 = vlaneseq
    %v792 = vshrl.u32 %v791, 7
    %v793 = vsub.s32 2, %v792
    %v794 = vrot.slane %v779, %v793
    %v795 = vlaneseq
    %v796 = vshrl.u32 %v795, 7
    %v797 = vsub.s32 3, %v796
    %v798 = vrot.slane %v779, %v797
    %v799 = vlaneseq
    %v800 = vshrl.u32 %v799, 7
    %v801 = vsub.s32 4, %v800
    %v802 = vrot.slane %v779, %v801
    %v803 = vlaneseq
    %v804 = vshrl.u32 %v803, 7
    %v805 = vsub.s32 5, %v804
    %v806 = vrot.slane %v779, %v805
    %v807 = vlaneseq
    %v808 = vshrl.u32 %v807, 7
    %v809 = vsub.s32 6, %v808
    %v810 = vrot.slane %v779, %v809
    %v811 = vlaneseq
    %v812 = vshrl.u32 %v811, 7
    %v813 = vsub.s32 7, %v812
    %v814 = vrot.slane %v779, %v813
    %v815 = vlaneseq
    %v816 = vshrl.u32 %v815, 7
    %v817 = vsub.s32 0, %v816
    %v818 = vrot.slane %v780, %v817
    %v819 = vlaneseq
    %v820 = vshrl.u32 %v819, 7
    %v821 = vsub.s32 1, %v820
    %v822 = vrot.slane %v780, %v821
    %v823 = vlaneseq
    %v824 = vshrl.u32 %v823, 7
    %v825 = vsub.s32 2, %v824
    %v826 = vrot.slane %v780, %v825
    %v827 = vlaneseq
    %v828 = vshrl.u32 %v827, 7
    %v829 = vsub.s32 3, %v828
    %v830 = vrot.slane %v780, %v829
    %v831 = vlaneseq
    %v832 = vshrl.u32 %v831, 7
    %v833 = vsub.s32 4, %v832
    %v834 = vrot.slane %v780, %v833
    %v835 = vlaneseq
    %v836 = vshrl.u32 %v835, 7
    %v837 = vsub.s32 5, %v836
    %v838 = vrot.slane %v780, %v837
    %v839 = vlaneseq
    %v840 = vshrl.u32 %v839, 7
    %v841 = vsub.s32 6, %v840
    %v842 = vrot.slane %v780, %v841
    %v843 = vlaneseq
    %v844 = vshrl.u32 %v843, 7
    %v845 = vsub.s32 7, %v844
    %v846 = vrot.slane %v780, %v845
    %v895 = vunpack.c.l.b16 %v747
    %v896 = vunpack.c.h.b16 %v747
    %v897 = vunpack.c.l.b16 %v748
    %v898 = vunpack.c.h.b16 %v748
    %v899 = vunpack.c.l.b16 %v749
    %v900 = vunpack.c.h.b16 %v749
    %v901 = vunpack.c.l.b16 %v750
    %v902 = vunpack.c.h.b16 %v750
    %v903 = vunpack.c.l.b16 %v751
    %v904 = vunpack.c.h.b16 %v751
    %v905 = vunpack.c.l.b16 %v752
    %v906 = vunpack.c.h.b16 %v752
    %v907 = vunpack.c.l.b16 %v753
    %v908 = vunpack.c.h.b16 %v753
    %v909 = vunpack.c.l.b16 %v754
    %v910 = vunpack.c.h.b16 %v754
    %v911 = vunpack.c.l.b16 %v755
    %v912 = vunpack.c.h.b16 %v755
    %v913 = vunpack.c.l.b16 %v756
    %v914 = vunpack.c.h.b16 %v756
    %v915 = vunpack.c.l.b16 %v757
    %v916 = vunpack.c.h.b16 %v757
    %v917 = vunpack.c.l.b16 %v758
    %v918 = vunpack.c.h.b16 %v758
    %v919 = vunpack.c.l.b16 %v759
    %v920 = vunpack.c.h.b16 %v759
    %v921 = vunpack.c.l.b16 %v760
    %v922 = vunpack.c.h.b16 %v760
    %v923 = vunpack.c.l.b16 %v761
    %v924 = vunpack.c.h.b16 %v761
    %v925 = vunpack.c.l.b16 %v762
    %v926 = vunpack.c.h.b16 %v762
    %v927 = vunpack.c.l.b16 %v763
    %v928 = vunpack.c.h.b16 %v763
    %v929 = vunpack.c.l.b16 %v764
    %v930 = vunpack.c.h.b16 %v764
    %v931 = vunpack.c.l.b16 %v765
    %v932 = vunpack.c.h.b16 %v765
    %v933 = vunpack.c.l.b16 %v766
    %v934 = vunpack.c.h.b16 %v766
    %v935 = vunpack.c.l.b16 %v767
    %v936 = vunpack.c.h.b16 %v767
    %v937 = vunpack.c.l.b16 %v768
    %v938 = vunpack.c.h.b16 %v768
    %v939 = vunpack.c.l.b16 %v769
    %v940 = vunpack.c.h.b16 %v769
    %v941 = vunpack.c.l.b16 %v770
    %v942 = vunpack.c.h.b16 %v770
    %v943 = vunpack.c.l.b16 %v771
    %v944 = vunpack.c.h.b16 %v771
    %v945 = vunpack.c.l.b16 %v772
    %v946 = vunpack.c.h.b16 %v772
    %v947 = vunpack.c.l.b16 %v773
    %v948 = vunpack.c.h.b16 %v773
    %v949 = vunpack.c.l.b16 %v774
    %v950 = vunpack.c.h.b16 %v774
    %v951 = vunpack.c.l.b16 %v775
    %v952 = vunpack.c.h.b16 %v775
    %v953 = vunpack.c.l.b16 %v776
    %v954 = vunpack.c.h.b16 %v776
    %v955 = vunpack.c.l.b16 %v777
    %v956 = vunpack.c.h.b16 %v777
    %v957 = vunpack.c.l.b16 %v778
    %v958 = vunpack.c.h.b16 %v778
    %v959 = vpack.c.b16 %v911, %v895
    %v960 = vpack.c.b16 %v912, %v896
    %v961 = vpack.c.b16 %v913, %v897
    %v962 = vpack.c.b16 %v914, %v898
    %v963 = vpack.c.b16 %v915, %v899
    %v964 = vpack.c.b16 %v916, %v900
    %v965 = vpack.c.b16 %v917, %v901
    %v966 = vpack.c.b16 %v918, %v902
    %v967 = vpack.c.b16 %v919, %v903
    %v968 = vpack.c.b16 %v920, %v904
    %v969 = vpack.c.b16 %v921, %v905
    %v970 = vpack.c.b16 %v922, %v906
    %v971 = vpack.c.b16 %v923, %v907
    %v972 = vpack.c.b16 %v924, %v908
    %v973 = vpack.c.b16 %v925, %v909
    %v974 = vpack.c.b16 %v926, %v910
    %v975 = vpack.c.b16 %v943, %v927
    %v976 = vpack.c.b16 %v944, %v928
    %v977 = vpack.c.b16 %v945, %v929
    %v978 = vpack.c.b16 %v946, %v930
    %v979 = vpack.c.b16 %v947, %v931
    %v980 = vpack.c.b16 %v948, %v932
    %v981 = vpack.c.b16 %v949, %v933
    %v982 = vpack.c.b16 %v950, %v934
    %v983 = vpack.c.b16 %v951, %v935
    %v984 = vpack.c.b16 %v952, %v936
    %v985 = vpack.c.b16 %v953, %v937
    %v986 = vpack.c.b16 %v954, %v938
    %v987 = vpack.c.b16 %v955, %v939
    %v988 = vpack.c.b16 %v956, %v940
    %v989 = vpack.c.b16 %v957, %v941
    %v990 = vpack.c.b16 %v958, %v942
    %v1024 = vsel %vm78, %v746, 0
    %1026 = vmatprep.subr.bf16.mxu0 %v960
    %1027 = vmatpush1.bf16.msra.mxu0 %v959
    %1028 = vmatprep.subr.bf16.mxu0 %v976
    %1029 = vmatpush1.bf16.msra.mxu0 %v975
    %1030 = vmatprep.subr.bf16.mxu0 0
    %1031 = vmatpush1.bf16.msra.mxu0 0
    %1032 = vmatprep.subr.bf16.mxu0 0
    %1033 = vmatpush1.bf16.msra.mxu0 0
    %1034 = vmatprep.subr.bf16.mxu0 0
    %1035 = vmatpush1.bf16.msra.mxu0 0
    %1036 = vmatprep.subr.bf16.mxu0 0
    %1037 = vmatpush1.bf16.msra.mxu0 0
    %1038 = vmatprep.subr.bf16.mxu0 0
    %1039 = vmatpush1.bf16.msra.mxu0 0
    %1040 = vmatprep.subr.bf16.mxu0 0
    %1041 = vmatpush1.bf16.msra.mxu0 0
    %1042 = vmatprep.subr.bf16.mxu0 0
    %1043 = vmatpush1.bf16.msra.mxu0 0
    %1044 = vmatprep.subr.bf16.mxu0 0
    %1045 = vmatpush1.bf16.msra.mxu0 0
    %1046 = vmatprep.subr.bf16.mxu0 0
    %1047 = vmatpush1.bf16.msra.mxu0 0
    %1048 = vmatprep.subr.bf16.mxu0 0
    %1049 = vmatpush1.bf16.msra.mxu0 0
    %1050 = vmatprep.subr.bf16.mxu0 0
    %1051 = vmatpush1.bf16.msra.mxu0 0
    %1052 = vmatprep.subr.bf16.mxu0 0
    %1053 = vmatpush1.bf16.msra.mxu0 0
    %1054 = vmatprep.subr.bf16.mxu0 0
    %1055 = vmatpush1.bf16.msra.mxu0 0
    %1056 = vmatprep.subr.bf16.mxu0 0
    %1057 = vmatpush1.bf16.msra.mxu0 0
    %1058 = vmatprep.mubr.bf16.mxu0 0
    %1059 = vmatmul.mubr.bf16.gmra.mrb[0].mxu0 %v1024
    %v1060 = vpop.f32.mrb[0].mxu0
    %v1061 = vadd.f32 %v786, %v1060
    %v1062 = vpop.f32.mrb[0].mxu0
    %v1063 = vadd.f32 %v790, %v1062
    %v1064 = vpop.f32.mrb[0].mxu0
    %v1065 = vadd.f32 %v786, %v1064
    %v1066 = vpop.f32.mrb[0].mxu0
    %v1067 = vadd.f32 %v790, %v1066
    %1068 = vdwg.mxu0
    %1069 = vmatprep.subr.bf16.mxu0 %v962
    %1070 = vmatpush1.bf16.msra.mxu0 %v961
    %1071 = vmatprep.subr.bf16.mxu0 %v978
    %1072 = vmatpush1.bf16.msra.mxu0 %v977
    %1073 = vmatprep.subr.bf16.mxu0 0
    %1074 = vmatpush1.bf16.msra.mxu0 0
    %1075 = vmatprep.subr.bf16.mxu0 0
    %1076 = vmatpush1.bf16.msra.mxu0 0
    %1077 = vmatprep.subr.bf16.mxu0 0
    %1078 = vmatpush1.bf16.msra.mxu0 0
    %1079 = vmatprep.subr.bf16.mxu0 0
    %1080 = vmatpush1.bf16.msra.mxu0 0
    %1081 = vmatprep.subr.bf16.mxu0 0
    %1082 = vmatpush1.bf16.msra.mxu0 0
    %1083 = vmatprep.subr.bf16.mxu0 0
    %1084 = vmatpush1.bf16.msra.mxu0 0
    %1085 = vmatprep.subr.bf16.mxu0 0
    %1086 = vmatpush1.bf16.msra.mxu0 0
    %1087 = vmatprep.subr.bf16.mxu0 0
    %1088 = vmatpush1.bf16.msra.mxu0 0
    %1089 = vmatprep.subr.bf16.mxu0 0
    %1090 = vmatpush1.bf16.msra.mxu0 0
    %1091 = vmatprep.subr.bf16.mxu0 0
    %1092 = vmatpush1.bf16.msra.mxu0 0
    %1093 = vmatprep.subr.bf16.mxu0 0
    %1094 = vmatpush1.bf16.msra.mxu0 0
    %1095 = vmatprep.subr.bf16.mxu0 0
    %1096 = vmatpush1.bf16.msra.mxu0 0
    %1097 = vmatprep.subr.bf16.mxu0 0
    %1098 = vmatpush1.bf16.msra.mxu0 0
    %1099 = vmatprep.subr.bf16.mxu0 0
    %1100 = vmatpush1.bf16.msra.mxu0 0
    %1101 = vmatprep.mubr.bf16.mxu0 0
    %1102 = vmatmul.mubr.bf16.gmra.mrb[0].mxu0 %v1024
    %v1103 = vpop.f32.mrb[0].mxu0
    %v1104 = vadd.f32 %v794, %v1103
    %v1105 = vpop.f32.mrb[0].mxu0
    %v1106 = vadd.f32 %v798, %v1105
    %v1107 = vpop.f32.mrb[0].mxu0
    %v1108 = vadd.f32 %v794, %v1107
    %v1109 = vpop.f32.mrb[0].mxu0
    %v1110 = vadd.f32 %v798, %v1109
    %1111 = vdwg.mxu0
    %1112 = vmatprep.subr.bf16.mxu0 %v964
    %1113 = vmatpush1.bf16.msra.mxu0 %v963
    %1114 = vmatprep.subr.bf16.mxu0 %v980
    %1115 = vmatpush1.bf16.msra.mxu0 %v979
    %1116 = vmatprep.subr.bf16.mxu0 0
    %1117 = vmatpush1.bf16.msra.mxu0 0
    %1118 = vmatprep.subr.bf16.mxu0 0
    %1119 = vmatpush1.bf16.msra.mxu0 0
    %1120 = vmatprep.subr.bf16.mxu0 0
    %1121 = vmatpush1.bf16.msra.mxu0 0
    %1122 = vmatprep.subr.bf16.mxu0 0
    %1123 = vmatpush1.bf16.msra.mxu0 0
    %1124 = vmatprep.subr.bf16.mxu0 0
    %1125 = vmatpush1.bf16.msra.mxu0 0
    %1126 = vmatprep.subr.bf16.mxu0 0
    %1127 = vmatpush1.bf16.msra.mxu0 0
    %1128 = vmatprep.subr.bf16.mxu0 0
    %1129 = vmatpush1.bf16.msra.mxu0 0
    %1130 = vmatprep.subr.bf16.mxu0 0
    %1131 = vmatpush1.bf16.msra.mxu0 0
    %1132 = vmatprep.subr.bf16.mxu0 0
    %1133 = vmatpush1.bf16.msra.mxu0 0
    %1134 = vmatprep.subr.bf16.mxu0 0
    %1135 = vmatpush1.bf16.msra.mxu0 0
    %1136 = vmatprep.subr.bf16.mxu0 0
    %1137 = vmatpush1.bf16.msra.mxu0 0
    %1138 = vmatprep.subr.bf16.mxu0 0
    %1139 = vmatpush1.bf16.msra.mxu0 0
    %1140 = vmatprep.subr.bf16.mxu0 0
    %1141 = vmatpush1.bf16.msra.mxu0 0
    %1142 = vmatprep.subr.bf16.mxu0 0
    %1143 = vmatpush1.bf16.msra.mxu0 0
    %1144 = vmatprep.mubr.bf16.mxu0 0
    %1145 = vmatmul.mubr.bf16.gmra.mrb[0].mxu0 %v1024
    %v1146 = vpop.f32.mrb[0].mxu0
    %v1147 = vadd.f32 %v802, %v1146
    %v1148 = vpop.f32.mrb[0].mxu0
    %v1149 = vadd.f32 %v806, %v1148
    %v1150 = vpop.f32.mrb[0].mxu0
    %v1151 = vadd.f32 %v802, %v1150
    %v1152 = vpop.f32.mrb[0].mxu0
    %v1153 = vadd.f32 %v806, %v1152
    %1154 = vdwg.mxu0
    %1155 = vmatprep.subr.bf16.mxu0 %v966
    %1156 = vmatpush1.bf16.msra.mxu0 %v965
    %1157 = vmatprep.subr.bf16.mxu0 %v982
    %1158 = vmatpush1.bf16.msra.mxu0 %v981
    %1159 = vmatprep.subr.bf16.mxu0 0
    %1160 = vmatpush1.bf16.msra.mxu0 0
    %1161 = vmatprep.subr.bf16.mxu0 0
    %1162 = vmatpush1.bf16.msra.mxu0 0
    %1163 = vmatprep.subr.bf16.mxu0 0
    %1164 = vmatpush1.bf16.msra.mxu0 0
    %1165 = vmatprep.subr.bf16.mxu0 0
    %1166 = vmatpush1.bf16.msra.mxu0 0
    %1167 = vmatprep.subr.bf16.mxu0 0
    %1168 = vmatpush1.bf16.msra.mxu0 0
    %1169 = vmatprep.subr.bf16.mxu0 0
    %1170 = vmatpush1.bf16.msra.mxu0 0
    %1171 = vmatprep.subr.bf16.mxu0 0
    %1172 = vmatpush1.bf16.msra.mxu0 0
    %1173 = vmatprep.subr.bf16.mxu0 0
    %1174 = vmatpush1.bf16.msra.mxu0 0
    %1175 = vmatprep.subr.bf16.mxu0 0
    %1176 = vmatpush1.bf16.msra.mxu0 0
    %1177 = vmatprep.subr.bf16.mxu0 0
    %1178 = vmatpush1.bf16.msra.mxu0 0
    %1179 = vmatprep.subr.bf16.mxu0 0
    %1180 = vmatpush1.bf16.msra.mxu0 0
    %1181 = vmatprep.subr.bf16.mxu0 0
    %1182 = vmatpush1.bf16.msra.mxu0 0
    %1183 = vmatprep.subr.bf16.mxu0 0
    %1184 = vmatpush1.bf16.msra.mxu0 0
    %1185 = vmatprep.subr.bf16.mxu0 0
    %1186 = vmatpush1.bf16.msra.mxu0 0
    %1187 = vmatprep.mubr.bf16.mxu0 0
    %1188 = vmatmul.mubr.bf16.gmra.mrb[0].mxu0 %v1024
    %v1189 = vpop.f32.mrb[0].mxu0
    %v1190 = vadd.f32 %v810, %v1189
    %v1191 = vpop.f32.mrb[0].mxu0
    %v1192 = vadd.f32 %v814, %v1191
    %v1193 = vpop.f32.mrb[0].mxu0
    %v1194 = vadd.f32 %v810, %v1193
    %v1195 = vpop.f32.mrb[0].mxu0
    %v1196 = vadd.f32 %v814, %v1195
    %1197 = vdwg.mxu0
    %1198 = vmatprep.subr.bf16.mxu0 %v968
    %1199 = vmatpush1.bf16.msra.mxu0 %v967
    %1200 = vmatprep.subr.bf16.mxu0 %v984
    %1201 = vmatpush1.bf16.msra.mxu0 %v983
    %1202 = vmatprep.subr.bf16.mxu0 0
    %1203 = vmatpush1.bf16.msra.mxu0 0
    %1204 = vmatprep.subr.bf16.mxu0 0
    %1205 = vmatpush1.bf16.msra.mxu0 0
    %1206 = vmatprep.subr.bf16.mxu0 0
    %1207 = vmatpush1.bf16.msra.mxu0 0
    %1208 = vmatprep.subr.bf16.mxu0 0
    %1209 = vmatpush1.bf16.msra.mxu0 0
    %1210 = vmatprep.subr.bf16.mxu0 0
    %1211 = vmatpush1.bf16.msra.mxu0 0
    %1212 = vmatprep.subr.bf16.mxu0 0
    %1213 = vmatpush1.bf16.msra.mxu0 0
    %1214 = vmatprep.subr.bf16.mxu0 0
    %1215 = vmatpush1.bf16.msra.mxu0 0
    %1216 = vmatprep.subr.bf16.mxu0 0
    %1217 = vmatpush1.bf16.msra.mxu0 0
    %1218 = vmatprep.subr.bf16.mxu0 0
    %1219 = vmatpush1.bf16.msra.mxu0 0
    %1220 = vmatprep.subr.bf16.mxu0 0
    %1221 = vmatpush1.bf16.msra.mxu0 0
    %1222 = vmatprep.subr.bf16.mxu0 0
    %1223 = vmatpush1.bf16.msra.mxu0 0
    %1224 = vmatprep.subr.bf16.mxu0 0
    %1225 = vmatpush1.bf16.msra.mxu0 0
    %1226 = vmatprep.subr.bf16.mxu0 0
    %1227 = vmatpush1.bf16.msra.mxu0 0
    %1228 = vmatprep.subr.bf16.mxu0 0
    %1229 = vmatpush1.bf16.msra.mxu0 0
    %1230 = vmatprep.mubr.bf16.mxu0 0
    %1231 = vmatmul.mubr.bf16.gmra.mrb[0].mxu0 %v1024
    %v1232 = vpop.f32.mrb[0].mxu0
    %v1233 = vadd.f32 %v818, %v1232
    %v1234 = vpop.f32.mrb[0].mxu0
    %v1235 = vadd.f32 %v822, %v1234
    %v1236 = vpop.f32.mrb[0].mxu0
    %v1237 = vadd.f32 %v818, %v1236
    %v1238 = vpop.f32.mrb[0].mxu0
    %v1239 = vadd.f32 %v822, %v1238
    %1240 = vdwg.mxu0
    %1241 = vmatprep.subr.bf16.mxu0 %v970
    %1242 = vmatpush1.bf16.msra.mxu0 %v969
    %1243 = vmatprep.subr.bf16.mxu0 %v986
    %1244 = vmatpush1.bf16.msra.mxu0 %v985
    %1245 = vmatprep.subr.bf16.mxu0 0
    %1246 = vmatpush1.bf16.msra.mxu0 0
    %1247 = vmatprep.subr.bf16.mxu0 0
    %1248 = vmatpush1.bf16.msra.mxu0 0
    %1249 = vmatprep.subr.bf16.mxu0 0
    %1250 = vmatpush1.bf16.msra.mxu0 0
    %1251 = vmatprep.subr.bf16.mxu0 0
    %1252 = vmatpush1.bf16.msra.mxu0 0
    %1253 = vmatprep.subr.bf16.mxu0 0
    %1254 = vmatpush1.bf16.msra.mxu0 0
    %1255 = vmatprep.subr.bf16.mxu0 0
    %1256 = vmatpush1.bf16.msra.mxu0 0
    %1257 = vmatprep.subr.bf16.mxu0 0
    %1258 = vmatpush1.bf16.msra.mxu0 0
    %1259 = vmatprep.subr.bf16.mxu0 0
    %1260 = vmatpush1.bf16.msra.mxu0 0
    %1261 = vmatprep.subr.bf16.mxu0 0
    %1262 = vmatpush1.bf16.msra.mxu0 0
    %1263 = vmatprep.subr.bf16.mxu0 0
    %1264 = vmatpush1.bf16.msra.mxu0 0
    %1265 = vmatprep.subr.bf16.mxu0 0
    %1266 = vmatpush1.bf16.msra.mxu0 0
    %1267 = vmatprep.subr.bf16.mxu0 0
    %1268 = vmatpush1.bf16.msra.mxu0 0
    %1269 = vmatprep.subr.bf16.mxu0 0
    %1270 = vmatpush1.bf16.msra.mxu0 0
    %1271 = vmatprep.subr.bf16.mxu0 0
    %1272 = vmatpush1.bf16.msra.mxu0 0
    %1273 = vmatprep.mubr.bf16.mxu0 0
    %1274 = vmatmul.mubr.bf16.gmra.mrb[0].mxu0 %v1024
    %v1275 = vpop.f32.mrb[0].mxu0
    %v1276 = vadd.f32 %v826, %v1275
    %v1277 = vpop.f32.mrb[0].mxu0
    %v1278 = vadd.f32 %v830, %v1277
    %v1279 = vpop.f32.mrb[0].mxu0
    %v1280 = vadd.f32 %v826, %v1279
    %v1281 = vpop.f32.mrb[0].mxu0
    %v1282 = vadd.f32 %v830, %v1281
    %1283 = vdwg.mxu0
    %1284 = vmatprep.subr.bf16.mxu0 %v972
    %1285 = vmatpush1.bf16.msra.mxu0 %v971
    %1286 = vmatprep.subr.bf16.mxu0 %v988
    %1287 = vmatpush1.bf16.msra.mxu0 %v987
    %1288 = vmatprep.subr.bf16.mxu0 0
    %1289 = vmatpush1.bf16.msra.mxu0 0
    %1290 = vmatprep.subr.bf16.mxu0 0
    %1291 = vmatpush1.bf16.msra.mxu0 0
    %1292 = vmatprep.subr.bf16.mxu0 0
    %1293 = vmatpush1.bf16.msra.mxu0 0
    %1294 = vmatprep.subr.bf16.mxu0 0
    %1295 = vmatpush1.bf16.msra.mxu0 0
    %1296 = vmatprep.subr.bf16.mxu0 0
    %1297 = vmatpush1.bf16.msra.mxu0 0
    %1298 = vmatprep.subr.bf16.mxu0 0
    %1299 = vmatpush1.bf16.msra.mxu0 0
    %1300 = vmatprep.subr.bf16.mxu0 0
    %1301 = vmatpush1.bf16.msra.mxu0 0
    %1302 = vmatprep.subr.bf16.mxu0 0
    %1303 = vmatpush1.bf16.msra.mxu0 0
    %1304 = vmatprep.subr.bf16.mxu0 0
    %1305 = vmatpush1.bf16.msra.mxu0 0
    %1306 = vmatprep.subr.bf16.mxu0 0
    %1307 = vmatpush1.bf16.msra.mxu0 0
    %1308 = vmatprep.subr.bf16.mxu0 0
    %1309 = vmatpush1.bf16.msra.mxu0 0
    %1310 = vmatprep.subr.bf16.mxu0 0
    %1311 = vmatpush1.bf16.msra.mxu0 0
    %1312 = vmatprep.subr.bf16.mxu0 0
    %1313 = vmatpush1.bf16.msra.mxu0 0
    %1314 = vmatprep.subr.bf16.mxu0 0
    %1315 = vmatpush1.bf16.msra.mxu0 0
    %1316 = vmatprep.mubr.bf16.mxu0 0
    %1317 = vmatmul.mubr.bf16.gmra.mrb[0].mxu0 %v1024
    %v1318 = vpop.f32.mrb[0].mxu0
    %v1319 = vadd.f32 %v834, %v1318
    %v1320 = vpop.f32.mrb[0].mxu0
    %v1321 = vadd.f32 %v838, %v1320
    %v1322 = vpop.f32.mrb[0].mxu0
    %v1323 = vadd.f32 %v834, %v1322
    %v1324 = vpop.f32.mrb[0].mxu0
    %v1325 = vadd.f32 %v838, %v1324
    %1326 = vdwg.mxu0
    %1327 = vmatprep.subr.bf16.mxu0 %v974
    %1328 = vmatpush1.bf16.msra.mxu0 %v973
    %1329 = vmatprep.subr.bf16.mxu0 %v990
    %1330 = vmatpush1.bf16.msra.mxu0 %v989
    %1331 = vmatprep.subr.bf16.mxu0 0
    %1332 = vmatpush1.bf16.msra.mxu0 0
    %1333 = vmatprep.subr.bf16.mxu0 0
    %1334 = vmatpush1.bf16.msra.mxu0 0
    %1335 = vmatprep.subr.bf16.mxu0 0
    %1336 = vmatpush1.bf16.msra.mxu0 0
    %1337 = vmatprep.subr.bf16.mxu0 0
    %1338 = vmatpush1.bf16.msra.mxu0 0
    %1339 = vmatprep.subr.bf16.mxu0 0
    %1340 = vmatpush1.bf16.msra.mxu0 0
    %1341 = vmatprep.subr.bf16.mxu0 0
    %1342 = vmatpush1.bf16.msra.mxu0 0
    %1343 = vmatprep.subr.bf16.mxu0 0
    %1344 = vmatpush1.bf16.msra.mxu0 0
    %1345 = vmatprep.subr.bf16.mxu0 0
    %1346 = vmatpush1.bf16.msra.mxu0 0
    %1347 = vmatprep.subr.bf16.mxu0 0
    %1348 = vmatpush1.bf16.msra.mxu0 0
    %1349 = vmatprep.subr.bf16.mxu0 0
    %1350 = vmatpush1.bf16.msra.mxu0 0
    %1351 = vmatprep.subr.bf16.mxu0 0
    %1352 = vmatpush1.bf16.msra.mxu0 0
    %1353 = vmatprep.subr.bf16.mxu0 0
    %1354 = vmatpush1.bf16.msra.mxu0 0
    %1355 = vmatprep.subr.bf16.mxu0 0
    %1356 = vmatpush1.bf16.msra.mxu0 0
    %1357 = vmatprep.subr.bf16.mxu0 0
    %1358 = vmatpush1.bf16.msra.mxu0 0
    %1359 = vmatprep.mubr.bf16.mxu0 0
    %1360 = vmatmul.mubr.bf16.gmra.mrb[0].mxu0 %v1024
    %v1361 = vpop.f32.mrb[0].mxu0
    %v1362 = vadd.f32 %v842, %v1361
    %v1363 = vpop.f32.mrb[0].mxu0
    %v1364 = vadd.f32 %v846, %v1363
    %v1365 = vpop.f32.mrb[0].mxu0
    %v1366 = vadd.f32 %v842, %v1365
    %v1367 = vpop.f32.mrb[0].mxu0
    %v1368 = vadd.f32 %v846, %v1367
    %1369 = vdwg.mxu0
    %v1370 = vmax.f32 %v1061, 0.0
    %v1371 = vmax.f32 %v1063, 0.0
    %v1372 = vmax.f32 %v1104, 0.0
    %v1373 = vmax.f32 %v1106, 0.0
    %v1374 = vmax.f32 %v1147, 0.0
    %v1375 = vmax.f32 %v1149, 0.0
    %v1376 = vmax.f32 %v1190, 0.0
    %v1377 = vmax.f32 %v1192, 0.0
    %v1378 = vmax.f32 %v1233, 0.0
    %v1379 = vmax.f32 %v1235, 0.0
    %v1380 = vmax.f32 %v1276, 0.0
    %v1381 = vmax.f32 %v1278, 0.0
    %v1382 = vmax.f32 %v1319, 0.0
    %v1383 = vmax.f32 %v1321, 0.0
    %v1384 = vmax.f32 %v1362, 0.0
    %v1385 = vmax.f32 %v1364, 0.0
    %v1386 = vmax.f32 %v1065, 0.0
    %v1387 = vmax.f32 %v1067, 0.0
    %v1388 = vmax.f32 %v1108, 0.0
    %v1389 = vmax.f32 %v1110, 0.0
    %v1390 = vmax.f32 %v1151, 0.0
    %v1391 = vmax.f32 %v1153, 0.0
    %v1392 = vmax.f32 %v1194, 0.0
    %v1393 = vmax.f32 %v1196, 0.0
    %v1394 = vmax.f32 %v1237, 0.0
    %v1395 = vmax.f32 %v1239, 0.0
    %v1396 = vmax.f32 %v1280, 0.0
    %v1397 = vmax.f32 %v1282, 0.0
    %v1398 = vmax.f32 %v1323, 0.0
    %v1399 = vmax.f32 %v1325, 0.0
    %v1400 = vmax.f32 %v1366, 0.0
    %v1401 = vmax.f32 %v1368, 0.0
    %v1402 = vpack.c.bf16 %v1386, %v1370
    %v1403 = vpack.c.bf16 %v1387, %v1371
    %v1404 = vpack.c.bf16 %v1388, %v1372
    %v1405 = vpack.c.bf16 %v1389, %v1373
    %v1406 = vpack.c.bf16 %v1390, %v1374
    %v1407 = vpack.c.bf16 %v1391, %v1375
    %v1408 = vpack.c.bf16 %v1392, %v1376
    %v1409 = vpack.c.bf16 %v1393, %v1377
    %v1410 = vpack.c.bf16 %v1394, %v1378
    %v1411 = vpack.c.bf16 %v1395, %v1379
    %v1412 = vpack.c.bf16 %v1396, %v1380
    %v1413 = vpack.c.bf16 %v1397, %v1381
    %v1414 = vpack.c.bf16 %v1398, %v1382
    %v1415 = vpack.c.bf16 %v1399, %v1383
    %v1416 = vpack.c.bf16 %v1400, %v1384
    %v1417 = vpack.c.bf16 %v1401, %v1385
    %v1418 = vld [vmem:[%s7] sm:$0xf]
    %v1419 = vld [vmem:[%s7 + $0x4] sm:$0xf]
    %v1420 = vld [vmem:[%s7 + $0x8] sm:$0xf]
    %v1421 = vld [vmem:[%s7 + $0xc] sm:$0xf]
    %v1422 = vld [vmem:[%s7 + $0x10] sm:$0xf]
    %v1423 = vld [vmem:[%s7 + $0x14] sm:$0xf]
    %v1424 = vld [vmem:[%s7 + $0x18] sm:$0xf]
    %v1425 = vld [vmem:[%s7 + $0x1c] sm:$0xf]
    %v1426 = vld [vmem:[%s7 + $0x20] sm:$0xf]
    %v1427 = vld [vmem:[%s7 + $0x24] sm:$0xf]
    %v1428 = vld [vmem:[%s7 + $0x28] sm:$0xf]
    %v1429 = vld [vmem:[%s7 + $0x2c] sm:$0xf]
    %v1430 = vld [vmem:[%s7 + $0x30] sm:$0xf]
    %v1431 = vld [vmem:[%s7 + $0x34] sm:$0xf]
    %v1432 = vld [vmem:[%s7 + $0x38] sm:$0xf]
    %v1433 = vld [vmem:[%s7 + $0x3c] sm:$0xf]
    %v1434 = vld [vmem:[%s7 + $0x40] sm:$0xf]
    %v1435 = vld [vmem:[%s7 + $0x44] sm:$0xf]
    %v1436 = vld [vmem:[%s7 + $0x48] sm:$0xf]
    %v1437 = vld [vmem:[%s7 + $0x4c] sm:$0xf]
    %v1438 = vld [vmem:[%s7 + $0x50] sm:$0xf]
    %v1439 = vld [vmem:[%s7 + $0x54] sm:$0xf]
    %v1440 = vld [vmem:[%s7 + $0x58] sm:$0xf]
    %v1441 = vld [vmem:[%s7 + $0x5c] sm:$0xf]
    %v1442 = vld [vmem:[%s7 + $0x60] sm:$0xf]
    %v1443 = vld [vmem:[%s7 + $0x64] sm:$0xf]
    %v1444 = vld [vmem:[%s7 + $0x68] sm:$0xf]
    %v1445 = vld [vmem:[%s7 + $0x6c] sm:$0xf]
    %v1446 = vld [vmem:[%s7 + $0x70] sm:$0xf]
    %v1447 = vld [vmem:[%s7 + $0x74] sm:$0xf]
    %v1448 = vld [vmem:[%s7 + $0x78] sm:$0xf]
    %v1449 = vld [vmem:[%s7 + $0x7c] sm:$0xf]
    %v1450 = vld [vmem:[%s7 + $0x80] sm:$0xf]
    %v1451 = vld [vmem:[%s7 + $0x84] sm:$0xf]
    %v1452 = vld [vmem:[%s7 + $0x88] sm:$0xf]
    %v1453 = vld [vmem:[%s7 + $0x8c] sm:$0xf]
    %v1454 = vld [vmem:[%s7 + $0x90] sm:$0xf]
    %v1455 = vld [vmem:[%s7 + $0x94] sm:$0xf]
    %v1456 = vld [vmem:[%s7 + $0x98] sm:$0xf]
    %v1457 = vld [vmem:[%s7 + $0x9c] sm:$0xf]
    %v1458 = vld [vmem:[%s7 + $0xa0] sm:$0xf]
    %v1459 = vld [vmem:[%s7 + $0xa4] sm:$0xf]
    %v1460 = vld [vmem:[%s7 + $0xa8] sm:$0xf]
    %v1461 = vld [vmem:[%s7 + $0xac] sm:$0xf]
    %v1462 = vld [vmem:[%s7 + $0xb0] sm:$0xf]
    %v1463 = vld [vmem:[%s7 + $0xb4] sm:$0xf]
    %v1464 = vld [vmem:[%s7 + $0xb8] sm:$0xf]
    %v1465 = vld [vmem:[%s7 + $0xbc] sm:$0xf]
    %v1466 = vld [vmem:[%s7 + $0xc0] sm:$0xf]
    %v1467 = vld [vmem:[%s7 + $0xc4] sm:$0xf]
    %v1468 = vld [vmem:[%s7 + $0xc8] sm:$0xf]
    %v1469 = vld [vmem:[%s7 + $0xcc] sm:$0xf]
    %v1470 = vld [vmem:[%s7 + $0xd0] sm:$0xf]
    %v1471 = vld [vmem:[%s7 + $0xd4] sm:$0xf]
    %v1472 = vld [vmem:[%s7 + $0xd8] sm:$0xf]
    %v1473 = vld [vmem:[%s7 + $0xdc] sm:$0xf]
    %v1474 = vld [vmem:[%s7 + $0xe0] sm:$0xf]
    %v1475 = vld [vmem:[%s7 + $0xe4] sm:$0xf]
    %v1476 = vld [vmem:[%s7 + $0xe8] sm:$0xf]
    %v1477 = vld [vmem:[%s7 + $0xec] sm:$0xf]
    %v1478 = vld [vmem:[%s7 + $0xf0] sm:$0xf]
    %v1479 = vld [vmem:[%s7 + $0xf4] sm:$0xf]
    %v1480 = vld [vmem:[%s7 + $0xf8] sm:$0xf]
    %v1481 = vld [vmem:[%s7 + $0xfc] sm:$0xf]
    %v1482 = vld [vmem:[%s7 + $0x100] sm:$0xf]
    %v1483 = vld [vmem:[%s7 + $0x104] sm:$0xf]
    %v1484 = vld [vmem:[%s7 + $0x108] sm:$0xf]
    %v1485 = vld [vmem:[%s7 + $0x10c] sm:$0xf]
    %v1486 = vld [vmem:[%s7 + $0x110] sm:$0xf]
    %v1487 = vld [vmem:[%s7 + $0x114] sm:$0xf]
    %v1488 = vld [vmem:[%s7 + $0x118] sm:$0xf]
    %v1489 = vld [vmem:[%s7 + $0x11c] sm:$0xf]
    %v1490 = vld [vmem:[%s7 + $0x120] sm:$0xf]
    %v1491 = vld [vmem:[%s7 + $0x124] sm:$0xf]
    %v1492 = vld [vmem:[%s7 + $0x128] sm:$0xf]
    %v1493 = vld [vmem:[%s7 + $0x12c] sm:$0xf]
    %v1494 = vld [vmem:[%s7 + $0x130] sm:$0xf]
    %v1495 = vld [vmem:[%s7 + $0x134] sm:$0xf]
    %v1496 = vld [vmem:[%s7 + $0x138] sm:$0xf]
    %v1497 = vld [vmem:[%s7 + $0x13c] sm:$0xf]
    %v1498 = vld [vmem:[%s7 + $0x140] sm:$0xf]
    %v1499 = vld [vmem:[%s7 + $0x144] sm:$0xf]
    %v1500 = vld [vmem:[%s7 + $0x148] sm:$0xf]
    %v1501 = vld [vmem:[%s7 + $0x14c] sm:$0xf]
    %v1502 = vld [vmem:[%s7 + $0x150] sm:$0xf]
    %v1503 = vld [vmem:[%s7 + $0x154] sm:$0xf]
    %v1504 = vld [vmem:[%s7 + $0x158] sm:$0xf]
    %v1505 = vld [vmem:[%s7 + $0x15c] sm:$0xf]
    %v1506 = vld [vmem:[%s7 + $0x160] sm:$0xf]
    %v1507 = vld [vmem:[%s7 + $0x164] sm:$0xf]
    %v1508 = vld [vmem:[%s7 + $0x168] sm:$0xf]
    %v1509 = vld [vmem:[%s7 + $0x16c] sm:$0xf]
    %v1510 = vld [vmem:[%s7 + $0x170] sm:$0xf]
    %v1511 = vld [vmem:[%s7 + $0x174] sm:$0xf]
    %v1512 = vld [vmem:[%s7 + $0x178] sm:$0xf]
    %v1513 = vld [vmem:[%s7 + $0x17c] sm:$0xf]
    %v1514 = vld [vmem:[%s7 + $0x180] sm:$0xf]
    %v1515 = vld [vmem:[%s7 + $0x184] sm:$0xf]
    %v1516 = vld [vmem:[%s7 + $0x188] sm:$0xf]
    %v1517 = vld [vmem:[%s7 + $0x18c] sm:$0xf]
    %v1518 = vld [vmem:[%s7 + $0x190] sm:$0xf]
    %v1519 = vld [vmem:[%s7 + $0x194] sm:$0xf]
    %v1520 = vld [vmem:[%s7 + $0x198] sm:$0xf]
    %v1521 = vld [vmem:[%s7 + $0x19c] sm:$0xf]
    %v1522 = vld [vmem:[%s7 + $0x1a0] sm:$0xf]
    %v1523 = vld [vmem:[%s7 + $0x1a4] sm:$0xf]
    %v1524 = vld [vmem:[%s7 + $0x1a8] sm:$0xf]
    %v1525 = vld [vmem:[%s7 + $0x1ac] sm:$0xf]
    %v1526 = vld [vmem:[%s7 + $0x1b0] sm:$0xf]
    %v1527 = vld [vmem:[%s7 + $0x1b4] sm:$0xf]
    %v1528 = vld [vmem:[%s7 + $0x1b8] sm:$0xf]
    %v1529 = vld [vmem:[%s7 + $0x1bc] sm:$0xf]
    %v1530 = vld [vmem:[%s7 + $0x1c0] sm:$0xf]
    %v1531 = vld [vmem:[%s7 + $0x1c4] sm:$0xf]
    %v1532 = vld [vmem:[%s7 + $0x1c8] sm:$0xf]
    %v1533 = vld [vmem:[%s7 + $0x1cc] sm:$0xf]
    %v1534 = vld [vmem:[%s7 + $0x1d0] sm:$0xf]
    %v1535 = vld [vmem:[%s7 + $0x1d4] sm:$0xf]
    %v1536 = vld [vmem:[%s7 + $0x1d8] sm:$0xf]
    %v1537 = vld [vmem:[%s7 + $0x1dc] sm:$0xf]
    %v1538 = vld [vmem:[%s7 + $0x1e0] sm:$0xf]
    %v1539 = vld [vmem:[%s7 + $0x1e4] sm:$0xf]
    %v1540 = vld [vmem:[%s7 + $0x1e8] sm:$0xf]
    %v1541 = vld [vmem:[%s7 + $0x1ec] sm:$0xf]
    %v1542 = vld [vmem:[%s7 + $0x1f0] sm:$0xf]
    %v1543 = vld [vmem:[%s7 + $0x1f4] sm:$0xf]
    %v1544 = vld [vmem:[%s7 + $0x1f8] sm:$0xf]
    %v1545 = vld [vmem:[%s7 + $0x1fc] sm:$0xf]
    %v1546 = vld [vmem:[%s7 + $0x200] sm:$0xf]
    %v1547 = vld [vmem:[%s7 + $0x204] sm:$0xf]
    %v1548 = vld [vmem:[%s7 + $0x208] sm:$0xf]
    %v1549 = vld [vmem:[%s7 + $0x20c] sm:$0xf]
    %v1550 = vld [vmem:[%s7 + $0x210] sm:$0xf]
    %v1551 = vld [vmem:[%s7 + $0x214] sm:$0xf]
    %v1552 = vld [vmem:[%s7 + $0x218] sm:$0xf]
    %v1553 = vld [vmem:[%s7 + $0x21c] sm:$0xf]
    %v1554 = vld [vmem:[%s7 + $0x220] sm:$0xf]
    %v1555 = vld [vmem:[%s7 + $0x224] sm:$0xf]
    %v1556 = vld [vmem:[%s7 + $0x228] sm:$0xf]
    %v1557 = vld [vmem:[%s7 + $0x22c] sm:$0xf]
    %v1558 = vld [vmem:[%s7 + $0x230] sm:$0xf]
    %v1559 = vld [vmem:[%s7 + $0x234] sm:$0xf]
    %v1560 = vld [vmem:[%s7 + $0x238] sm:$0xf]
    %v1561 = vld [vmem:[%s7 + $0x23c] sm:$0xf]
    %v1562 = vld [vmem:[%s7 + $0x240] sm:$0xf]
    %v1563 = vld [vmem:[%s7 + $0x244] sm:$0xf]
    %v1564 = vld [vmem:[%s7 + $0x248] sm:$0xf]
    %v1565 = vld [vmem:[%s7 + $0x24c] sm:$0xf]
    %v1566 = vld [vmem:[%s7 + $0x250] sm:$0xf]
    %v1567 = vld [vmem:[%s7 + $0x254] sm:$0xf]
    %v1568 = vld [vmem:[%s7 + $0x258] sm:$0xf]
    %v1569 = vld [vmem:[%s7 + $0x25c] sm:$0xf]
    %v1570 = vld [vmem:[%s7 + $0x260] sm:$0xf]
    %v1571 = vld [vmem:[%s7 + $0x264] sm:$0xf]
    %v1572 = vld [vmem:[%s7 + $0x268] sm:$0xf]
    %v1573 = vld [vmem:[%s7 + $0x26c] sm:$0xf]
    %v1574 = vld [vmem:[%s7 + $0x270] sm:$0xf]
    %v1575 = vld [vmem:[%s7 + $0x274] sm:$0xf]
    %v1576 = vld [vmem:[%s7 + $0x278] sm:$0xf]
    %v1577 = vld [vmem:[%s7 + $0x27c] sm:$0xf]
    %v1578 = vld [vmem:[%s7 + $0x280] sm:$0xf]
    %v1579 = vld [vmem:[%s7 + $0x284] sm:$0xf]
    %v1580 = vld [vmem:[%s7 + $0x288] sm:$0xf]
    %v1581 = vld [vmem:[%s7 + $0x28c] sm:$0xf]
    %v1582 = vld [vmem:[%s7 + $0x290] sm:$0xf]
    %v1583 = vld [vmem:[%s7 + $0x294] sm:$0xf]
    %v1584 = vld [vmem:[%s7 + $0x298] sm:$0xf]
    %v1585 = vld [vmem:[%s7 + $0x29c] sm:$0xf]
    %v1586 = vld [vmem:[%s7 + $0x2a0] sm:$0xf]
    %v1587 = vld [vmem:[%s7 + $0x2a4] sm:$0xf]
    %v1588 = vld [vmem:[%s7 + $0x2a8] sm:$0xf]
    %v1589 = vld [vmem:[%s7 + $0x2ac] sm:$0xf]
    %v1590 = vld [vmem:[%s7 + $0x2b0] sm:$0xf]
    %v1591 = vld [vmem:[%s7 + $0x2b4] sm:$0xf]
    %v1592 = vld [vmem:[%s7 + $0x2b8] sm:$0xf]
    %v1593 = vld [vmem:[%s7 + $0x2bc] sm:$0xf]
    %v1594 = vld [vmem:[%s7 + $0x2c0] sm:$0xf]
    %v1595 = vld [vmem:[%s7 + $0x2c4] sm:$0xf]
    %v1596 = vld [vmem:[%s7 + $0x2c8] sm:$0xf]
    %v1597 = vld [vmem:[%s7 + $0x2cc] sm:$0xf]
    %v1598 = vld [vmem:[%s7 + $0x2d0] sm:$0xf]
    %v1599 = vld [vmem:[%s7 + $0x2d4] sm:$0xf]
    %v1600 = vld [vmem:[%s7 + $0x2d8] sm:$0xf]
    %v1601 = vld [vmem:[%s7 + $0x2dc] sm:$0xf]
    %v1602 = vld [vmem:[%s7 + $0x2e0] sm:$0xf]
    %v1603 = vld [vmem:[%s7 + $0x2e4] sm:$0xf]
    %v1604 = vld [vmem:[%s7 + $0x2e8] sm:$0xf]
    %v1605 = vld [vmem:[%s7 + $0x2ec] sm:$0xf]
    %v1606 = vld [vmem:[%s7 + $0x2f0] sm:$0xf]
    %v1607 = vld [vmem:[%s7 + $0x2f4] sm:$0xf]
    %v1608 = vld [vmem:[%s7 + $0x2f8] sm:$0xf]
    %v1609 = vld [vmem:[%s7 + $0x2fc] sm:$0xf]
    %v1610 = vld [vmem:[%s7 + $0x300] sm:$0xf]
    %v1611 = vld [vmem:[%s7 + $0x304] sm:$0xf]
    %v1612 = vld [vmem:[%s7 + $0x308] sm:$0xf]
    %v1613 = vld [vmem:[%s7 + $0x30c] sm:$0xf]
    %v1614 = vld [vmem:[%s7 + $0x310] sm:$0xf]
    %v1615 = vld [vmem:[%s7 + $0x314] sm:$0xf]
    %v1616 = vld [vmem:[%s7 + $0x318] sm:$0xf]
    %v1617 = vld [vmem:[%s7 + $0x31c] sm:$0xf]
    %v1618 = vld [vmem:[%s7 + $0x320] sm:$0xf]
    %v1619 = vld [vmem:[%s7 + $0x324] sm:$0xf]
    %v1620 = vld [vmem:[%s7 + $0x328] sm:$0xf]
    %v1621 = vld [vmem:[%s7 + $0x32c] sm:$0xf]
    %v1622 = vld [vmem:[%s7 + $0x330] sm:$0xf]
    %v1623 = vld [vmem:[%s7 + $0x334] sm:$0xf]
    %v1624 = vld [vmem:[%s7 + $0x338] sm:$0xf]
    %v1625 = vld [vmem:[%s7 + $0x33c] sm:$0xf]
    %v1626 = vld [vmem:[%s7 + $0x340] sm:$0xf]
    %v1627 = vld [vmem:[%s7 + $0x344] sm:$0xf]
    %v1628 = vld [vmem:[%s7 + $0x348] sm:$0xf]
    %v1629 = vld [vmem:[%s7 + $0x34c] sm:$0xf]
    %v1630 = vld [vmem:[%s7 + $0x350] sm:$0xf]
    %v1631 = vld [vmem:[%s7 + $0x354] sm:$0xf]
    %v1632 = vld [vmem:[%s7 + $0x358] sm:$0xf]
    %v1633 = vld [vmem:[%s7 + $0x35c] sm:$0xf]
    %v1634 = vld [vmem:[%s7 + $0x360] sm:$0xf]
    %v1635 = vld [vmem:[%s7 + $0x364] sm:$0xf]
    %v1636 = vld [vmem:[%s7 + $0x368] sm:$0xf]
    %v1637 = vld [vmem:[%s7 + $0x36c] sm:$0xf]
    %v1638 = vld [vmem:[%s7 + $0x370] sm:$0xf]
    %v1639 = vld [vmem:[%s7 + $0x374] sm:$0xf]
    %v1640 = vld [vmem:[%s7 + $0x378] sm:$0xf]
    %v1641 = vld [vmem:[%s7 + $0x37c] sm:$0xf]
    %v1642 = vld [vmem:[%s7 + $0x380] sm:$0xf]
    %v1643 = vld [vmem:[%s7 + $0x384] sm:$0xf]
    %v1644 = vld [vmem:[%s7 + $0x388] sm:$0xf]
    %v1645 = vld [vmem:[%s7 + $0x38c] sm:$0xf]
    %v1646 = vld [vmem:[%s7 + $0x390] sm:$0xf]
    %v1647 = vld [vmem:[%s7 + $0x394] sm:$0xf]
    %v1648 = vld [vmem:[%s7 + $0x398] sm:$0xf]
    %v1649 = vld [vmem:[%s7 + $0x39c] sm:$0xf]
    %v1650 = vld [vmem:[%s7 + $0x3a0] sm:$0xf]
    %v1651 = vld [vmem:[%s7 + $0x3a4] sm:$0xf]
    %v1652 = vld [vmem:[%s7 + $0x3a8] sm:$0xf]
    %v1653 = vld [vmem:[%s7 + $0x3ac] sm:$0xf]
    %v1654 = vld [vmem:[%s7 + $0x3b0] sm:$0xf]
    %v1655 = vld [vmem:[%s7 + $0x3b4] sm:$0xf]
    %v1656 = vld [vmem:[%s7 + $0x3b8] sm:$0xf]
    %v1657 = vld [vmem:[%s7 + $0x3bc] sm:$0xf]
    %v1658 = vld [vmem:[%s7 + $0x3c0] sm:$0xf]
    %v1659 = vld [vmem:[%s7 + $0x3c4] sm:$0xf]
    %v1660 = vld [vmem:[%s7 + $0x3c8] sm:$0xf]
    %v1661 = vld [vmem:[%s7 + $0x3cc] sm:$0xf]
    %v1662 = vld [vmem:[%s7 + $0x3d0] sm:$0xf]
    %v1663 = vld [vmem:[%s7 + $0x3d4] sm:$0xf]
    %v1664 = vld [vmem:[%s7 + $0x3d8] sm:$0xf]
    %v1665 = vld [vmem:[%s7 + $0x3dc] sm:$0xf]
    %v1666 = vld [vmem:[%s7 + $0x3e0] sm:$0xf]
    %v1667 = vld [vmem:[%s7 + $0x3e4] sm:$0xf]
    %v1668 = vld [vmem:[%s7 + $0x3e8] sm:$0xf]
    %v1669 = vld [vmem:[%s7 + $0x3ec] sm:$0xf]
    %v1670 = vld [vmem:[%s7 + $0x3f0] sm:$0xf]
    %v1671 = vld [vmem:[%s7 + $0x3f4] sm:$0xf]
    %v1672 = vld [vmem:[%s7 + $0x3f8] sm:$0xf]
    %v1673 = vld [vmem:[%s7 + $0x3fc] sm:$0xf]
    %v1674 = vlaneseq
    %v1675 = vshrl.u32 %v1674, 7
    %v1676 = vsub.s32 6, %v1675
    %v1677 = vrot.slane %v59, %v1676
    %v1934 = vunpack.c.l.b16 %v1418
    %v1935 = vunpack.c.l.b16 %v1419
    %v1936 = vunpack.c.l.b16 %v1420
    %v1937 = vunpack.c.l.b16 %v1421
    %v1938 = vunpack.c.l.b16 %v1422
    %v1939 = vunpack.c.l.b16 %v1423
    %v1940 = vunpack.c.l.b16 %v1424
    %v1941 = vunpack.c.l.b16 %v1425
    %v1942 = vunpack.c.l.b16 %v1426
    %v1943 = vunpack.c.l.b16 %v1427
    %v1944 = vunpack.c.l.b16 %v1428
    %v1945 = vunpack.c.l.b16 %v1429
    %v1946 = vunpack.c.l.b16 %v1430
    %v1947 = vunpack.c.l.b16 %v1431
    %v1948 = vunpack.c.l.b16 %v1432
    %v1949 = vunpack.c.l.b16 %v1433
    %v1950 = vunpack.c.l.b16 %v1434
    %v1951 = vunpack.c.l.b16 %v1435
    %v1952 = vunpack.c.l.b16 %v1436
    %v1953 = vunpack.c.l.b16 %v1437
    %v1954 = vunpack.c.l.b16 %v1438
    %v1955 = vunpack.c.l.b16 %v1439
    %v1956 = vunpack.c.l.b16 %v1440
    %v1957 = vunpack.c.l.b16 %v1441
    %v1958 = vunpack.c.l.b16 %v1442
    %v1959 = vunpack.c.l.b16 %v1443
    %v1960 = vunpack.c.l.b16 %v1444
    %v1961 = vunpack.c.l.b16 %v1445
    %v1962 = vunpack.c.l.b16 %v1446
    %v1963 = vunpack.c.l.b16 %v1447
    %v1964 = vunpack.c.l.b16 %v1448
    %v1965 = vunpack.c.l.b16 %v1449
    %v1966 = vunpack.c.l.b16 %v1450
    %v1967 = vunpack.c.l.b16 %v1451
    %v1968 = vunpack.c.l.b16 %v1452
    %v1969 = vunpack.c.l.b16 %v1453
    %v1970 = vunpack.c.l.b16 %v1454
    %v1971 = vunpack.c.l.b16 %v1455
    %v1972 = vunpack.c.l.b16 %v1456
    %v1973 = vunpack.c.l.b16 %v1457
    %v1974 = vunpack.c.l.b16 %v1458
    %v1975 = vunpack.c.l.b16 %v1459
    %v1976 = vunpack.c.l.b16 %v1460
    %v1977 = vunpack.c.l.b16 %v1461
    %v1978 = vunpack.c.l.b16 %v1462
    %v1979 = vunpack.c.l.b16 %v1463
    %v1980 = vunpack.c.l.b16 %v1464
    %v1981 = vunpack.c.l.b16 %v1465
    %v1982 = vunpack.c.l.b16 %v1466
    %v1983 = vunpack.c.l.b16 %v1467
    %v1984 = vunpack.c.l.b16 %v1468
    %v1985 = vunpack.c.l.b16 %v1469
    %v1986 = vunpack.c.l.b16 %v1470
    %v1987 = vunpack.c.l.b16 %v1471
    %v1988 = vunpack.c.l.b16 %v1472
    %v1989 = vunpack.c.l.b16 %v1473
    %v1990 = vunpack.c.l.b16 %v1474
    %v1991 = vunpack.c.l.b16 %v1475
    %v1992 = vunpack.c.l.b16 %v1476
    %v1993 = vunpack.c.l.b16 %v1477
    %v1994 = vunpack.c.l.b16 %v1478
    %v1995 = vunpack.c.l.b16 %v1479
    %v1996 = vunpack.c.l.b16 %v1480
    %v1997 = vunpack.c.l.b16 %v1481
    %v1998 = vunpack.c.l.b16 %v1482
    %v1999 = vunpack.c.l.b16 %v1483
    %v2000 = vunpack.c.l.b16 %v1484
    %v2001 = vunpack.c.l.b16 %v1485
    %v2002 = vunpack.c.l.b16 %v1486
    %v2003 = vunpack.c.l.b16 %v1487
    %v2004 = vunpack.c.l.b16 %v1488
    %v2005 = vunpack.c.l.b16 %v1489
    %v2006 = vunpack.c.l.b16 %v1490
    %v2007 = vunpack.c.l.b16 %v1491
    %v2008 = vunpack.c.l.b16 %v1492
    %v2009 = vunpack.c.l.b16 %v1493
    %v2010 = vunpack.c.l.b16 %v1494
    %v2011 = vunpack.c.l.b16 %v1495
    %v2012 = vunpack.c.l.b16 %v1496
    %v2013 = vunpack.c.l.b16 %v1497
    %v2014 = vunpack.c.l.b16 %v1498
    %v2015 = vunpack.c.l.b16 %v1499
    %v2016 = vunpack.c.l.b16 %v1500
    %v2017 = vunpack.c.l.b16 %v1501
    %v2018 = vunpack.c.l.b16 %v1502
    %v2019 = vunpack.c.l.b16 %v1503
    %v2020 = vunpack.c.l.b16 %v1504
    %v2021 = vunpack.c.l.b16 %v1505
    %v2022 = vunpack.c.l.b16 %v1506
    %v2023 = vunpack.c.l.b16 %v1507
    %v2024 = vunpack.c.l.b16 %v1508
    %v2025 = vunpack.c.l.b16 %v1509
    %v2026 = vunpack.c.l.b16 %v1510
    %v2027 = vunpack.c.l.b16 %v1511
    %v2028 = vunpack.c.l.b16 %v1512
    %v2029 = vunpack.c.l.b16 %v1513
    %v2030 = vunpack.c.l.b16 %v1514
    %v2031 = vunpack.c.l.b16 %v1515
    %v2032 = vunpack.c.l.b16 %v1516
    %v2033 = vunpack.c.l.b16 %v1517
    %v2034 = vunpack.c.l.b16 %v1518
    %v2035 = vunpack.c.l.b16 %v1519
    %v2036 = vunpack.c.l.b16 %v1520
    %v2037 = vunpack.c.l.b16 %v1521
    %v2038 = vunpack.c.l.b16 %v1522
    %v2039 = vunpack.c.l.b16 %v1523
    %v2040 = vunpack.c.l.b16 %v1524
    %v2041 = vunpack.c.l.b16 %v1525
    %v2042 = vunpack.c.l.b16 %v1526
    %v2043 = vunpack.c.l.b16 %v1527
    %v2044 = vunpack.c.l.b16 %v1528
    %v2045 = vunpack.c.l.b16 %v1529
    %v2046 = vunpack.c.l.b16 %v1530
    %v2047 = vunpack.c.l.b16 %v1531
    %v2048 = vunpack.c.l.b16 %v1532
    %v2049 = vunpack.c.l.b16 %v1533
    %v2050 = vunpack.c.l.b16 %v1534
    %v2051 = vunpack.c.l.b16 %v1535
    %v2052 = vunpack.c.l.b16 %v1536
    %v2053 = vunpack.c.l.b16 %v1537
    %v2054 = vunpack.c.l.b16 %v1538
    %v2055 = vunpack.c.l.b16 %v1539
    %v2056 = vunpack.c.l.b16 %v1540
    %v2057 = vunpack.c.l.b16 %v1541
    %v2058 = vunpack.c.l.b16 %v1542
    %v2059 = vunpack.c.l.b16 %v1543
    %v2060 = vunpack.c.l.b16 %v1544
    %v2061 = vunpack.c.l.b16 %v1545
    %v2062 = vunpack.c.l.b16 %v1546
    %v2063 = vunpack.c.l.b16 %v1547
    %v2064 = vunpack.c.l.b16 %v1548
    %v2065 = vunpack.c.l.b16 %v1549
    %v2066 = vunpack.c.l.b16 %v1550
    %v2067 = vunpack.c.l.b16 %v1551
    %v2068 = vunpack.c.l.b16 %v1552
    %v2069 = vunpack.c.l.b16 %v1553
    %v2070 = vunpack.c.l.b16 %v1554
    %v2071 = vunpack.c.l.b16 %v1555
    %v2072 = vunpack.c.l.b16 %v1556
    %v2073 = vunpack.c.l.b16 %v1557
    %v2074 = vunpack.c.l.b16 %v1558
    %v2075 = vunpack.c.l.b16 %v1559
    %v2076 = vunpack.c.l.b16 %v1560
    %v2077 = vunpack.c.l.b16 %v1561
    %v2078 = vunpack.c.l.b16 %v1562
    %v2079 = vunpack.c.l.b16 %v1563
    %v2080 = vunpack.c.l.b16 %v1564
    %v2081 = vunpack.c.l.b16 %v1565
    %v2082 = vunpack.c.l.b16 %v1566
    %v2083 = vunpack.c.l.b16 %v1567
    %v2084 = vunpack.c.l.b16 %v1568
    %v2085 = vunpack.c.l.b16 %v1569
    %v2086 = vunpack.c.l.b16 %v1570
    %v2087 = vunpack.c.l.b16 %v1571
    %v2088 = vunpack.c.l.b16 %v1572
    %v2089 = vunpack.c.l.b16 %v1573
    %v2090 = vunpack.c.l.b16 %v1574
    %v2091 = vunpack.c.l.b16 %v1575
    %v2092 = vunpack.c.l.b16 %v1576
    %v2093 = vunpack.c.l.b16 %v1577
    %v2094 = vunpack.c.l.b16 %v1578
    %v2095 = vunpack.c.l.b16 %v1579
    %v2096 = vunpack.c.l.b16 %v1580
    %v2097 = vunpack.c.l.b16 %v1581
    %v2098 = vunpack.c.l.b16 %v1582
    %v2099 = vunpack.c.l.b16 %v1583
    %v2100 = vunpack.c.l.b16 %v1584
    %v2101 = vunpack.c.l.b16 %v1585
    %v2102 = vunpack.c.l.b16 %v1586
    %v2103 = vunpack.c.l.b16 %v1587
    %v2104 = vunpack.c.l.b16 %v1588
    %v2105 = vunpack.c.l.b16 %v1589
    %v2106 = vunpack.c.l.b16 %v1590
    %v2107 = vunpack.c.l.b16 %v1591
    %v2108 = vunpack.c.l.b16 %v1592
    %v2109 = vunpack.c.l.b16 %v1593
    %v2110 = vunpack.c.l.b16 %v1594
    %v2111 = vunpack.c.l.b16 %v1595
    %v2112 = vunpack.c.l.b16 %v1596
    %v2113 = vunpack.c.l.b16 %v1597
    %v2114 = vunpack.c.l.b16 %v1598
    %v2115 = vunpack.c.l.b16 %v1599
    %v2116 = vunpack.c.l.b16 %v1600
    %v2117 = vunpack.c.l.b16 %v1601
    %v2118 = vunpack.c.l.b16 %v1602
    %v2119 = vunpack.c.l.b16 %v1603
    %v2120 = vunpack.c.l.b16 %v1604
    %v2121 = vunpack.c.l.b16 %v1605
    %v2122 = vunpack.c.l.b16 %v1606
    %v2123 = vunpack.c.l.b16 %v1607
    %v2124 = vunpack.c.l.b16 %v1608
    %v2125 = vunpack.c.l.b16 %v1609
    %v2126 = vunpack.c.l.b16 %v1610
    %v2127 = vunpack.c.l.b16 %v1611
    %v2128 = vunpack.c.l.b16 %v1612
    %v2129 = vunpack.c.l.b16 %v1613
    %v2130 = vunpack.c.l.b16 %v1614
    %v2131 = vunpack.c.l.b16 %v1615
    %v2132 = vunpack.c.l.b16 %v1616
    %v2133 = vunpack.c.l.b16 %v1617
    %v2134 = vunpack.c.l.b16 %v1618
    %v2135 = vunpack.c.l.b16 %v1619
    %v2136 = vunpack.c.l.b16 %v1620
    %v2137 = vunpack.c.l.b16 %v1621
    %v2138 = vunpack.c.l.b16 %v1622
    %v2139 = vunpack.c.l.b16 %v1623
    %v2140 = vunpack.c.l.b16 %v1624
    %v2141 = vunpack.c.l.b16 %v1625
    %v2142 = vunpack.c.l.b16 %v1626
    %v2143 = vunpack.c.l.b16 %v1627
    %v2144 = vunpack.c.l.b16 %v1628
    %v2145 = vunpack.c.l.b16 %v1629
    %v2146 = vunpack.c.l.b16 %v1630
    %v2147 = vunpack.c.l.b16 %v1631
    %v2148 = vunpack.c.l.b16 %v1632
    %v2149 = vunpack.c.l.b16 %v1633
    %v2150 = vunpack.c.l.b16 %v1634
    %v2151 = vunpack.c.l.b16 %v1635
    %v2152 = vunpack.c.l.b16 %v1636
    %v2153 = vunpack.c.l.b16 %v1637
    %v2154 = vunpack.c.l.b16 %v1638
    %v2155 = vunpack.c.l.b16 %v1639
    %v2156 = vunpack.c.l.b16 %v1640
    %v2157 = vunpack.c.l.b16 %v1641
    %v2158 = vunpack.c.l.b16 %v1642
    %v2159 = vunpack.c.l.b16 %v1643
    %v2160 = vunpack.c.l.b16 %v1644
    %v2161 = vunpack.c.l.b16 %v1645
    %v2162 = vunpack.c.l.b16 %v1646
    %v2163 = vunpack.c.l.b16 %v1647
    %v2164 = vunpack.c.l.b16 %v1648
    %v2165 = vunpack.c.l.b16 %v1649
    %v2166 = vunpack.c.l.b16 %v1650
    %v2167 = vunpack.c.l.b16 %v1651
    %v2168 = vunpack.c.l.b16 %v1652
    %v2169 = vunpack.c.l.b16 %v1653
    %v2170 = vunpack.c.l.b16 %v1654
    %v2171 = vunpack.c.l.b16 %v1655
    %v2172 = vunpack.c.l.b16 %v1656
    %v2173 = vunpack.c.l.b16 %v1657
    %v2174 = vunpack.c.l.b16 %v1658
    %v2175 = vunpack.c.l.b16 %v1659
    %v2176 = vunpack.c.l.b16 %v1660
    %v2177 = vunpack.c.l.b16 %v1661
    %v2178 = vunpack.c.l.b16 %v1662
    %v2179 = vunpack.c.l.b16 %v1663
    %v2180 = vunpack.c.l.b16 %v1664
    %v2181 = vunpack.c.l.b16 %v1665
    %v2182 = vunpack.c.l.b16 %v1666
    %v2183 = vunpack.c.l.b16 %v1667
    %v2184 = vunpack.c.l.b16 %v1668
    %v2185 = vunpack.c.l.b16 %v1669
    %v2186 = vunpack.c.l.b16 %v1670
    %v2187 = vunpack.c.l.b16 %v1671
    %v2188 = vunpack.c.l.b16 %v1672
    %v2189 = vunpack.c.l.b16 %v1673
    %v2190 = vpack.c.b16 %v1935, %v1934
    %v2191 = vpack.c.b16 %v1937, %v1936
    %v2192 = vpack.c.b16 %v1939, %v1938
    %v2193 = vpack.c.b16 %v1941, %v1940
    %v2194 = vpack.c.b16 %v1943, %v1942
    %v2195 = vpack.c.b16 %v1945, %v1944
    %v2196 = vpack.c.b16 %v1947, %v1946
    %v2197 = vpack.c.b16 %v1949, %v1948
    %v2198 = vpack.c.b16 %v1951, %v1950
    %v2199 = vpack.c.b16 %v1953, %v1952
    %v2200 = vpack.c.b16 %v1955, %v1954
    %v2201 = vpack.c.b16 %v1957, %v1956
    %v2202 = vpack.c.b16 %v1959, %v1958
    %v2203 = vpack.c.b16 %v1961, %v1960
    %v2204 = vpack.c.b16 %v1963, %v1962
    %v2205 = vpack.c.b16 %v1965, %v1964
    %v2206 = vpack.c.b16 %v1967, %v1966
    %v2207 = vpack.c.b16 %v1969, %v1968
    %v2208 = vpack.c.b16 %v1971, %v1970
    %v2209 = vpack.c.b16 %v1973, %v1972
    %v2210 = vpack.c.b16 %v1975, %v1974
    %v2211 = vpack.c.b16 %v1977, %v1976
    %v2212 = vpack.c.b16 %v1979, %v1978
    %v2213 = vpack.c.b16 %v1981, %v1980
    %v2214 = vpack.c.b16 %v1983, %v1982
    %v2215 = vpack.c.b16 %v1985, %v1984
    %v2216 = vpack.c.b16 %v1987, %v1986
    %v2217 = vpack.c.b16 %v1989, %v1988
    %v2218 = vpack.c.b16 %v1991, %v1990
    %v2219 = vpack.c.b16 %v1993, %v1992
    %v2220 = vpack.c.b16 %v1995, %v1994
    %v2221 = vpack.c.b16 %v1997, %v1996
    %v2222 = vpack.c.b16 %v1999, %v1998
    %v2223 = vpack.c.b16 %v2001, %v2000
    %v2224 = vpack.c.b16 %v2003, %v2002
    %v2225 = vpack.c.b16 %v2005, %v2004
    %v2226 = vpack.c.b16 %v2007, %v2006
    %v2227 = vpack.c.b16 %v2009, %v2008
    %v2228 = vpack.c.b16 %v2011, %v2010
    %v2229 = vpack.c.b16 %v2013, %v2012
    %v2230 = vpack.c.b16 %v2015, %v2014
    %v2231 = vpack.c.b16 %v2017, %v2016
    %v2232 = vpack.c.b16 %v2019, %v2018
    %v2233 = vpack.c.b16 %v2021, %v2020
    %v2234 = vpack.c.b16 %v2023, %v2022
    %v2235 = vpack.c.b16 %v2025, %v2024
    %v2236 = vpack.c.b16 %v2027, %v2026
    %v2237 = vpack.c.b16 %v2029, %v2028
    %v2238 = vpack.c.b16 %v2031, %v2030
    %v2239 = vpack.c.b16 %v2033, %v2032
    %v2240 = vpack.c.b16 %v2035, %v2034
    %v2241 = vpack.c.b16 %v2037, %v2036
    %v2242 = vpack.c.b16 %v2039, %v2038
    %v2243 = vpack.c.b16 %v2041, %v2040
    %v2244 = vpack.c.b16 %v2043, %v2042
    %v2245 = vpack.c.b16 %v2045, %v2044
    %v2246 = vpack.c.b16 %v2047, %v2046
    %v2247 = vpack.c.b16 %v2049, %v2048
    %v2248 = vpack.c.b16 %v2051, %v2050
    %v2249 = vpack.c.b16 %v2053, %v2052
    %v2250 = vpack.c.b16 %v2055, %v2054
    %v2251 = vpack.c.b16 %v2057, %v2056
    %v2252 = vpack.c.b16 %v2059, %v2058
    %v2253 = vpack.c.b16 %v2061, %v2060
    %v2254 = vpack.c.b16 %v2063, %v2062
    %v2255 = vpack.c.b16 %v2065, %v2064
    %v2256 = vpack.c.b16 %v2067, %v2066
    %v2257 = vpack.c.b16 %v2069, %v2068
    %v2258 = vpack.c.b16 %v2071, %v2070
    %v2259 = vpack.c.b16 %v2073, %v2072
    %v2260 = vpack.c.b16 %v2075, %v2074
    %v2261 = vpack.c.b16 %v2077, %v2076
    %v2262 = vpack.c.b16 %v2079, %v2078
    %v2263 = vpack.c.b16 %v2081, %v2080
    %v2264 = vpack.c.b16 %v2083, %v2082
    %v2265 = vpack.c.b16 %v2085, %v2084
    %v2266 = vpack.c.b16 %v2087, %v2086
    %v2267 = vpack.c.b16 %v2089, %v2088
    %v2268 = vpack.c.b16 %v2091, %v2090
    %v2269 = vpack.c.b16 %v2093, %v2092
    %v2270 = vpack.c.b16 %v2095, %v2094
    %v2271 = vpack.c.b16 %v2097, %v2096
    %v2272 = vpack.c.b16 %v2099, %v2098
    %v2273 = vpack.c.b16 %v2101, %v2100
    %v2274 = vpack.c.b16 %v2103, %v2102
    %v2275 = vpack.c.b16 %v2105, %v2104
    %v2276 = vpack.c.b16 %v2107, %v2106
    %v2277 = vpack.c.b16 %v2109, %v2108
    %v2278 = vpack.c.b16 %v2111, %v2110
    %v2279 = vpack.c.b16 %v2113, %v2112
    %v2280 = vpack.c.b16 %v2115, %v2114
    %v2281 = vpack.c.b16 %v2117, %v2116
    %v2282 = vpack.c.b16 %v2119, %v2118
    %v2283 = vpack.c.b16 %v2121, %v2120
    %v2284 = vpack.c.b16 %v2123, %v2122
    %v2285 = vpack.c.b16 %v2125, %v2124
    %v2286 = vpack.c.b16 %v2127, %v2126
    %v2287 = vpack.c.b16 %v2129, %v2128
    %v2288 = vpack.c.b16 %v2131, %v2130
    %v2289 = vpack.c.b16 %v2133, %v2132
    %v2290 = vpack.c.b16 %v2135, %v2134
    %v2291 = vpack.c.b16 %v2137, %v2136
    %v2292 = vpack.c.b16 %v2139, %v2138
    %v2293 = vpack.c.b16 %v2141, %v2140
    %v2294 = vpack.c.b16 %v2143, %v2142
    %v2295 = vpack.c.b16 %v2145, %v2144
    %v2296 = vpack.c.b16 %v2147, %v2146
    %v2297 = vpack.c.b16 %v2149, %v2148
    %v2298 = vpack.c.b16 %v2151, %v2150
    %v2299 = vpack.c.b16 %v2153, %v2152
    %v2300 = vpack.c.b16 %v2155, %v2154
    %v2301 = vpack.c.b16 %v2157, %v2156
    %v2302 = vpack.c.b16 %v2159, %v2158
    %v2303 = vpack.c.b16 %v2161, %v2160
    %v2304 = vpack.c.b16 %v2163, %v2162
    %v2305 = vpack.c.b16 %v2165, %v2164
    %v2306 = vpack.c.b16 %v2167, %v2166
    %v2307 = vpack.c.b16 %v2169, %v2168
    %v2308 = vpack.c.b16 %v2171, %v2170
    %v2309 = vpack.c.b16 %v2173, %v2172
    %v2310 = vpack.c.b16 %v2175, %v2174
    %v2311 = vpack.c.b16 %v2177, %v2176
    %v2312 = vpack.c.b16 %v2179, %v2178
    %v2313 = vpack.c.b16 %v2181, %v2180
    %v2314 = vpack.c.b16 %v2183, %v2182
    %v2315 = vpack.c.b16 %v2185, %v2184
    %v2316 = vpack.c.b16 %v2187, %v2186
    %v2317 = vpack.c.b16 %v2189, %v2188
    %2446 = vmatprep.subr.bf16.mxu0 0
    %2447 = vmatpush1.bf16.msra.mxu0 %v2190
    %2448 = vmatprep.subr.bf16.mxu0 0
    %2449 = vmatpush1.bf16.msra.mxu0 %v2191
    %2450 = vmatprep.subr.bf16.mxu0 0
    %2451 = vmatpush1.bf16.msra.mxu0 %v2192
    %2452 = vmatprep.subr.bf16.mxu0 0
    %2453 = vmatpush1.bf16.msra.mxu0 %v2193
    %2454 = vmatprep.subr.bf16.mxu0 0
    %2455 = vmatpush1.bf16.msra.mxu0 %v2194
    %2456 = vmatprep.subr.bf16.mxu0 0
    %2457 = vmatpush1.bf16.msra.mxu0 %v2195
    %2458 = vmatprep.subr.bf16.mxu0 0
    %2459 = vmatpush1.bf16.msra.mxu0 %v2196
    %2460 = vmatprep.subr.bf16.mxu0 0
    %2461 = vmatpush1.bf16.msra.mxu0 %v2197
    %2462 = vmatprep.subr.bf16.mxu0 0
    %2463 = vmatpush1.bf16.msra.mxu0 %v2198
    %2464 = vmatprep.subr.bf16.mxu0 0
    %2465 = vmatpush1.bf16.msra.mxu0 %v2199
    %2466 = vmatprep.subr.bf16.mxu0 0
    %2467 = vmatpush1.bf16.msra.mxu0 %v2200
    %2468 = vmatprep.subr.bf16.mxu0 0
    %2469 = vmatpush1.bf16.msra.mxu0 %v2201
    %2470 = vmatprep.subr.bf16.mxu0 0
    %2471 = vmatpush1.bf16.msra.mxu0 %v2202
    %2472 = vmatprep.subr.bf16.mxu0 0
    %2473 = vmatpush1.bf16.msra.mxu0 %v2203
    %2474 = vmatprep.subr.bf16.mxu0 0
    %2475 = vmatpush1.bf16.msra.mxu0 %v2204
    %2476 = vmatprep.subr.bf16.mxu0 0
    %2477 = vmatpush1.bf16.msra.mxu0 %v2205
    %2478 = vmatprep.mubr.bf16.mxu0 %v1403
    %2479 = vmatmul.mubr.bf16.gmra.mrb[0].mxu0 %v1402
    %v2480 = vpop.f32.mrb[0].mxu0
    %v2481 = vadd.f32 %v1677, %v2480
    %v2482 = vpop.f32.mrb[0].mxu0
    %v2483 = vpop.f32.mrb[0].mxu0
    %v2484 = vadd.f32 %v1677, %v2483
    %v2485 = vpop.f32.mrb[0].mxu0
    %2486 = vdwg.mxu0
    %2487 = vmatprep.subr.bf16.mxu0 0
    %2488 = vmatpush1.bf16.msra.mxu0 %v2206
    %2489 = vmatprep.subr.bf16.mxu0 0
    %2490 = vmatpush1.bf16.msra.mxu0 %v2207
    %2491 = vmatprep.subr.bf16.mxu0 0
    %2492 = vmatpush1.bf16.msra.mxu0 %v2208
    %2493 = vmatprep.subr.bf16.mxu0 0
    %2494 = vmatpush1.bf16.msra.mxu0 %v2209
    %2495 = vmatprep.subr.bf16.mxu0 0
    %2496 = vmatpush1.bf16.msra.mxu0 %v2210
    %2497 = vmatprep.subr.bf16.mxu0 0
    %2498 = vmatpush1.bf16.msra.mxu0 %v2211
    %2499 = vmatprep.subr.bf16.mxu0 0
    %2500 = vmatpush1.bf16.msra.mxu0 %v2212
    %2501 = vmatprep.subr.bf16.mxu0 0
    %2502 = vmatpush1.bf16.msra.mxu0 %v2213
    %2503 = vmatprep.subr.bf16.mxu0 0
    %2504 = vmatpush1.bf16.msra.mxu0 %v2214
    %2505 = vmatprep.subr.bf16.mxu0 0
    %2506 = vmatpush1.bf16.msra.mxu0 %v2215
    %2507 = vmatprep.subr.bf16.mxu0 0
    %2508 = vmatpush1.bf16.msra.mxu0 %v2216
    %2509 = vmatprep.subr.bf16.mxu0 0
    %2510 = vmatpush1.bf16.msra.mxu0 %v2217
    %2511 = vmatprep.subr.bf16.mxu0 0
    %2512 = vmatpush1.bf16.msra.mxu0 %v2218
    %2513 = vmatprep.subr.bf16.mxu0 0
    %2514 = vmatpush1.bf16.msra.mxu0 %v2219
    %2515 = vmatprep.subr.bf16.mxu0 0
    %2516 = vmatpush1.bf16.msra.mxu0 %v2220
    %2517 = vmatprep.subr.bf16.mxu0 0
    %2518 = vmatpush1.bf16.msra.mxu0 %v2221
    %2519 = vmatprep.mubr.bf16.mxu0 %v1405
    %2520 = vmatmul.mubr.bf16.gmra.mrb[0].mxu0 %v1404
    %v2521 = vpop.f32.mrb[0].mxu0
    %v2522 = vadd.f32 %v2481, %v2521
    %v2523 = vpop.f32.mrb[0].mxu0
    %v2524 = vpop.f32.mrb[0].mxu0
    %v2525 = vadd.f32 %v2484, %v2524
    %v2526 = vpop.f32.mrb[0].mxu0
    %2527 = vdwg.mxu0
    %2528 = vmatprep.subr.bf16.mxu0 0
    %2529 = vmatpush1.bf16.msra.mxu0 %v2222
    %2530 = vmatprep.subr.bf16.mxu0 0
    %2531 = vmatpush1.bf16.msra.mxu0 %v2223
    %2532 = vmatprep.subr.bf16.mxu0 0
    %2533 = vmatpush1.bf16.msra.mxu0 %v2224
    %2534 = vmatprep.subr.bf16.mxu0 0
    %2535 = vmatpush1.bf16.msra.mxu0 %v2225
    %2536 = vmatprep.subr.bf16.mxu0 0
    %2537 = vmatpush1.bf16.msra.mxu0 %v2226
    %2538 = vmatprep.subr.bf16.mxu0 0
    %2539 = vmatpush1.bf16.msra.mxu0 %v2227
    %2540 = vmatprep.subr.bf16.mxu0 0
    %2541 = vmatpush1.bf16.msra.mxu0 %v2228
    %2542 = vmatprep.subr.bf16.mxu0 0
    %2543 = vmatpush1.bf16.msra.mxu0 %v2229
    %2544 = vmatprep.subr.bf16.mxu0 0
    %2545 = vmatpush1.bf16.msra.mxu0 %v2230
    %2546 = vmatprep.subr.bf16.mxu0 0
    %2547 = vmatpush1.bf16.msra.mxu0 %v2231
    %2548 = vmatprep.subr.bf16.mxu0 0
    %2549 = vmatpush1.bf16.msra.mxu0 %v2232
    %2550 = vmatprep.subr.bf16.mxu0 0
    %2551 = vmatpush1.bf16.msra.mxu0 %v2233
    %2552 = vmatprep.subr.bf16.mxu0 0
    %2553 = vmatpush1.bf16.msra.mxu0 %v2234
    %2554 = vmatprep.subr.bf16.mxu0 0
    %2555 = vmatpush1.bf16.msra.mxu0 %v2235
    %2556 = vmatprep.subr.bf16.mxu0 0
    %2557 = vmatpush1.bf16.msra.mxu0 %v2236
    %2558 = vmatprep.subr.bf16.mxu0 0
    %2559 = vmatpush1.bf16.msra.mxu0 %v2237
    %2560 = vmatprep.mubr.bf16.mxu0 %v1407
    %2561 = vmatmul.mubr.bf16.gmra.mrb[0].mxu0 %v1406
    %v2562 = vpop.f32.mrb[0].mxu0
    %v2563 = vadd.f32 %v2522, %v2562
    %v2564 = vpop.f32.mrb[0].mxu0
    %v2565 = vpop.f32.mrb[0].mxu0
    %v2566 = vadd.f32 %v2525, %v2565
    %v2567 = vpop.f32.mrb[0].mxu0
    %2568 = vdwg.mxu0
    %2569 = vmatprep.subr.bf16.mxu0 0
    %2570 = vmatpush1.bf16.msra.mxu0 %v2238
    %2571 = vmatprep.subr.bf16.mxu0 0
    %2572 = vmatpush1.bf16.msra.mxu0 %v2239
    %2573 = vmatprep.subr.bf16.mxu0 0
    %2574 = vmatpush1.bf16.msra.mxu0 %v2240
    %2575 = vmatprep.subr.bf16.mxu0 0
    %2576 = vmatpush1.bf16.msra.mxu0 %v2241
    %2577 = vmatprep.subr.bf16.mxu0 0
    %2578 = vmatpush1.bf16.msra.mxu0 %v2242
    %2579 = vmatprep.subr.bf16.mxu0 0
    %2580 = vmatpush1.bf16.msra.mxu0 %v2243
    %2581 = vmatprep.subr.bf16.mxu0 0
    %2582 = vmatpush1.bf16.msra.mxu0 %v2244
    %2583 = vmatprep.subr.bf16.mxu0 0
    %2584 = vmatpush1.bf16.msra.mxu0 %v2245
    %2585 = vmatprep.subr.bf16.mxu0 0
    %2586 = vmatpush1.bf16.msra.mxu0 %v2246
    %2587 = vmatprep.subr.bf16.mxu0 0
    %2588 = vmatpush1.bf16.msra.mxu0 %v2247
    %2589 = vmatprep.subr.bf16.mxu0 0
    %2590 = vmatpush1.bf16.msra.mxu0 %v2248
    %2591 = vmatprep.subr.bf16.mxu0 0
    %2592 = vmatpush1.bf16.msra.mxu0 %v2249
    %2593 = vmatprep.subr.bf16.mxu0 0
    %2594 = vmatpush1.bf16.msra.mxu0 %v2250
    %2595 = vmatprep.subr.bf16.mxu0 0
    %2596 = vmatpush1.bf16.msra.mxu0 %v2251
    %2597 = vmatprep.subr.bf16.mxu0 0
    %2598 = vmatpush1.bf16.msra.mxu0 %v2252
    %2599 = vmatprep.subr.bf16.mxu0 0
    %2600 = vmatpush1.bf16.msra.mxu0 %v2253
    %2601 = vmatprep.mubr.bf16.mxu0 %v1409
    %2602 = vmatmul.mubr.bf16.gmra.mrb[0].mxu0 %v1408
    %v2603 = vpop.f32.mrb[0].mxu0
    %v2604 = vadd.f32 %v2563, %v2603
    %v2605 = vpop.f32.mrb[0].mxu0
    %v2606 = vpop.f32.mrb[0].mxu0
    %v2607 = vadd.f32 %v2566, %v2606
    %v2608 = vpop.f32.mrb[0].mxu0
    %2609 = vdwg.mxu0
    %2610 = vmatprep.subr.bf16.mxu0 0
    %2611 = vmatpush1.bf16.msra.mxu0 %v2254
    %2612 = vmatprep.subr.bf16.mxu0 0
    %2613 = vmatpush1.bf16.msra.mxu0 %v2255
    %2614 = vmatprep.subr.bf16.mxu0 0
    %2615 = vmatpush1.bf16.msra.mxu0 %v2256
    %2616 = vmatprep.subr.bf16.mxu0 0
    %2617 = vmatpush1.bf16.msra.mxu0 %v2257
    %2618 = vmatprep.subr.bf16.mxu0 0
    %2619 = vmatpush1.bf16.msra.mxu0 %v2258
    %2620 = vmatprep.subr.bf16.mxu0 0
    %2621 = vmatpush1.bf16.msra.mxu0 %v2259
    %2622 = vmatprep.subr.bf16.mxu0 0
    %2623 = vmatpush1.bf16.msra.mxu0 %v2260
    %2624 = vmatprep.subr.bf16.mxu0 0
    %2625 = vmatpush1.bf16.msra.mxu0 %v2261
    %2626 = vmatprep.subr.bf16.mxu0 0
    %2627 = vmatpush1.bf16.msra.mxu0 %v2262
    %2628 = vmatprep.subr.bf16.mxu0 0
    %2629 = vmatpush1.bf16.msra.mxu0 %v2263
    %2630 = vmatprep.subr.bf16.mxu0 0
    %2631 = vmatpush1.bf16.msra.mxu0 %v2264
    %2632 = vmatprep.subr.bf16.mxu0 0
    %2633 = vmatpush1.bf16.msra.mxu0 %v2265
    %2634 = vmatprep.subr.bf16.mxu0 0
    %2635 = vmatpush1.bf16.msra.mxu0 %v2266
    %2636 = vmatprep.subr.bf16.mxu0 0
    %2637 = vmatpush1.bf16.msra.mxu0 %v2267
    %2638 = vmatprep.subr.bf16.mxu0 0
    %2639 = vmatpush1.bf16.msra.mxu0 %v2268
    %2640 = vmatprep.subr.bf16.mxu0 0
    %2641 = vmatpush1.bf16.msra.mxu0 %v2269
    %2642 = vmatprep.mubr.bf16.mxu0 %v1411
    %2643 = vmatmul.mubr.bf16.gmra.mrb[0].mxu0 %v1410
    %v2644 = vpop.f32.mrb[0].mxu0
    %v2645 = vadd.f32 %v2604, %v2644
    %v2646 = vpop.f32.mrb[0].mxu0
    %v2647 = vpop.f32.mrb[0].mxu0
    %v2648 = vadd.f32 %v2607, %v2647
    %v2649 = vpop.f32.mrb[0].mxu0
    %2650 = vdwg.mxu0
    %2651 = vmatprep.subr.bf16.mxu0 0
    %2652 = vmatpush1.bf16.msra.mxu0 %v2270
    %2653 = vmatprep.subr.bf16.mxu0 0
    %2654 = vmatpush1.bf16.msra.mxu0 %v2271
    %2655 = vmatprep.subr.bf16.mxu0 0
    %2656 = vmatpush1.bf16.msra.mxu0 %v2272
    %2657 = vmatprep.subr.bf16.mxu0 0
    %2658 = vmatpush1.bf16.msra.mxu0 %v2273
    %2659 = vmatprep.subr.bf16.mxu0 0
    %2660 = vmatpush1.bf16.msra.mxu0 %v2274
    %2661 = vmatprep.subr.bf16.mxu0 0
    %2662 = vmatpush1.bf16.msra.mxu0 %v2275
    %2663 = vmatprep.subr.bf16.mxu0 0
    %2664 = vmatpush1.bf16.msra.mxu0 %v2276
    %2665 = vmatprep.subr.bf16.mxu0 0
    %2666 = vmatpush1.bf16.msra.mxu0 %v2277
    %2667 = vmatprep.subr.bf16.mxu0 0
    %2668 = vmatpush1.bf16.msra.mxu0 %v2278
    %2669 = vmatprep.subr.bf16.mxu0 0
    %2670 = vmatpush1.bf16.msra.mxu0 %v2279
    %2671 = vmatprep.subr.bf16.mxu0 0
    %2672 = vmatpush1.bf16.msra.mxu0 %v2280
    %2673 = vmatprep.subr.bf16.mxu0 0
    %2674 = vmatpush1.bf16.msra.mxu0 %v2281
    %2675 = vmatprep.subr.bf16.mxu0 0
    %2676 = vmatpush1.bf16.msra.mxu0 %v2282
    %2677 = vmatprep.subr.bf16.mxu0 0
    %2678 = vmatpush1.bf16.msra.mxu0 %v2283
    %2679 = vmatprep.subr.bf16.mxu0 0
    %2680 = vmatpush1.bf16.msra.mxu0 %v2284
    %2681 = vmatprep.subr.bf16.mxu0 0
    %2682 = vmatpush1.bf16.msra.mxu0 %v2285
    %2683 = vmatprep.mubr.bf16.mxu0 %v1413
    %2684 = vmatmul.mubr.bf16.gmra.mrb[0].mxu0 %v1412
    %v2685 = vpop.f32.mrb[0].mxu0
    %v2686 = vadd.f32 %v2645, %v2685
    %v2687 = vpop.f32.mrb[0].mxu0
    %v2688 = vpop.f32.mrb[0].mxu0
    %v2689 = vadd.f32 %v2648, %v2688
    %v2690 = vpop.f32.mrb[0].mxu0
    %2691 = vdwg.mxu0
    %2692 = vmatprep.subr.bf16.mxu0 0
    %2693 = vmatpush1.bf16.msra.mxu0 %v2286
    %2694 = vmatprep.subr.bf16.mxu0 0
    %2695 = vmatpush1.bf16.msra.mxu0 %v2287
    %2696 = vmatprep.subr.bf16.mxu0 0
    %2697 = vmatpush1.bf16.msra.mxu0 %v2288
    %2698 = vmatprep.subr.bf16.mxu0 0
    %2699 = vmatpush1.bf16.msra.mxu0 %v2289
    %2700 = vmatprep.subr.bf16.mxu0 0
    %2701 = vmatpush1.bf16.msra.mxu0 %v2290
    %2702 = vmatprep.subr.bf16.mxu0 0
    %2703 = vmatpush1.bf16.msra.mxu0 %v2291
    %2704 = vmatprep.subr.bf16.mxu0 0
    %2705 = vmatpush1.bf16.msra.mxu0 %v2292
    %2706 = vmatprep.subr.bf16.mxu0 0
    %2707 = vmatpush1.bf16.msra.mxu0 %v2293
    %2708 = vmatprep.subr.bf16.mxu0 0
    %2709 = vmatpush1.bf16.msra.mxu0 %v2294
    %2710 = vmatprep.subr.bf16.mxu0 0
    %2711 = vmatpush1.bf16.msra.mxu0 %v2295
    %2712 = vmatprep.subr.bf16.mxu0 0
    %2713 = vmatpush1.bf16.msra.mxu0 %v2296
    %2714 = vmatprep.subr.bf16.mxu0 0
    %2715 = vmatpush1.bf16.msra.mxu0 %v2297
    %2716 = vmatprep.subr.bf16.mxu0 0
    %2717 = vmatpush1.bf16.msra.mxu0 %v2298
    %2718 = vmatprep.subr.bf16.mxu0 0
    %2719 = vmatpush1.bf16.msra.mxu0 %v2299
    %2720 = vmatprep.subr.bf16.mxu0 0
    %2721 = vmatpush1.bf16.msra.mxu0 %v2300
    %2722 = vmatprep.subr.bf16.mxu0 0
    %2723 = vmatpush1.bf16.msra.mxu0 %v2301
    %2724 = vmatprep.mubr.bf16.mxu0 %v1415
    %2725 = vmatmul.mubr.bf16.gmra.mrb[0].mxu0 %v1414
    %v2726 = vpop.f32.mrb[0].mxu0
    %v2727 = vadd.f32 %v2686, %v2726
    %v2728 = vpop.f32.mrb[0].mxu0
    %v2729 = vpop.f32.mrb[0].mxu0
    %v2730 = vadd.f32 %v2689, %v2729
    %v2731 = vpop.f32.mrb[0].mxu0
    %2732 = vdwg.mxu0
    %2733 = vmatprep.subr.bf16.mxu0 0
    %2734 = vmatpush1.bf16.msra.mxu0 %v2302
    %2735 = vmatprep.subr.bf16.mxu0 0
    %2736 = vmatpush1.bf16.msra.mxu0 %v2303
    %2737 = vmatprep.subr.bf16.mxu0 0
    %2738 = vmatpush1.bf16.msra.mxu0 %v2304
    %2739 = vmatprep.subr.bf16.mxu0 0
    %2740 = vmatpush1.bf16.msra.mxu0 %v2305
    %2741 = vmatprep.subr.bf16.mxu0 0
    %2742 = vmatpush1.bf16.msra.mxu0 %v2306
    %2743 = vmatprep.subr.bf16.mxu0 0
    %2744 = vmatpush1.bf16.msra.mxu0 %v2307
    %2745 = vmatprep.subr.bf16.mxu0 0
    %2746 = vmatpush1.bf16.msra.mxu0 %v2308
    %2747 = vmatprep.subr.bf16.mxu0 0
    %2748 = vmatpush1.bf16.msra.mxu0 %v2309
    %2749 = vmatprep.subr.bf16.mxu0 0
    %2750 = vmatpush1.bf16.msra.mxu0 %v2310
    %2751 = vmatprep.subr.bf16.mxu0 0
    %2752 = vmatpush1.bf16.msra.mxu0 %v2311
    %2753 = vmatprep.subr.bf16.mxu0 0
    %2754 = vmatpush1.bf16.msra.mxu0 %v2312
    %2755 = vmatprep.subr.bf16.mxu0 0
    %2756 = vmatpush1.bf16.msra.mxu0 %v2313
    %2757 = vmatprep.subr.bf16.mxu0 0
    %2758 = vmatpush1.bf16.msra.mxu0 %v2314
    %2759 = vmatprep.subr.bf16.mxu0 0
    %2760 = vmatpush1.bf16.msra.mxu0 %v2315
    %2761 = vmatprep.subr.bf16.mxu0 0
    %2762 = vmatpush1.bf16.msra.mxu0 %v2316
    %2763 = vmatprep.subr.bf16.mxu0 0
    %2764 = vmatpush1.bf16.msra.mxu0 %v2317
    %2765 = vmatprep.mubr.bf16.mxu0 %v1417
    %2766 = vmatmul.mubr.bf16.gmra.mrb[0].mxu0 %v1416
    %v2767 = vpop.f32.mrb[0].mxu0
    %v2768 = vadd.f32 %v2727, %v2767
    %v2769 = vpop.f32.mrb[0].mxu0
    %v2770 = vpop.f32.mrb[0].mxu0
    %v2771 = vadd.f32 %v2730, %v2770
    %v2772 = vpop.f32.mrb[0].mxu0
    %2773 = vdwg.mxu0
    %v2774 = vadd.f32 %v744, %v2768
    %v2775 = vadd.f32 %v745, %v2771
    %v2776 = vsel %vm78, %v2774, 0.0
    %2777 = vadd.xlane.f32.xlu0 %v2776
    %v2778 = vpop.xlane.xlu0 %2777
    %v2779 = vsel %vm78, %v2775, 0.0
    %2780 = vadd.xlane.f32.xlu0 %v2779
    %v2781 = vpop.xlane.xlu0 %2780
    %v2782 = vmul.f32 %v2778, %v713
    %v2783 = vmul.f32 %v2781, %v713
    %v2784 = vsub.f32 %v2774, %v2782
    %v2785 = vsub.f32 %v2775, %v2783
    %v2786 = vmul.f32 %v2784, %v2784
    %v2787 = vmul.f32 %v2785, %v2785
    %v2788 = vsel %vm78, %v2786, 0.0
    %2789 = vadd.xlane.f32.xlu0 %v2788
    %v2790 = vpop.xlane.xlu0 %2789
    %v2791 = vsel %vm78, %v2787, 0.0
    %2792 = vadd.xlane.f32.xlu0 %v2791
    %v2793 = vpop.xlane.xlu0 %2792
    %v2794 = vmul.f32 %v2790, %v713
    %v2795 = vmul.f32 %v2793, %v713
    %v2796 = vadd.f32 %v2794, 1e-05
    %v2797 = vadd.f32 %v2795, 1e-05
    %v2798 = vrsqrt.pop %v2796
    %v2799 = vrsqrt.pop %v2797
    %v2800 = vmul.f32 %v2784, %v2798
    %v2801 = vmul.f32 %v2785, %v2799
    %v2802 = vlaneseq
    %v2803 = vshrl.u32 %v2802, 7
    %v2804 = vsub.s32 7, %v2803
    %v2805 = vrot.slane %v59, %v2804
    %v2806 = vmul.f32 %v2800, %v2805
    %v2807 = vmul.f32 %v2801, %v2805
    %v2808 = vlaneseq
    %v2809 = vshrl.u32 %v2808, 7
    %v2810 = vsub.s32 0, %v2809
    %v2811 = vrot.slane %v60, %v2810
    %v2812 = vadd.f32 %v2806, %v2811
    %v2813 = vadd.f32 %v2807, %v2811
    %s2814 = scalar_lea.vmem %s3, 48
    %v2815 = vld [vmem:[%s2814] sm:$0xf]
    %v2816 = vld [vmem:[%s2814 + $0x4] sm:$0xf]
    %v2817 = vld [vmem:[%s2814 + $0x8] sm:$0xf]
    %v2818 = vld [vmem:[%s2814 + $0xc] sm:$0xf]
    %v2819 = vld [vmem:[%s2814 + $0x10] sm:$0xf]
    %v2820 = vld [vmem:[%s2814 + $0x14] sm:$0xf]
    %v2821 = vld [vmem:[%s2814 + $0x18] sm:$0xf]
    %v2822 = vld [vmem:[%s2814 + $0x1c] sm:$0xf]
    %v2823 = vld [vmem:[%s2814 + $0x20] sm:$0xf]
    %v2824 = vld [vmem:[%s2814 + $0x24] sm:$0xf]
    %v2825 = vld [vmem:[%s2814 + $0x28] sm:$0xf]
    %v2826 = vld [vmem:[%s2814 + $0x2c] sm:$0xf]
    %s2827 = scalar_lea.vmem %s8, 16
    %v2828 = vld [vmem:[%s2827] sm:$0xff]
    %v2829 = vld [vmem:[%s2827 + $0x8] sm:$0x1]
    %v2830 = vpack.c.bf16 %v2813, %v2812
    %v2831 = vlaneseq
    %v2832 = vshrl.u32 %v2831, 7
    %v2833 = vsub.s32 0, %v2832
    %v2834 = vrot.slane %v2828, %v2833
    %v2839 = vunpack.c.l.b16 %v2815
    %v2840 = vunpack.c.l.b16 %v2816
    %v2841 = vunpack.c.l.b16 %v2817
    %v2842 = vunpack.c.l.b16 %v2818
    %v2843 = vpack.c.b16 %v2840, %v2839
    %v2844 = vpack.c.b16 %v2842, %v2841
    %v2848 = vsel %vm78, %v2830, 0
    %2850 = vmatprep.subr.bf16.mxu0 0
    %2851 = vmatpush1.bf16.msra.mxu0 %v2843
    %2852 = vmatprep.subr.bf16.mxu0 0
    %2853 = vmatpush1.bf16.msra.mxu0 %v2844
    %2854 = vmatprep.subr.bf16.mxu0 0
    %2855 = vmatpush1.bf16.msra.mxu0 0
    %2856 = vmatprep.subr.bf16.mxu0 0
    %2857 = vmatpush1.bf16.msra.mxu0 0
    %2858 = vmatprep.subr.bf16.mxu0 0
    %2859 = vmatpush1.bf16.msra.mxu0 0
    %2860 = vmatprep.subr.bf16.mxu0 0
    %2861 = vmatpush1.bf16.msra.mxu0 0
    %2862 = vmatprep.subr.bf16.mxu0 0
    %2863 = vmatpush1.bf16.msra.mxu0 0
    %2864 = vmatprep.subr.bf16.mxu0 0
    %2865 = vmatpush1.bf16.msra.mxu0 0
    %2866 = vmatprep.subr.bf16.mxu0 0
    %2867 = vmatpush1.bf16.msra.mxu0 0
    %2868 = vmatprep.subr.bf16.mxu0 0
    %2869 = vmatpush1.bf16.msra.mxu0 0
    %2870 = vmatprep.subr.bf16.mxu0 0
    %2871 = vmatpush1.bf16.msra.mxu0 0
    %2872 = vmatprep.subr.bf16.mxu0 0
    %2873 = vmatpush1.bf16.msra.mxu0 0
    %2874 = vmatprep.subr.bf16.mxu0 0
    %2875 = vmatpush1.bf16.msra.mxu0 0
    %2876 = vmatprep.subr.bf16.mxu0 0
    %2877 = vmatpush1.bf16.msra.mxu0 0
    %2878 = vmatprep.subr.bf16.mxu0 0
    %2879 = vmatpush1.bf16.msra.mxu0 0
    %2880 = vmatprep.subr.bf16.mxu0 0
    %2881 = vmatpush1.bf16.msra.mxu0 0
    %2882 = vmatprep.mubr.bf16.mxu0 0
    %2883 = vmatmul.mubr.bf16.gmra.mrb[0].mxu0 %v2848
    %v2884 = vpop.f32.mrb[0].mxu0
    %v2885 = vadd.f32 %v2834, %v2884
    %v2886 = vpop.f32.mrb[0].mxu0
    %v2887 = vpop.f32.mrb[0].mxu0
    %v2888 = vadd.f32 %v2834, %v2887
    %v2889 = vpop.f32.mrb[0].mxu0
    %2890 = vdwg.mxu0
    %v2891 = vlaneseq
    %v2892 = vshrl.u32 %v2891, 7
    %v2893 = vsub.s32 1, %v2892
    %v2894 = vrot.slane %v2828, %v2893
    %v2899 = vunpack.c.l.b16 %v2819
    %v2900 = vunpack.c.l.b16 %v2820
    %v2901 = vunpack.c.l.b16 %v2821
    %v2902 = vunpack.c.l.b16 %v2822
    %v2903 = vpack.c.b16 %v2900, %v2899
    %v2904 = vpack.c.b16 %v2902, %v2901
    %2907 = vmatprep.subr.bf16.mxu0 0
    %2908 = vmatpush1.bf16.msra.mxu0 %v2903
    %2909 = vmatprep.subr.bf16.mxu0 0
    %2910 = vmatpush1.bf16.msra.mxu0 %v2904
    %2911 = vmatprep.subr.bf16.mxu0 0
    %2912 = vmatpush1.bf16.msra.mxu0 0
    %2913 = vmatprep.subr.bf16.mxu0 0
    %2914 = vmatpush1.bf16.msra.mxu0 0
    %2915 = vmatprep.subr.bf16.mxu0 0
    %2916 = vmatpush1.bf16.msra.mxu0 0
    %2917 = vmatprep.subr.bf16.mxu0 0
    %2918 = vmatpush1.bf16.msra.mxu0 0
    %2919 = vmatprep.subr.bf16.mxu0 0
    %2920 = vmatpush1.bf16.msra.mxu0 0
    %2921 = vmatprep.subr.bf16.mxu0 0
    %2922 = vmatpush1.bf16.msra.mxu0 0
    %2923 = vmatprep.subr.bf16.mxu0 0
    %2924 = vmatpush1.bf16.msra.mxu0 0
    %2925 = vmatprep.subr.bf16.mxu0 0
    %2926 = vmatpush1.bf16.msra.mxu0 0
    %2927 = vmatprep.subr.bf16.mxu0 0
    %2928 = vmatpush1.bf16.msra.mxu0 0
    %2929 = vmatprep.subr.bf16.mxu0 0
    %2930 = vmatpush1.bf16.msra.mxu0 0
    %2931 = vmatprep.subr.bf16.mxu0 0
    %2932 = vmatpush1.bf16.msra.mxu0 0
    %2933 = vmatprep.subr.bf16.mxu0 0
    %2934 = vmatpush1.bf16.msra.mxu0 0
    %2935 = vmatprep.subr.bf16.mxu0 0
    %2936 = vmatpush1.bf16.msra.mxu0 0
    %2937 = vmatprep.subr.bf16.mxu0 0
    %2938 = vmatpush1.bf16.msra.mxu0 0
    %2939 = vmatprep.mubr.bf16.mxu0 0
    %2940 = vmatmul.mubr.bf16.gmra.mrb[0].mxu0 %v2848
    %v2941 = vpop.f32.mrb[0].mxu0
    %v2942 = vadd.f32 %v2894, %v2941
    %v2943 = vpop.f32.mrb[0].mxu0
    %v2944 = vpop.f32.mrb[0].mxu0
    %v2945 = vadd.f32 %v2894, %v2944
    %v2946 = vpop.f32.mrb[0].mxu0
    %2947 = vdwg.mxu0
    %v2948 = vlaneseq
    %v2949 = vshrl.u32 %v2948, 7
    %v2950 = vsub.s32 2, %v2949
    %v2951 = vrot.slane %v2828, %v2950
    %v2956 = vunpack.c.l.b16 %v2823
    %v2957 = vunpack.c.l.b16 %v2824
    %v2958 = vunpack.c.l.b16 %v2825
    %v2959 = vunpack.c.l.b16 %v2826
    %v2960 = vpack.c.b16 %v2957, %v2956
    %v2961 = vpack.c.b16 %v2959, %v2958
    %2964 = vmatprep.subr.bf16.mxu0 0
    %2965 = vmatpush1.bf16.msra.mxu0 %v2960
    %2966 = vmatprep.subr.bf16.mxu0 0
    %2967 = vmatpush1.bf16.msra.mxu0 %v2961
    %2968 = vmatprep.subr.bf16.mxu0 0
    %2969 = vmatpush1.bf16.msra.mxu0 0
    %2970 = vmatprep.subr.bf16.mxu0 0
    %2971 = vmatpush1.bf16.msra.mxu0 0
    %2972 = vmatprep.subr.bf16.mxu0 0
    %2973 = vmatpush1.bf16.msra.mxu0 0
    %2974 = vmatprep.subr.bf16.mxu0 0
    %2975 = vmatpush1.bf16.msra.mxu0 0
    %2976 = vmatprep.subr.bf16.mxu0 0
    %2977 = vmatpush1.bf16.msra.mxu0 0
    %2978 = vmatprep.subr.bf16.mxu0 0
    %2979 = vmatpush1.bf16.msra.mxu0 0
    %2980 = vmatprep.subr.bf16.mxu0 0
    %2981 = vmatpush1.bf16.msra.mxu0 0
    %2982 = vmatprep.subr.bf16.mxu0 0
    %2983 = vmatpush1.bf16.msra.mxu0 0
    %2984 = vmatprep.subr.bf16.mxu0 0
    %2985 = vmatpush1.bf16.msra.mxu0 0
    %2986 = vmatprep.subr.bf16.mxu0 0
    %2987 = vmatpush1.bf16.msra.mxu0 0
    %2988 = vmatprep.subr.bf16.mxu0 0
    %2989 = vmatpush1.bf16.msra.mxu0 0
    %2990 = vmatprep.subr.bf16.mxu0 0
    %2991 = vmatpush1.bf16.msra.mxu0 0
    %2992 = vmatprep.subr.bf16.mxu0 0
    %2993 = vmatpush1.bf16.msra.mxu0 0
    %2994 = vmatprep.subr.bf16.mxu0 0
    %2995 = vmatpush1.bf16.msra.mxu0 0
    %2996 = vmatprep.mubr.bf16.mxu0 0
    %2997 = vmatmul.mubr.bf16.gmra.mrb[0].mxu0 %v2848
    %v2998 = vpop.f32.mrb[0].mxu0
    %v2999 = vadd.f32 %v2951, %v2998
    %v3000 = vpop.f32.mrb[0].mxu0
    %v3001 = vpop.f32.mrb[0].mxu0
    %v3002 = vadd.f32 %v2951, %v3001
    %v3003 = vpop.f32.mrb[0].mxu0
    %3004 = vdwg.mxu0
    %v3005 = vmul.f32 %v2885, %v2942
    %v3006 = vpack.c.bf16 %v3005, %v3005
    %v3008 = vsel %vm78, %v3006, 0
    %3010 = vmatprep.subr.bf16.mxu0 0
    %3011 = vmatpush1.bf16.msra.mxu0 %v247
    %3012 = vmatprep.subr.bf16.mxu0 0
    %3013 = vmatpush1.bf16.msra.mxu0 %v248
    %3014 = vmatprep.subr.bf16.mxu0 0
    %3015 = vmatpush1.bf16.msra.mxu0 0
    %3016 = vmatprep.subr.bf16.mxu0 0
    %3017 = vmatpush1.bf16.msra.mxu0 0
    %3018 = vmatprep.subr.bf16.mxu0 0
    %3019 = vmatpush1.bf16.msra.mxu0 0
    %3020 = vmatprep.subr.bf16.mxu0 0
    %3021 = vmatpush1.bf16.msra.mxu0 0
    %3022 = vmatprep.subr.bf16.mxu0 0
    %3023 = vmatpush1.bf16.msra.mxu0 0
    %3024 = vmatprep.subr.bf16.mxu0 0
    %3025 = vmatpush1.bf16.msra.mxu0 0
    %3026 = vmatprep.subr.bf16.mxu0 0
    %3027 = vmatpush1.bf16.msra.mxu0 0
    %3028 = vmatprep.subr.bf16.mxu0 0
    %3029 = vmatpush1.bf16.msra.mxu0 0
    %3030 = vmatprep.subr.bf16.mxu0 0
    %3031 = vmatpush1.bf16.msra.mxu0 0
    %3032 = vmatprep.subr.bf16.mxu0 0
    %3033 = vmatpush1.bf16.msra.mxu0 0
    %3034 = vmatprep.subr.bf16.mxu0 0
    %3035 = vmatpush1.bf16.msra.mxu0 0
    %3036 = vmatprep.subr.bf16.mxu0 0
    %3037 = vmatpush1.bf16.msra.mxu0 0
    %3038 = vmatprep.subr.bf16.mxu0 0
    %3039 = vmatpush1.bf16.msra.mxu0 0
    %3040 = vmatprep.subr.bf16.mxu0 0
    %3041 = vmatpush1.bf16.msra.mxu0 0
    %3042 = vmatprep.mubr.bf16.mxu0 0
    %3043 = vmatmul.mubr.bf16.gmra.mrb[0].mxu0 %v3008
    %v3044 = vpop.f32.mrb[0].mxu0
    %v3045 = vadd.f32 0.0, %v3044
    %v3046 = vpop.f32.mrb[0].mxu0
    %v3047 = vpop.f32.mrb[0].mxu0
    %v3048 = vpop.f32.mrb[0].mxu0
    %3049 = vdwg.mxu0
    %v3050 = vmul.f32 %v2885, %v2945
    %v3051 = vpack.c.bf16 %v3050, %v3050
    %v3053 = vsel %vm78, %v3051, 0
    %3055 = vmatprep.subr.bf16.mxu0 0
    %3056 = vmatpush1.bf16.msra.mxu0 %v247
    %3057 = vmatprep.subr.bf16.mxu0 0
    %3058 = vmatpush1.bf16.msra.mxu0 %v248
    %3059 = vmatprep.subr.bf16.mxu0 0
    %3060 = vmatpush1.bf16.msra.mxu0 0
    %3061 = vmatprep.subr.bf16.mxu0 0
    %3062 = vmatpush1.bf16.msra.mxu0 0
    %3063 = vmatprep.subr.bf16.mxu0 0
    %3064 = vmatpush1.bf16.msra.mxu0 0
    %3065 = vmatprep.subr.bf16.mxu0 0
    %3066 = vmatpush1.bf16.msra.mxu0 0
    %3067 = vmatprep.subr.bf16.mxu0 0
    %3068 = vmatpush1.bf16.msra.mxu0 0
    %3069 = vmatprep.subr.bf16.mxu0 0
    %3070 = vmatpush1.bf16.msra.mxu0 0
    %3071 = vmatprep.subr.bf16.mxu0 0
    %3072 = vmatpush1.bf16.msra.mxu0 0
    %3073 = vmatprep.subr.bf16.mxu0 0
    %3074 = vmatpush1.bf16.msra.mxu0 0
    %3075 = vmatprep.subr.bf16.mxu0 0
    %3076 = vmatpush1.bf16.msra.mxu0 0
    %3077 = vmatprep.subr.bf16.mxu0 0
    %3078 = vmatpush1.bf16.msra.mxu0 0
    %3079 = vmatprep.subr.bf16.mxu0 0
    %3080 = vmatpush1.bf16.msra.mxu0 0
    %3081 = vmatprep.subr.bf16.mxu0 0
    %3082 = vmatpush1.bf16.msra.mxu0 0
    %3083 = vmatprep.subr.bf16.mxu0 0
    %3084 = vmatpush1.bf16.msra.mxu0 0
    %3085 = vmatprep.subr.bf16.mxu0 0
    %3086 = vmatpush1.bf16.msra.mxu0 0
    %3087 = vmatprep.mubr.bf16.mxu0 0
    %3088 = vmatmul.mubr.bf16.gmra.mrb[0].mxu0 %v3053
    %v3089 = vpop.f32.mrb[0].mxu0
    %v3090 = vadd.f32 0.0, %v3089
    %v3091 = vpop.f32.mrb[0].mxu0
    %v3092 = vpop.f32.mrb[0].mxu0
    %v3093 = vpop.f32.mrb[0].mxu0
    %3094 = vdwg.mxu0
    %v3095 = vmax.f32 %v3045, %v3090
    %v3096 = vsub.f32 %v3045, %v3095
    %v3097 = vmul.f32 %v3096, 1.442695
    %v3098 = vpow.pop %v3097
    %v3099 = vsub.f32 %v3090, %v3095
    %v3100 = vmul.f32 %v3099, 1.442695
    %v3101 = vpow.pop %v3100
    %v3102 = vadd.f32 %v3098, %v3101
    %v3103 = vrcp.pop %v3102
    %v3104 = vmul.f32 1.0, %v3103
    %v3105 = vmul.f32 %v3098, %v3104
    %v3106 = vpack.c.bf16 %v3105, %v3105
    %v3108 = vsel %vm351, %v3106, 0
    %3110 = vmatprep.subr.bf16.mxu0 0
    %3111 = vmatpush1.bf16.msra.mxu0 %v357
    %3112 = vmatprep.subr.bf16.mxu0 0
    %3113 = vmatpush1.bf16.msra.mxu0 0
    %3114 = vmatprep.subr.bf16.mxu0 0
    %3115 = vmatpush1.bf16.msra.mxu0 0
    %3116 = vmatprep.subr.bf16.mxu0 0
    %3117 = vmatpush1.bf16.msra.mxu0 0
    %3118 = vmatprep.subr.bf16.mxu0 0
    %3119 = vmatpush1.bf16.msra.mxu0 0
    %3120 = vmatprep.subr.bf16.mxu0 0
    %3121 = vmatpush1.bf16.msra.mxu0 0
    %3122 = vmatprep.subr.bf16.mxu0 0
    %3123 = vmatpush1.bf16.msra.mxu0 0
    %3124 = vmatprep.subr.bf16.mxu0 0
    %3125 = vmatpush1.bf16.msra.mxu0 0
    %3126 = vmatprep.subr.bf16.mxu0 0
    %3127 = vmatpush1.bf16.msra.mxu0 0
    %3128 = vmatprep.subr.bf16.mxu0 0
    %3129 = vmatpush1.bf16.msra.mxu0 0
    %3130 = vmatprep.subr.bf16.mxu0 0
    %3131 = vmatpush1.bf16.msra.mxu0 0
    %3132 = vmatprep.subr.bf16.mxu0 0
    %3133 = vmatpush1.bf16.msra.mxu0 0
    %3134 = vmatprep.subr.bf16.mxu0 0
    %3135 = vmatpush1.bf16.msra.mxu0 0
    %3136 = vmatprep.subr.bf16.mxu0 0
    %3137 = vmatpush1.bf16.msra.mxu0 0
    %3138 = vmatprep.subr.bf16.mxu0 0
    %3139 = vmatpush1.bf16.msra.mxu0 0
    %3140 = vmatprep.subr.bf16.mxu0 0
    %3141 = vmatpush1.bf16.msra.mxu0 0
    %3142 = vmatprep.mubr.bf16.mxu0 0
    %3143 = vmatmul.mubr.bf16.gmra.mrb[0].mxu0 %v3108
    %v3144 = vpop.f32.mrb[0].mxu0
    %v3145 = vadd.f32 0.0, %v3144
    %v3146 = vpop.f32.mrb[0].mxu0
    %v3147 = vpop.f32.mrb[0].mxu0
    %v3148 = vpop.f32.mrb[0].mxu0
    %3149 = vdwg.mxu0
    %v3150 = vmul.f32 %v3145, %v2999
    %v3151 = vmul.f32 %v3101, %v3104
    %v3152 = vpack.c.bf16 %v3151, %v3151
    %v3154 = vsel %vm351, %v3152, 0
    %3156 = vmatprep.subr.bf16.mxu0 0
    %3157 = vmatpush1.bf16.msra.mxu0 %v357
    %3158 = vmatprep.subr.bf16.mxu0 0
    %3159 = vmatpush1.bf16.msra.mxu0 0
    %3160 = vmatprep.subr.bf16.mxu0 0
    %3161 = vmatpush1.bf16.msra.mxu0 0
    %3162 = vmatprep.subr.bf16.mxu0 0
    %3163 = vmatpush1.bf16.msra.mxu0 0
    %3164 = vmatprep.subr.bf16.mxu0 0
    %3165 = vmatpush1.bf16.msra.mxu0 0
    %3166 = vmatprep.subr.bf16.mxu0 0
    %3167 = vmatpush1.bf16.msra.mxu0 0
    %3168 = vmatprep.subr.bf16.mxu0 0
    %3169 = vmatpush1.bf16.msra.mxu0 0
    %3170 = vmatprep.subr.bf16.mxu0 0
    %3171 = vmatpush1.bf16.msra.mxu0 0
    %3172 = vmatprep.subr.bf16.mxu0 0
    %3173 = vmatpush1.bf16.msra.mxu0 0
    %3174 = vmatprep.subr.bf16.mxu0 0
    %3175 = vmatpush1.bf16.msra.mxu0 0
    %3176 = vmatprep.subr.bf16.mxu0 0
    %3177 = vmatpush1.bf16.msra.mxu0 0
    %3178 = vmatprep.subr.bf16.mxu0 0
    %3179 = vmatpush1.bf16.msra.mxu0 0
    %3180 = vmatprep.subr.bf16.mxu0 0
    %3181 = vmatpush1.bf16.msra.mxu0 0
    %3182 = vmatprep.subr.bf16.mxu0 0
    %3183 = vmatpush1.bf16.msra.mxu0 0
    %3184 = vmatprep.subr.bf16.mxu0 0
    %3185 = vmatpush1.bf16.msra.mxu0 0
    %3186 = vmatprep.subr.bf16.mxu0 0
    %3187 = vmatpush1.bf16.msra.mxu0 0
    %3188 = vmatprep.mubr.bf16.mxu0 0
    %3189 = vmatmul.mubr.bf16.gmra.mrb[0].mxu0 %v3154
    %v3190 = vpop.f32.mrb[0].mxu0
    %v3191 = vadd.f32 0.0, %v3190
    %v3192 = vpop.f32.mrb[0].mxu0
    %v3193 = vpop.f32.mrb[0].mxu0
    %v3194 = vpop.f32.mrb[0].mxu0
    %3195 = vdwg.mxu0
    %v3196 = vmul.f32 %v3191, %v3002
    %v3197 = vadd.f32 %v3150, %v3196
    %v3198 = vmul.f32 %v2888, %v2942
    %v3199 = vpack.c.bf16 %v3198, %v3198
    %v3201 = vsel %vm78, %v3199, 0
    %3203 = vmatprep.subr.bf16.mxu0 0
    %3204 = vmatpush1.bf16.msra.mxu0 %v247
    %3205 = vmatprep.subr.bf16.mxu0 0
    %3206 = vmatpush1.bf16.msra.mxu0 %v248
    %3207 = vmatprep.subr.bf16.mxu0 0
    %3208 = vmatpush1.bf16.msra.mxu0 0
    %3209 = vmatprep.subr.bf16.mxu0 0
    %3210 = vmatpush1.bf16.msra.mxu0 0
    %3211 = vmatprep.subr.bf16.mxu0 0
    %3212 = vmatpush1.bf16.msra.mxu0 0
    %3213 = vmatprep.subr.bf16.mxu0 0
    %3214 = vmatpush1.bf16.msra.mxu0 0
    %3215 = vmatprep.subr.bf16.mxu0 0
    %3216 = vmatpush1.bf16.msra.mxu0 0
    %3217 = vmatprep.subr.bf16.mxu0 0
    %3218 = vmatpush1.bf16.msra.mxu0 0
    %3219 = vmatprep.subr.bf16.mxu0 0
    %3220 = vmatpush1.bf16.msra.mxu0 0
    %3221 = vmatprep.subr.bf16.mxu0 0
    %3222 = vmatpush1.bf16.msra.mxu0 0
    %3223 = vmatprep.subr.bf16.mxu0 0
    %3224 = vmatpush1.bf16.msra.mxu0 0
    %3225 = vmatprep.subr.bf16.mxu0 0
    %3226 = vmatpush1.bf16.msra.mxu0 0
    %3227 = vmatprep.subr.bf16.mxu0 0
    %3228 = vmatpush1.bf16.msra.mxu0 0
    %3229 = vmatprep.subr.bf16.mxu0 0
    %3230 = vmatpush1.bf16.msra.mxu0 0
    %3231 = vmatprep.subr.bf16.mxu0 0
    %3232 = vmatpush1.bf16.msra.mxu0 0
    %3233 = vmatprep.subr.bf16.mxu0 0
    %3234 = vmatpush1.bf16.msra.mxu0 0
    %3235 = vmatprep.mubr.bf16.mxu0 0
    %3236 = vmatmul.mubr.bf16.gmra.mrb[0].mxu0 %v3201
    %v3237 = vpop.f32.mrb[0].mxu0
    %v3238 = vadd.f32 0.0, %v3237
    %v3239 = vpop.f32.mrb[0].mxu0
    %v3240 = vpop.f32.mrb[0].mxu0
    %v3241 = vpop.f32.mrb[0].mxu0
    %3242 = vdwg.mxu0
    %v3243 = vmul.f32 %v2888, %v2945
    %v3244 = vpack.c.bf16 %v3243, %v3243
    %v3246 = vsel %vm78, %v3244, 0
    %3248 = vmatprep.subr.bf16.mxu0 0
    %3249 = vmatpush1.bf16.msra.mxu0 %v247
    %3250 = vmatprep.subr.bf16.mxu0 0
    %3251 = vmatpush1.bf16.msra.mxu0 %v248
    %3252 = vmatprep.subr.bf16.mxu0 0
    %3253 = vmatpush1.bf16.msra.mxu0 0
    %3254 = vmatprep.subr.bf16.mxu0 0
    %3255 = vmatpush1.bf16.msra.mxu0 0
    %3256 = vmatprep.subr.bf16.mxu0 0
    %3257 = vmatpush1.bf16.msra.mxu0 0
    %3258 = vmatprep.subr.bf16.mxu0 0
    %3259 = vmatpush1.bf16.msra.mxu0 0
    %3260 = vmatprep.subr.bf16.mxu0 0
    %3261 = vmatpush1.bf16.msra.mxu0 0
    %3262 = vmatprep.subr.bf16.mxu0 0
    %3263 = vmatpush1.bf16.msra.mxu0 0
    %3264 = vmatprep.subr.bf16.mxu0 0
    %3265 = vmatpush1.bf16.msra.mxu0 0
    %3266 = vmatprep.subr.bf16.mxu0 0
    %3267 = vmatpush1.bf16.msra.mxu0 0
    %3268 = vmatprep.subr.bf16.mxu0 0
    %3269 = vmatpush1.bf16.msra.mxu0 0
    %3270 = vmatprep.subr.bf16.mxu0 0
    %3271 = vmatpush1.bf16.msra.mxu0 0
    %3272 = vmatprep.subr.bf16.mxu0 0
    %3273 = vmatpush1.bf16.msra.mxu0 0
    %3274 = vmatprep.subr.bf16.mxu0 0
    %3275 = vmatpush1.bf16.msra.mxu0 0
    %3276 = vmatprep.subr.bf16.mxu0 0
    %3277 = vmatpush1.bf16.msra.mxu0 0
    %3278 = vmatprep.subr.bf16.mxu0 0
    %3279 = vmatpush1.bf16.msra.mxu0 0
    %3280 = vmatprep.mubr.bf16.mxu0 0
    %3281 = vmatmul.mubr.bf16.gmra.mrb[0].mxu0 %v3246
    %v3282 = vpop.f32.mrb[0].mxu0
    %v3283 = vadd.f32 0.0, %v3282
    %v3284 = vpop.f32.mrb[0].mxu0
    %v3285 = vpop.f32.mrb[0].mxu0
    %v3286 = vpop.f32.mrb[0].mxu0
    %3287 = vdwg.mxu0
    %v3288 = vmax.f32 %v3238, %v3283
    %v3289 = vsub.f32 %v3238, %v3288
    %v3290 = vmul.f32 %v3289, 1.442695
    %v3291 = vpow.pop %v3290
    %v3292 = vsub.f32 %v3283, %v3288
    %v3293 = vmul.f32 %v3292, 1.442695
    %v3294 = vpow.pop %v3293
    %v3295 = vadd.f32 %v3291, %v3294
    %v3296 = vrcp.pop %v3295
    %v3297 = vmul.f32 1.0, %v3296
    %v3298 = vmul.f32 %v3291, %v3297
    %v3299 = vpack.c.bf16 %v3298, %v3298
    %v3301 = vsel %vm351, %v3299, 0
    %3303 = vmatprep.subr.bf16.mxu0 0
    %3304 = vmatpush1.bf16.msra.mxu0 %v357
    %3305 = vmatprep.subr.bf16.mxu0 0
    %3306 = vmatpush1.bf16.msra.mxu0 0
    %3307 = vmatprep.subr.bf16.mxu0 0
    %3308 = vmatpush1.bf16.msra.mxu0 0
    %3309 = vmatprep.subr.bf16.mxu0 0
    %3310 = vmatpush1.bf16.msra.mxu0 0
    %3311 = vmatprep.subr.bf16.mxu0 0
    %3312 = vmatpush1.bf16.msra.mxu0 0
    %3313 = vmatprep.subr.bf16.mxu0 0
    %3314 = vmatpush1.bf16.msra.mxu0 0
    %3315 = vmatprep.subr.bf16.mxu0 0
    %3316 = vmatpush1.bf16.msra.mxu0 0
    %3317 = vmatprep.subr.bf16.mxu0 0
    %3318 = vmatpush1.bf16.msra.mxu0 0
    %3319 = vmatprep.subr.bf16.mxu0 0
    %3320 = vmatpush1.bf16.msra.mxu0 0
    %3321 = vmatprep.subr.bf16.mxu0 0
    %3322 = vmatpush1.bf16.msra.mxu0 0
    %3323 = vmatprep.subr.bf16.mxu0 0
    %3324 = vmatpush1.bf16.msra.mxu0 0
    %3325 = vmatprep.subr.bf16.mxu0 0
    %3326 = vmatpush1.bf16.msra.mxu0 0
    %3327 = vmatprep.subr.bf16.mxu0 0
    %3328 = vmatpush1.bf16.msra.mxu0 0
    %3329 = vmatprep.subr.bf16.mxu0 0
    %3330 = vmatpush1.bf16.msra.mxu0 0
    %3331 = vmatprep.subr.bf16.mxu0 0
    %3332 = vmatpush1.bf16.msra.mxu0 0
    %3333 = vmatprep.subr.bf16.mxu0 0
    %3334 = vmatpush1.bf16.msra.mxu0 0
    %3335 = vmatprep.mubr.bf16.mxu0 0
    %3336 = vmatmul.mubr.bf16.gmra.mrb[0].mxu0 %v3301
    %v3337 = vpop.f32.mrb[0].mxu0
    %v3338 = vadd.f32 0.0, %v3337
    %v3339 = vpop.f32.mrb[0].mxu0
    %v3340 = vpop.f32.mrb[0].mxu0
    %v3341 = vpop.f32.mrb[0].mxu0
    %3342 = vdwg.mxu0
    %v3343 = vmul.f32 %v3338, %v2999
    %v3344 = vmul.f32 %v3294, %v3297
    %v3345 = vpack.c.bf16 %v3344, %v3344
    %v3347 = vsel %vm351, %v3345, 0
    %3349 = vmatprep.subr.bf16.mxu0 0
    %3350 = vmatpush1.bf16.msra.mxu0 %v357
    %3351 = vmatprep.subr.bf16.mxu0 0
    %3352 = vmatpush1.bf16.msra.mxu0 0
    %3353 = vmatprep.subr.bf16.mxu0 0
    %3354 = vmatpush1.bf16.msra.mxu0 0
    %3355 = vmatprep.subr.bf16.mxu0 0
    %3356 = vmatpush1.bf16.msra.mxu0 0
    %3357 = vmatprep.subr.bf16.mxu0 0
    %3358 = vmatpush1.bf16.msra.mxu0 0
    %3359 = vmatprep.subr.bf16.mxu0 0
    %3360 = vmatpush1.bf16.msra.mxu0 0
    %3361 = vmatprep.subr.bf16.mxu0 0
    %3362 = vmatpush1.bf16.msra.mxu0 0
    %3363 = vmatprep.subr.bf16.mxu0 0
    %3364 = vmatpush1.bf16.msra.mxu0 0
    %3365 = vmatprep.subr.bf16.mxu0 0
    %3366 = vmatpush1.bf16.msra.mxu0 0
    %3367 = vmatprep.subr.bf16.mxu0 0
    %3368 = vmatpush1.bf16.msra.mxu0 0
    %3369 = vmatprep.subr.bf16.mxu0 0
    %3370 = vmatpush1.bf16.msra.mxu0 0
    %3371 = vmatprep.subr.bf16.mxu0 0
    %3372 = vmatpush1.bf16.msra.mxu0 0
    %3373 = vmatprep.subr.bf16.mxu0 0
    %3374 = vmatpush1.bf16.msra.mxu0 0
    %3375 = vmatprep.subr.bf16.mxu0 0
    %3376 = vmatpush1.bf16.msra.mxu0 0
    %3377 = vmatprep.subr.bf16.mxu0 0
    %3378 = vmatpush1.bf16.msra.mxu0 0
    %3379 = vmatprep.subr.bf16.mxu0 0
    %3380 = vmatpush1.bf16.msra.mxu0 0
    %3381 = vmatprep.mubr.bf16.mxu0 0
    %3382 = vmatmul.mubr.bf16.gmra.mrb[0].mxu0 %v3347
    %v3383 = vpop.f32.mrb[0].mxu0
    %v3384 = vadd.f32 0.0, %v3383
    %v3385 = vpop.f32.mrb[0].mxu0
    %v3386 = vpop.f32.mrb[0].mxu0
    %v3387 = vpop.f32.mrb[0].mxu0
    %3388 = vdwg.mxu0
    %v3389 = vmul.f32 %v3384, %v3002
    %v3390 = vadd.f32 %v3343, %v3389
    %v3391 = vpack.c.bf16 %v3390, %v3197
    %s3392 = scalar_lea.vmem %s4, 16
    %v3393 = vld [vmem:[%s3392] sm:$0xf]
    %v3394 = vld [vmem:[%s3392 + $0x4] sm:$0xf]
    %v3395 = vld [vmem:[%s3392 + $0x8] sm:$0xf]
    %v3396 = vld [vmem:[%s3392 + $0xc] sm:$0xf]
    %v3397 = vlaneseq
    %v3398 = vshrl.u32 %v3397, 7
    %v3399 = vsub.s32 3, %v3398
    %v3400 = vrot.slane %v2828, %v3399
    %v3405 = vunpack.c.l.b16 %v3393
    %v3406 = vunpack.c.l.b16 %v3394
    %v3407 = vunpack.c.l.b16 %v3395
    %v3408 = vunpack.c.l.b16 %v3396
    %v3409 = vpack.c.b16 %v3406, %v3405
    %v3410 = vpack.c.b16 %v3408, %v3407
    %v3414 = vsel %vm78, %v3391, 0
    %3416 = vmatprep.subr.bf16.mxu0 0
    %3417 = vmatpush1.bf16.msra.mxu0 %v3409
    %3418 = vmatprep.subr.bf16.mxu0 0
    %3419 = vmatpush1.bf16.msra.mxu0 %v3410
    %3420 = vmatprep.subr.bf16.mxu0 0
    %3421 = vmatpush1.bf16.msra.mxu0 0
    %3422 = vmatprep.subr.bf16.mxu0 0
    %3423 = vmatpush1.bf16.msra.mxu0 0
    %3424 = vmatprep.subr.bf16.mxu0 0
    %3425 = vmatpush1.bf16.msra.mxu0 0
    %3426 = vmatprep.subr.bf16.mxu0 0
    %3427 = vmatpush1.bf16.msra.mxu0 0
    %3428 = vmatprep.subr.bf16.mxu0 0
    %3429 = vmatpush1.bf16.msra.mxu0 0
    %3430 = vmatprep.subr.bf16.mxu0 0
    %3431 = vmatpush1.bf16.msra.mxu0 0
    %3432 = vmatprep.subr.bf16.mxu0 0
    %3433 = vmatpush1.bf16.msra.mxu0 0
    %3434 = vmatprep.subr.bf16.mxu0 0
    %3435 = vmatpush1.bf16.msra.mxu0 0
    %3436 = vmatprep.subr.bf16.mxu0 0
    %3437 = vmatpush1.bf16.msra.mxu0 0
    %3438 = vmatprep.subr.bf16.mxu0 0
    %3439 = vmatpush1.bf16.msra.mxu0 0
    %3440 = vmatprep.subr.bf16.mxu0 0
    %3441 = vmatpush1.bf16.msra.mxu0 0
    %3442 = vmatprep.subr.bf16.mxu0 0
    %3443 = vmatpush1.bf16.msra.mxu0 0
    %3444 = vmatprep.subr.bf16.mxu0 0
    %3445 = vmatpush1.bf16.msra.mxu0 0
    %3446 = vmatprep.subr.bf16.mxu0 0
    %3447 = vmatpush1.bf16.msra.mxu0 0
    %3448 = vmatprep.mubr.bf16.mxu0 0
    %3449 = vmatmul.mubr.bf16.gmra.mrb[0].mxu0 %v3414
    %v3450 = vpop.f32.mrb[0].mxu0
    %v3451 = vadd.f32 %v3400, %v3450
    %v3452 = vpop.f32.mrb[0].mxu0
    %v3453 = vpop.f32.mrb[0].mxu0
    %v3454 = vadd.f32 %v3400, %v3453
    %v3455 = vpop.f32.mrb[0].mxu0
    %3456 = vdwg.mxu0
    %v3457 = vadd.f32 %v2812, %v3451
    %v3458 = vadd.f32 %v2813, %v3454
    %v3459 = vsel %vm78, %v3457, 0.0
    %3460 = vadd.xlane.f32.xlu0 %v3459
    %v3461 = vpop.xlane.xlu0 %3460
    %v3462 = vsel %vm78, %v3458, 0.0
    %3463 = vadd.xlane.f32.xlu0 %v3462
    %v3464 = vpop.xlane.xlu0 %3463
    %v3465 = vmul.f32 %v3461, %v713
    %v3466 = vmul.f32 %v3464, %v713
    %v3467 = vsub.f32 %v3457, %v3465
    %v3468 = vsub.f32 %v3458, %v3466
    %v3469 = vmul.f32 %v3467, %v3467
    %v3470 = vmul.f32 %v3468, %v3468
    %v3471 = vsel %vm78, %v3469, 0.0
    %3472 = vadd.xlane.f32.xlu0 %v3471
    %v3473 = vpop.xlane.xlu0 %3472
    %v3474 = vsel %vm78, %v3470, 0.0
    %3475 = vadd.xlane.f32.xlu0 %v3474
    %v3476 = vpop.xlane.xlu0 %3475
    %v3477 = vmul.f32 %v3473, %v713
    %v3478 = vmul.f32 %v3476, %v713
    %v3479 = vadd.f32 %v3477, 1e-05
    %v3480 = vadd.f32 %v3478, 1e-05
    %v3481 = vrsqrt.pop %v3479
    %v3482 = vrsqrt.pop %v3480
    %v3483 = vmul.f32 %v3467, %v3481
    %v3484 = vmul.f32 %v3468, %v3482
    %v3485 = vlaneseq
    %v3486 = vshrl.u32 %v3485, 7
    %v3487 = vsub.s32 4, %v3486
    %v3488 = vrot.slane %v2828, %v3487
    %v3489 = vmul.f32 %v3483, %v3488
    %v3490 = vmul.f32 %v3484, %v3488
    %v3491 = vlaneseq
    %v3492 = vshrl.u32 %v3491, 7
    %v3493 = vsub.s32 5, %v3492
    %v3494 = vrot.slane %v2828, %v3493
    %v3495 = vadd.f32 %v3489, %v3494
    %v3496 = vadd.f32 %v3490, %v3494
    %v3497 = vpack.c.bf16 %v3496, %v3495
    %s3498 = scalar_lea.vmem %s5, 256
    %v3499 = vld [vmem:[%s3498] sm:$0xff]
    %v3500 = vld [vmem:[%s3498 + $0x8] sm:$0xff]
    %v3501 = vld [vmem:[%s3498 + $0x10] sm:$0xff]
    %v3502 = vld [vmem:[%s3498 + $0x18] sm:$0xff]
    %v3503 = vld [vmem:[%s3498 + $0x20] sm:$0xff]
    %v3504 = vld [vmem:[%s3498 + $0x28] sm:$0xff]
    %v3505 = vld [vmem:[%s3498 + $0x30] sm:$0xff]
    %v3506 = vld [vmem:[%s3498 + $0x38] sm:$0xff]
    %v3507 = vld [vmem:[%s3498 + $0x40] sm:$0xff]
    %v3508 = vld [vmem:[%s3498 + $0x48] sm:$0xff]
    %v3509 = vld [vmem:[%s3498 + $0x50] sm:$0xff]
    %v3510 = vld [vmem:[%s3498 + $0x58] sm:$0xff]
    %v3511 = vld [vmem:[%s3498 + $0x60] sm:$0xff]
    %v3512 = vld [vmem:[%s3498 + $0x68] sm:$0xff]
    %v3513 = vld [vmem:[%s3498 + $0x70] sm:$0xff]
    %v3514 = vld [vmem:[%s3498 + $0x78] sm:$0xff]
    %v3515 = vld [vmem:[%s3498 + $0x80] sm:$0xff]
    %v3516 = vld [vmem:[%s3498 + $0x88] sm:$0xff]
    %v3517 = vld [vmem:[%s3498 + $0x90] sm:$0xff]
    %v3518 = vld [vmem:[%s3498 + $0x98] sm:$0xff]
    %v3519 = vld [vmem:[%s3498 + $0xa0] sm:$0xff]
    %v3520 = vld [vmem:[%s3498 + $0xa8] sm:$0xff]
    %v3521 = vld [vmem:[%s3498 + $0xb0] sm:$0xff]
    %v3522 = vld [vmem:[%s3498 + $0xb8] sm:$0xff]
    %v3523 = vld [vmem:[%s3498 + $0xc0] sm:$0xff]
    %v3524 = vld [vmem:[%s3498 + $0xc8] sm:$0xff]
    %v3525 = vld [vmem:[%s3498 + $0xd0] sm:$0xff]
    %v3526 = vld [vmem:[%s3498 + $0xd8] sm:$0xff]
    %v3527 = vld [vmem:[%s3498 + $0xe0] sm:$0xff]
    %v3528 = vld [vmem:[%s3498 + $0xe8] sm:$0xff]
    %v3529 = vld [vmem:[%s3498 + $0xf0] sm:$0xff]
    %v3530 = vld [vmem:[%s3498 + $0xf8] sm:$0xff]
    %s3531 = scalar_lea.vmem %s6, 16
    %v3532 = vld [vmem:[%s3531] sm:$0xff]
    %v3533 = vld [vmem:[%s3531 + $0x8] sm:$0xff]
    %v3536 = vlaneseq
    %v3537 = vshrl.u32 %v3536, 7
    %v3538 = vsub.s32 0, %v3537
    %v3539 = vrot.slane %v3532, %v3538
    %v3540 = vlaneseq
    %v3541 = vshrl.u32 %v3540, 7
    %v3542 = vsub.s32 1, %v3541
    %v3543 = vrot.slane %v3532, %v3542
    %v3544 = vlaneseq
    %v3545 = vshrl.u32 %v3544, 7
    %v3546 = vsub.s32 2, %v3545
    %v3547 = vrot.slane %v3532, %v3546
    %v3548 = vlaneseq
    %v3549 = vshrl.u32 %v3548, 7
    %v3550 = vsub.s32 3, %v3549
    %v3551 = vrot.slane %v3532, %v3550
    %v3552 = vlaneseq
    %v3553 = vshrl.u32 %v3552, 7
    %v3554 = vsub.s32 4, %v3553
    %v3555 = vrot.slane %v3532, %v3554
    %v3556 = vlaneseq
    %v3557 = vshrl.u32 %v3556, 7
    %v3558 = vsub.s32 5, %v3557
    %v3559 = vrot.slane %v3532, %v3558
    %v3560 = vlaneseq
    %v3561 = vshrl.u32 %v3560, 7
    %v3562 = vsub.s32 6, %v3561
    %v3563 = vrot.slane %v3532, %v3562
    %v3564 = vlaneseq
    %v3565 = vshrl.u32 %v3564, 7
    %v3566 = vsub.s32 7, %v3565
    %v3567 = vrot.slane %v3532, %v3566
    %v3568 = vlaneseq
    %v3569 = vshrl.u32 %v3568, 7
    %v3570 = vsub.s32 0, %v3569
    %v3571 = vrot.slane %v3533, %v3570
    %v3572 = vlaneseq
    %v3573 = vshrl.u32 %v3572, 7
    %v3574 = vsub.s32 1, %v3573
    %v3575 = vrot.slane %v3533, %v3574
    %v3576 = vlaneseq
    %v3577 = vshrl.u32 %v3576, 7
    %v3578 = vsub.s32 2, %v3577
    %v3579 = vrot.slane %v3533, %v3578
    %v3580 = vlaneseq
    %v3581 = vshrl.u32 %v3580, 7
    %v3582 = vsub.s32 3, %v3581
    %v3583 = vrot.slane %v3533, %v3582
    %v3584 = vlaneseq
    %v3585 = vshrl.u32 %v3584, 7
    %v3586 = vsub.s32 4, %v3585
    %v3587 = vrot.slane %v3533, %v3586
    %v3588 = vlaneseq
    %v3589 = vshrl.u32 %v3588, 7
    %v3590 = vsub.s32 5, %v3589
    %v3591 = vrot.slane %v3533, %v3590
    %v3592 = vlaneseq
    %v3593 = vshrl.u32 %v3592, 7
    %v3594 = vsub.s32 6, %v3593
    %v3595 = vrot.slane %v3533, %v3594
    %v3596 = vlaneseq
    %v3597 = vshrl.u32 %v3596, 7
    %v3598 = vsub.s32 7, %v3597
    %v3599 = vrot.slane %v3533, %v3598
    %v3648 = vunpack.c.l.b16 %v3499
    %v3649 = vunpack.c.h.b16 %v3499
    %v3650 = vunpack.c.l.b16 %v3500
    %v3651 = vunpack.c.h.b16 %v3500
    %v3652 = vunpack.c.l.b16 %v3501
    %v3653 = vunpack.c.h.b16 %v3501
    %v3654 = vunpack.c.l.b16 %v3502
    %v3655 = vunpack.c.h.b16 %v3502
    %v3656 = vunpack.c.l.b16 %v3503
    %v3657 = vunpack.c.h.b16 %v3503
    %v3658 = vunpack.c.l.b16 %v3504
    %v3659 = vunpack.c.h.b16 %v3504
    %v3660 = vunpack.c.l.b16 %v3505
    %v3661 = vunpack.c.h.b16 %v3505
    %v3662 = vunpack.c.l.b16 %v3506
    %v3663 = vunpack.c.h.b16 %v3506
    %v3664 = vunpack.c.l.b16 %v3507
    %v3665 = vunpack.c.h.b16 %v3507
    %v3666 = vunpack.c.l.b16 %v3508
    %v3667 = vunpack.c.h.b16 %v3508
    %v3668 = vunpack.c.l.b16 %v3509
    %v3669 = vunpack.c.h.b16 %v3509
    %v3670 = vunpack.c.l.b16 %v3510
    %v3671 = vunpack.c.h.b16 %v3510
    %v3672 = vunpack.c.l.b16 %v3511
    %v3673 = vunpack.c.h.b16 %v3511
    %v3674 = vunpack.c.l.b16 %v3512
    %v3675 = vunpack.c.h.b16 %v3512
    %v3676 = vunpack.c.l.b16 %v3513
    %v3677 = vunpack.c.h.b16 %v3513
    %v3678 = vunpack.c.l.b16 %v3514
    %v3679 = vunpack.c.h.b16 %v3514
    %v3680 = vunpack.c.l.b16 %v3515
    %v3681 = vunpack.c.h.b16 %v3515
    %v3682 = vunpack.c.l.b16 %v3516
    %v3683 = vunpack.c.h.b16 %v3516
    %v3684 = vunpack.c.l.b16 %v3517
    %v3685 = vunpack.c.h.b16 %v3517
    %v3686 = vunpack.c.l.b16 %v3518
    %v3687 = vunpack.c.h.b16 %v3518
    %v3688 = vunpack.c.l.b16 %v3519
    %v3689 = vunpack.c.h.b16 %v3519
    %v3690 = vunpack.c.l.b16 %v3520
    %v3691 = vunpack.c.h.b16 %v3520
    %v3692 = vunpack.c.l.b16 %v3521
    %v3693 = vunpack.c.h.b16 %v3521
    %v3694 = vunpack.c.l.b16 %v3522
    %v3695 = vunpack.c.h.b16 %v3522
    %v3696 = vunpack.c.l.b16 %v3523
    %v3697 = vunpack.c.h.b16 %v3523
    %v3698 = vunpack.c.l.b16 %v3524
    %v3699 = vunpack.c.h.b16 %v3524
    %v3700 = vunpack.c.l.b16 %v3525
    %v3701 = vunpack.c.h.b16 %v3525
    %v3702 = vunpack.c.l.b16 %v3526
    %v3703 = vunpack.c.h.b16 %v3526
    %v3704 = vunpack.c.l.b16 %v3527
    %v3705 = vunpack.c.h.b16 %v3527
    %v3706 = vunpack.c.l.b16 %v3528
    %v3707 = vunpack.c.h.b16 %v3528
    %v3708 = vunpack.c.l.b16 %v3529
    %v3709 = vunpack.c.h.b16 %v3529
    %v3710 = vunpack.c.l.b16 %v3530
    %v3711 = vunpack.c.h.b16 %v3530
    %v3712 = vpack.c.b16 %v3664, %v3648
    %v3713 = vpack.c.b16 %v3665, %v3649
    %v3714 = vpack.c.b16 %v3666, %v3650
    %v3715 = vpack.c.b16 %v3667, %v3651
    %v3716 = vpack.c.b16 %v3668, %v3652
    %v3717 = vpack.c.b16 %v3669, %v3653
    %v3718 = vpack.c.b16 %v3670, %v3654
    %v3719 = vpack.c.b16 %v3671, %v3655
    %v3720 = vpack.c.b16 %v3672, %v3656
    %v3721 = vpack.c.b16 %v3673, %v3657
    %v3722 = vpack.c.b16 %v3674, %v3658
    %v3723 = vpack.c.b16 %v3675, %v3659
    %v3724 = vpack.c.b16 %v3676, %v3660
    %v3725 = vpack.c.b16 %v3677, %v3661
    %v3726 = vpack.c.b16 %v3678, %v3662
    %v3727 = vpack.c.b16 %v3679, %v3663
    %v3728 = vpack.c.b16 %v3696, %v3680
    %v3729 = vpack.c.b16 %v3697, %v3681
    %v3730 = vpack.c.b16 %v3698, %v3682
    %v3731 = vpack.c.b16 %v3699, %v3683
    %v3732 = vpack.c.b16 %v3700, %v3684
    %v3733 = vpack.c.b16 %v3701, %v3685
    %v3734 = vpack.c.b16 %v3702, %v3686
    %v3735 = vpack.c.b16 %v3703, %v3687
    %v3736 = vpack.c.b16 %v3704, %v3688
    %v3737 = vpack.c.b16 %v3705, %v3689
    %v3738 = vpack.c.b16 %v3706, %v3690
    %v3739 = vpack.c.b16 %v3707, %v3691
    %v3740 = vpack.c.b16 %v3708, %v3692
    %v3741 = vpack.c.b16 %v3709, %v3693
    %v3742 = vpack.c.b16 %v3710, %v3694
    %v3743 = vpack.c.b16 %v3711, %v3695
    %v3777 = vsel %vm78, %v3497, 0
    %3779 = vmatprep.subr.bf16.mxu0 %v3713
    %3780 = vmatpush1.bf16.msra.mxu0 %v3712
    %3781 = vmatprep.subr.bf16.mxu0 %v3729
    %3782 = vmatpush1.bf16.msra.mxu0 %v3728
    %3783 = vmatprep.subr.bf16.mxu0 0
    %3784 = vmatpush1.bf16.msra.mxu0 0
    %3785 = vmatprep.subr.bf16.mxu0 0
    %3786 = vmatpush1.bf16.msra.mxu0 0
    %3787 = vmatprep.subr.bf16.mxu0 0
    %3788 = vmatpush1.bf16.msra.mxu0 0
    %3789 = vmatprep.subr.bf16.mxu0 0
    %3790 = vmatpush1.bf16.msra.mxu0 0
    %3791 = vmatprep.subr.bf16.mxu0 0
    %3792 = vmatpush1.bf16.msra.mxu0 0
    %3793 = vmatprep.subr.bf16.mxu0 0
    %3794 = vmatpush1.bf16.msra.mxu0 0
    %3795 = vmatprep.subr.bf16.mxu0 0
    %3796 = vmatpush1.bf16.msra.mxu0 0
    %3797 = vmatprep.subr.bf16.mxu0 0
    %3798 = vmatpush1.bf16.msra.mxu0 0
    %3799 = vmatprep.subr.bf16.mxu0 0
    %3800 = vmatpush1.bf16.msra.mxu0 0
    %3801 = vmatprep.subr.bf16.mxu0 0
    %3802 = vmatpush1.bf16.msra.mxu0 0
    %3803 = vmatprep.subr.bf16.mxu0 0
    %3804 = vmatpush1.bf16.msra.mxu0 0
    %3805 = vmatprep.subr.bf16.mxu0 0
    %3806 = vmatpush1.bf16.msra.mxu0 0
    %3807 = vmatprep.subr.bf16.mxu0 0
    %3808 = vmatpush1.bf16.msra.mxu0 0
    %3809 = vmatprep.subr.bf16.mxu0 0
    %3810 = vmatpush1.bf16.msra.mxu0 0
    %3811 = vmatprep.mubr.bf16.mxu0 0
    %3812 = vmatmul.mubr.bf16.gmra.mrb[0].mxu0 %v3777
    %v3813 = vpop.f32.mrb[0].mxu0
    %v3814 = vadd.f32 %v3539, %v3813
    %v3815 = vpop.f32.mrb[0].mxu0
    %v3816 = vadd.f32 %v3543, %v3815
    %v3817 = vpop.f32.mrb[0].mxu0
    %v3818 = vadd.f32 %v3539, %v3817
    %v3819 = vpop.f32.mrb[0].mxu0
    %v3820 = vadd.f32 %v3543, %v3819
    %3821 = vdwg.mxu0
    %3822 = vmatprep.subr.bf16.mxu0 %v3715
    %3823 = vmatpush1.bf16.msra.mxu0 %v3714
    %3824 = vmatprep.subr.bf16.mxu0 %v3731
    %3825 = vmatpush1.bf16.msra.mxu0 %v3730
    %3826 = vmatprep.subr.bf16.mxu0 0
    %3827 = vmatpush1.bf16.msra.mxu0 0
    %3828 = vmatprep.subr.bf16.mxu0 0
    %3829 = vmatpush1.bf16.msra.mxu0 0
    %3830 = vmatprep.subr.bf16.mxu0 0
    %3831 = vmatpush1.bf16.msra.mxu0 0
    %3832 = vmatprep.subr.bf16.mxu0 0
    %3833 = vmatpush1.bf16.msra.mxu0 0
    %3834 = vmatprep.subr.bf16.mxu0 0
    %3835 = vmatpush1.bf16.msra.mxu0 0
    %3836 = vmatprep.subr.bf16.mxu0 0
    %3837 = vmatpush1.bf16.msra.mxu0 0
    %3838 = vmatprep.subr.bf16.mxu0 0
    %3839 = vmatpush1.bf16.msra.mxu0 0
    %3840 = vmatprep.subr.bf16.mxu0 0
    %3841 = vmatpush1.bf16.msra.mxu0 0
    %3842 = vmatprep.subr.bf16.mxu0 0
    %3843 = vmatpush1.bf16.msra.mxu0 0
    %3844 = vmatprep.subr.bf16.mxu0 0
    %3845 = vmatpush1.bf16.msra.mxu0 0
    %3846 = vmatprep.subr.bf16.mxu0 0
    %3847 = vmatpush1.bf16.msra.mxu0 0
    %3848 = vmatprep.subr.bf16.mxu0 0
    %3849 = vmatpush1.bf16.msra.mxu0 0
    %3850 = vmatprep.subr.bf16.mxu0 0
    %3851 = vmatpush1.bf16.msra.mxu0 0
    %3852 = vmatprep.subr.bf16.mxu0 0
    %3853 = vmatpush1.bf16.msra.mxu0 0
    %3854 = vmatprep.mubr.bf16.mxu0 0
    %3855 = vmatmul.mubr.bf16.gmra.mrb[0].mxu0 %v3777
    %v3856 = vpop.f32.mrb[0].mxu0
    %v3857 = vadd.f32 %v3547, %v3856
    %v3858 = vpop.f32.mrb[0].mxu0
    %v3859 = vadd.f32 %v3551, %v3858
    %v3860 = vpop.f32.mrb[0].mxu0
    %v3861 = vadd.f32 %v3547, %v3860
    %v3862 = vpop.f32.mrb[0].mxu0
    %v3863 = vadd.f32 %v3551, %v3862
    %3864 = vdwg.mxu0
    %3865 = vmatprep.subr.bf16.mxu0 %v3717
    %3866 = vmatpush1.bf16.msra.mxu0 %v3716
    %3867 = vmatprep.subr.bf16.mxu0 %v3733
    %3868 = vmatpush1.bf16.msra.mxu0 %v3732
    %3869 = vmatprep.subr.bf16.mxu0 0
    %3870 = vmatpush1.bf16.msra.mxu0 0
    %3871 = vmatprep.subr.bf16.mxu0 0
    %3872 = vmatpush1.bf16.msra.mxu0 0
    %3873 = vmatprep.subr.bf16.mxu0 0
    %3874 = vmatpush1.bf16.msra.mxu0 0
    %3875 = vmatprep.subr.bf16.mxu0 0
    %3876 = vmatpush1.bf16.msra.mxu0 0
    %3877 = vmatprep.subr.bf16.mxu0 0
    %3878 = vmatpush1.bf16.msra.mxu0 0
    %3879 = vmatprep.subr.bf16.mxu0 0
    %3880 = vmatpush1.bf16.msra.mxu0 0
    %3881 = vmatprep.subr.bf16.mxu0 0
    %3882 = vmatpush1.bf16.msra.mxu0 0
    %3883 = vmatprep.subr.bf16.mxu0 0
    %3884 = vmatpush1.bf16.msra.mxu0 0
    %3885 = vmatprep.subr.bf16.mxu0 0
    %3886 = vmatpush1.bf16.msra.mxu0 0
    %3887 = vmatprep.subr.bf16.mxu0 0
    %3888 = vmatpush1.bf16.msra.mxu0 0
    %3889 = vmatprep.subr.bf16.mxu0 0
    %3890 = vmatpush1.bf16.msra.mxu0 0
    %3891 = vmatprep.subr.bf16.mxu0 0
    %3892 = vmatpush1.bf16.msra.mxu0 0
    %3893 = vmatprep.subr.bf16.mxu0 0
    %3894 = vmatpush1.bf16.msra.mxu0 0
    %3895 = vmatprep.subr.bf16.mxu0 0
    %3896 = vmatpush1.bf16.msra.mxu0 0
    %3897 = vmatprep.mubr.bf16.mxu0 0
    %3898 = vmatmul.mubr.bf16.gmra.mrb[0].mxu0 %v3777
    %v3899 = vpop.f32.mrb[0].mxu0
    %v3900 = vadd.f32 %v3555, %v3899
    %v3901 = vpop.f32.mrb[0].mxu0
    %v3902 = vadd.f32 %v3559, %v3901
    %v3903 = vpop.f32.mrb[0].mxu0
    %v3904 = vadd.f32 %v3555, %v3903
    %v3905 = vpop.f32.mrb[0].mxu0
    %v3906 = vadd.f32 %v3559, %v3905
    %3907 = vdwg.mxu0
    %3908 = vmatprep.subr.bf16.mxu0 %v3719
    %3909 = vmatpush1.bf16.msra.mxu0 %v3718
    %3910 = vmatprep.subr.bf16.mxu0 %v3735
    %3911 = vmatpush1.bf16.msra.mxu0 %v3734
    %3912 = vmatprep.subr.bf16.mxu0 0
    %3913 = vmatpush1.bf16.msra.mxu0 0
    %3914 = vmatprep.subr.bf16.mxu0 0
    %3915 = vmatpush1.bf16.msra.mxu0 0
    %3916 = vmatprep.subr.bf16.mxu0 0
    %3917 = vmatpush1.bf16.msra.mxu0 0
    %3918 = vmatprep.subr.bf16.mxu0 0
    %3919 = vmatpush1.bf16.msra.mxu0 0
    %3920 = vmatprep.subr.bf16.mxu0 0
    %3921 = vmatpush1.bf16.msra.mxu0 0
    %3922 = vmatprep.subr.bf16.mxu0 0
    %3923 = vmatpush1.bf16.msra.mxu0 0
    %3924 = vmatprep.subr.bf16.mxu0 0
    %3925 = vmatpush1.bf16.msra.mxu0 0
    %3926 = vmatprep.subr.bf16.mxu0 0
    %3927 = vmatpush1.bf16.msra.mxu0 0
    %3928 = vmatprep.subr.bf16.mxu0 0
    %3929 = vmatpush1.bf16.msra.mxu0 0
    %3930 = vmatprep.subr.bf16.mxu0 0
    %3931 = vmatpush1.bf16.msra.mxu0 0
    %3932 = vmatprep.subr.bf16.mxu0 0
    %3933 = vmatpush1.bf16.msra.mxu0 0
    %3934 = vmatprep.subr.bf16.mxu0 0
    %3935 = vmatpush1.bf16.msra.mxu0 0
    %3936 = vmatprep.subr.bf16.mxu0 0
    %3937 = vmatpush1.bf16.msra.mxu0 0
    %3938 = vmatprep.subr.bf16.mxu0 0
    %3939 = vmatpush1.bf16.msra.mxu0 0
    %3940 = vmatprep.mubr.bf16.mxu0 0
    %3941 = vmatmul.mubr.bf16.gmra.mrb[0].mxu0 %v3777
    %v3942 = vpop.f32.mrb[0].mxu0
    %v3943 = vadd.f32 %v3563, %v3942
    %v3944 = vpop.f32.mrb[0].mxu0
    %v3945 = vadd.f32 %v3567, %v3944
    %v3946 = vpop.f32.mrb[0].mxu0
    %v3947 = vadd.f32 %v3563, %v3946
    %v3948 = vpop.f32.mrb[0].mxu0
    %v3949 = vadd.f32 %v3567, %v3948
    %3950 = vdwg.mxu0
    %3951 = vmatprep.subr.bf16.mxu0 %v3721
    %3952 = vmatpush1.bf16.msra.mxu0 %v3720
    %3953 = vmatprep.subr.bf16.mxu0 %v3737
    %3954 = vmatpush1.bf16.msra.mxu0 %v3736
    %3955 = vmatprep.subr.bf16.mxu0 0
    %3956 = vmatpush1.bf16.msra.mxu0 0
    %3957 = vmatprep.subr.bf16.mxu0 0
    %3958 = vmatpush1.bf16.msra.mxu0 0
    %3959 = vmatprep.subr.bf16.mxu0 0
    %3960 = vmatpush1.bf16.msra.mxu0 0
    %3961 = vmatprep.subr.bf16.mxu0 0
    %3962 = vmatpush1.bf16.msra.mxu0 0
    %3963 = vmatprep.subr.bf16.mxu0 0
    %3964 = vmatpush1.bf16.msra.mxu0 0
    %3965 = vmatprep.subr.bf16.mxu0 0
    %3966 = vmatpush1.bf16.msra.mxu0 0
    %3967 = vmatprep.subr.bf16.mxu0 0
    %3968 = vmatpush1.bf16.msra.mxu0 0
    %3969 = vmatprep.subr.bf16.mxu0 0
    %3970 = vmatpush1.bf16.msra.mxu0 0
    %3971 = vmatprep.subr.bf16.mxu0 0
    %3972 = vmatpush1.bf16.msra.mxu0 0
    %3973 = vmatprep.subr.bf16.mxu0 0
    %3974 = vmatpush1.bf16.msra.mxu0 0
    %3975 = vmatprep.subr.bf16.mxu0 0
    %3976 = vmatpush1.bf16.msra.mxu0 0
    %3977 = vmatprep.subr.bf16.mxu0 0
    %3978 = vmatpush1.bf16.msra.mxu0 0
    %3979 = vmatprep.subr.bf16.mxu0 0
    %3980 = vmatpush1.bf16.msra.mxu0 0
    %3981 = vmatprep.subr.bf16.mxu0 0
    %3982 = vmatpush1.bf16.msra.mxu0 0
    %3983 = vmatprep.mubr.bf16.mxu0 0
    %3984 = vmatmul.mubr.bf16.gmra.mrb[0].mxu0 %v3777
    %v3985 = vpop.f32.mrb[0].mxu0
    %v3986 = vadd.f32 %v3571, %v3985
    %v3987 = vpop.f32.mrb[0].mxu0
    %v3988 = vadd.f32 %v3575, %v3987
    %v3989 = vpop.f32.mrb[0].mxu0
    %v3990 = vadd.f32 %v3571, %v3989
    %v3991 = vpop.f32.mrb[0].mxu0
    %v3992 = vadd.f32 %v3575, %v3991
    %3993 = vdwg.mxu0
    %3994 = vmatprep.subr.bf16.mxu0 %v3723
    %3995 = vmatpush1.bf16.msra.mxu0 %v3722
    %3996 = vmatprep.subr.bf16.mxu0 %v3739
    %3997 = vmatpush1.bf16.msra.mxu0 %v3738
    %3998 = vmatprep.subr.bf16.mxu0 0
    %3999 = vmatpush1.bf16.msra.mxu0 0
    %4000 = vmatprep.subr.bf16.mxu0 0
    %4001 = vmatpush1.bf16.msra.mxu0 0
    %4002 = vmatprep.subr.bf16.mxu0 0
    %4003 = vmatpush1.bf16.msra.mxu0 0
    %4004 = vmatprep.subr.bf16.mxu0 0
    %4005 = vmatpush1.bf16.msra.mxu0 0
    %4006 = vmatprep.subr.bf16.mxu0 0
    %4007 = vmatpush1.bf16.msra.mxu0 0
    %4008 = vmatprep.subr.bf16.mxu0 0
    %4009 = vmatpush1.bf16.msra.mxu0 0
    %4010 = vmatprep.subr.bf16.mxu0 0
    %4011 = vmatpush1.bf16.msra.mxu0 0
    %4012 = vmatprep.subr.bf16.mxu0 0
    %4013 = vmatpush1.bf16.msra.mxu0 0
    %4014 = vmatprep.subr.bf16.mxu0 0
    %4015 = vmatpush1.bf16.msra.mxu0 0
    %4016 = vmatprep.subr.bf16.mxu0 0
    %4017 = vmatpush1.bf16.msra.mxu0 0
    %4018 = vmatprep.subr.bf16.mxu0 0
    %4019 = vmatpush1.bf16.msra.mxu0 0
    %4020 = vmatprep.subr.bf16.mxu0 0
    %4021 = vmatpush1.bf16.msra.mxu0 0
    %4022 = vmatprep.subr.bf16.mxu0 0
    %4023 = vmatpush1.bf16.msra.mxu0 0
    %4024 = vmatprep.subr.bf16.mxu0 0
    %4025 = vmatpush1.bf16.msra.mxu0 0
    %4026 = vmatprep.mubr.bf16.mxu0 0
    %4027 = vmatmul.mubr.bf16.gmra.mrb[0].mxu0 %v3777
    %v4028 = vpop.f32.mrb[0].mxu0
    %v4029 = vadd.f32 %v3579, %v4028
    %v4030 = vpop.f32.mrb[0].mxu0
    %v4031 = vadd.f32 %v3583, %v4030
    %v4032 = vpop.f32.mrb[0].mxu0
    %v4033 = vadd.f32 %v3579, %v4032
    %v4034 = vpop.f32.mrb[0].mxu0
    %v4035 = vadd.f32 %v3583, %v4034
    %4036 = vdwg.mxu0
    %4037 = vmatprep.subr.bf16.mxu0 %v3725
    %4038 = vmatpush1.bf16.msra.mxu0 %v3724
    %4039 = vmatprep.subr.bf16.mxu0 %v3741
    %4040 = vmatpush1.bf16.msra.mxu0 %v3740
    %4041 = vmatprep.subr.bf16.mxu0 0
    %4042 = vmatpush1.bf16.msra.mxu0 0
    %4043 = vmatprep.subr.bf16.mxu0 0
    %4044 = vmatpush1.bf16.msra.mxu0 0
    %4045 = vmatprep.subr.bf16.mxu0 0
    %4046 = vmatpush1.bf16.msra.mxu0 0
    %4047 = vmatprep.subr.bf16.mxu0 0
    %4048 = vmatpush1.bf16.msra.mxu0 0
    %4049 = vmatprep.subr.bf16.mxu0 0
    %4050 = vmatpush1.bf16.msra.mxu0 0
    %4051 = vmatprep.subr.bf16.mxu0 0
    %4052 = vmatpush1.bf16.msra.mxu0 0
    %4053 = vmatprep.subr.bf16.mxu0 0
    %4054 = vmatpush1.bf16.msra.mxu0 0
    %4055 = vmatprep.subr.bf16.mxu0 0
    %4056 = vmatpush1.bf16.msra.mxu0 0
    %4057 = vmatprep.subr.bf16.mxu0 0
    %4058 = vmatpush1.bf16.msra.mxu0 0
    %4059 = vmatprep.subr.bf16.mxu0 0
    %4060 = vmatpush1.bf16.msra.mxu0 0
    %4061 = vmatprep.subr.bf16.mxu0 0
    %4062 = vmatpush1.bf16.msra.mxu0 0
    %4063 = vmatprep.subr.bf16.mxu0 0
    %4064 = vmatpush1.bf16.msra.mxu0 0
    %4065 = vmatprep.subr.bf16.mxu0 0
    %4066 = vmatpush1.bf16.msra.mxu0 0
    %4067 = vmatprep.subr.bf16.mxu0 0
    %4068 = vmatpush1.bf16.msra.mxu0 0
    %4069 = vmatprep.mubr.bf16.mxu0 0
    %4070 = vmatmul.mubr.bf16.gmra.mrb[0].mxu0 %v3777
    %v4071 = vpop.f32.mrb[0].mxu0
    %v4072 = vadd.f32 %v3587, %v4071
    %v4073 = vpop.f32.mrb[0].mxu0
    %v4074 = vadd.f32 %v3591, %v4073
    %v4075 = vpop.f32.mrb[0].mxu0
    %v4076 = vadd.f32 %v3587, %v4075
    %v4077 = vpop.f32.mrb[0].mxu0
    %v4078 = vadd.f32 %v3591, %v4077
    %4079 = vdwg.mxu0
    %4080 = vmatprep.subr.bf16.mxu0 %v3727
    %4081 = vmatpush1.bf16.msra.mxu0 %v3726
    %4082 = vmatprep.subr.bf16.mxu0 %v3743
    %4083 = vmatpush1.bf16.msra.mxu0 %v3742
    %4084 = vmatprep.subr.bf16.mxu0 0
    %4085 = vmatpush1.bf16.msra.mxu0 0
    %4086 = vmatprep.subr.bf16.mxu0 0
    %4087 = vmatpush1.bf16.msra.mxu0 0
    %4088 = vmatprep.subr.bf16.mxu0 0
    %4089 = vmatpush1.bf16.msra.mxu0 0
    %4090 = vmatprep.subr.bf16.mxu0 0
    %4091 = vmatpush1.bf16.msra.mxu0 0
    %4092 = vmatprep.subr.bf16.mxu0 0
    %4093 = vmatpush1.bf16.msra.mxu0 0
    %4094 = vmatprep.subr.bf16.mxu0 0
    %4095 = vmatpush1.bf16.msra.mxu0 0
    %4096 = vmatprep.subr.bf16.mxu0 0
    %4097 = vmatpush1.bf16.msra.mxu0 0
    %4098 = vmatprep.subr.bf16.mxu0 0
    %4099 = vmatpush1.bf16.msra.mxu0 0
    %4100 = vmatprep.subr.bf16.mxu0 0
    %4101 = vmatpush1.bf16.msra.mxu0 0
    %4102 = vmatprep.subr.bf16.mxu0 0
    %4103 = vmatpush1.bf16.msra.mxu0 0
    %4104 = vmatprep.subr.bf16.mxu0 0
    %4105 = vmatpush1.bf16.msra.mxu0 0
    %4106 = vmatprep.subr.bf16.mxu0 0
    %4107 = vmatpush1.bf16.msra.mxu0 0
    %4108 = vmatprep.subr.bf16.mxu0 0
    %4109 = vmatpush1.bf16.msra.mxu0 0
    %4110 = vmatprep.subr.bf16.mxu0 0
    %4111 = vmatpush1.bf16.msra.mxu0 0
    %4112 = vmatprep.mubr.bf16.mxu0 0
    %4113 = vmatmul.mubr.bf16.gmra.mrb[0].mxu0 %v3777
    %v4114 = vpop.f32.mrb[0].mxu0
    %v4115 = vadd.f32 %v3595, %v4114
    %v4116 = vpop.f32.mrb[0].mxu0
    %v4117 = vadd.f32 %v3599, %v4116
    %v4118 = vpop.f32.mrb[0].mxu0
    %v4119 = vadd.f32 %v3595, %v4118
    %v4120 = vpop.f32.mrb[0].mxu0
    %v4121 = vadd.f32 %v3599, %v4120
    %4122 = vdwg.mxu0
    %v4123 = vmax.f32 %v3814, 0.0
    %v4124 = vmax.f32 %v3816, 0.0
    %v4125 = vmax.f32 %v3857, 0.0
    %v4126 = vmax.f32 %v3859, 0.0
    %v4127 = vmax.f32 %v3900, 0.0
    %v4128 = vmax.f32 %v3902, 0.0
    %v4129 = vmax.f32 %v3943, 0.0
    %v4130 = vmax.f32 %v3945, 0.0
    %v4131 = vmax.f32 %v3986, 0.0
    %v4132 = vmax.f32 %v3988, 0.0
    %v4133 = vmax.f32 %v4029, 0.0
    %v4134 = vmax.f32 %v4031, 0.0
    %v4135 = vmax.f32 %v4072, 0.0
    %v4136 = vmax.f32 %v4074, 0.0
    %v4137 = vmax.f32 %v4115, 0.0
    %v4138 = vmax.f32 %v4117, 0.0
    %v4139 = vmax.f32 %v3818, 0.0
    %v4140 = vmax.f32 %v3820, 0.0
    %v4141 = vmax.f32 %v3861, 0.0
    %v4142 = vmax.f32 %v3863, 0.0
    %v4143 = vmax.f32 %v3904, 0.0
    %v4144 = vmax.f32 %v3906, 0.0
    %v4145 = vmax.f32 %v3947, 0.0
    %v4146 = vmax.f32 %v3949, 0.0
    %v4147 = vmax.f32 %v3990, 0.0
    %v4148 = vmax.f32 %v3992, 0.0
    %v4149 = vmax.f32 %v4033, 0.0
    %v4150 = vmax.f32 %v4035, 0.0
    %v4151 = vmax.f32 %v4076, 0.0
    %v4152 = vmax.f32 %v4078, 0.0
    %v4153 = vmax.f32 %v4119, 0.0
    %v4154 = vmax.f32 %v4121, 0.0
    %v4155 = vpack.c.bf16 %v4139, %v4123
    %v4156 = vpack.c.bf16 %v4140, %v4124
    %v4157 = vpack.c.bf16 %v4141, %v4125
    %v4158 = vpack.c.bf16 %v4142, %v4126
    %v4159 = vpack.c.bf16 %v4143, %v4127
    %v4160 = vpack.c.bf16 %v4144, %v4128
    %v4161 = vpack.c.bf16 %v4145, %v4129
    %v4162 = vpack.c.bf16 %v4146, %v4130
    %v4163 = vpack.c.bf16 %v4147, %v4131
    %v4164 = vpack.c.bf16 %v4148, %v4132
    %v4165 = vpack.c.bf16 %v4149, %v4133
    %v4166 = vpack.c.bf16 %v4150, %v4134
    %v4167 = vpack.c.bf16 %v4151, %v4135
    %v4168 = vpack.c.bf16 %v4152, %v4136
    %v4169 = vpack.c.bf16 %v4153, %v4137
    %v4170 = vpack.c.bf16 %v4154, %v4138
    %s4171 = scalar_lea.vmem %s7, 1024
    %v4172 = vld [vmem:[%s4171] sm:$0xf]
    %v4173 = vld [vmem:[%s4171 + $0x4] sm:$0xf]
    %v4174 = vld [vmem:[%s4171 + $0x8] sm:$0xf]
    %v4175 = vld [vmem:[%s4171 + $0xc] sm:$0xf]
    %v4176 = vld [vmem:[%s4171 + $0x10] sm:$0xf]
    %v4177 = vld [vmem:[%s4171 + $0x14] sm:$0xf]
    %v4178 = vld [vmem:[%s4171 + $0x18] sm:$0xf]
    %v4179 = vld [vmem:[%s4171 + $0x1c] sm:$0xf]
    %v4180 = vld [vmem:[%s4171 + $0x20] sm:$0xf]
    %v4181 = vld [vmem:[%s4171 + $0x24] sm:$0xf]
    %v4182 = vld [vmem:[%s4171 + $0x28] sm:$0xf]
    %v4183 = vld [vmem:[%s4171 + $0x2c] sm:$0xf]
    %v4184 = vld [vmem:[%s4171 + $0x30] sm:$0xf]
    %v4185 = vld [vmem:[%s4171 + $0x34] sm:$0xf]
    %v4186 = vld [vmem:[%s4171 + $0x38] sm:$0xf]
    %v4187 = vld [vmem:[%s4171 + $0x3c] sm:$0xf]
    %v4188 = vld [vmem:[%s4171 + $0x40] sm:$0xf]
    %v4189 = vld [vmem:[%s4171 + $0x44] sm:$0xf]
    %v4190 = vld [vmem:[%s4171 + $0x48] sm:$0xf]
    %v4191 = vld [vmem:[%s4171 + $0x4c] sm:$0xf]
    %v4192 = vld [vmem:[%s4171 + $0x50] sm:$0xf]
    %v4193 = vld [vmem:[%s4171 + $0x54] sm:$0xf]
    %v4194 = vld [vmem:[%s4171 + $0x58] sm:$0xf]
    %v4195 = vld [vmem:[%s4171 + $0x5c] sm:$0xf]
    %v4196 = vld [vmem:[%s4171 + $0x60] sm:$0xf]
    %v4197 = vld [vmem:[%s4171 + $0x64] sm:$0xf]
    %v4198 = vld [vmem:[%s4171 + $0x68] sm:$0xf]
    %v4199 = vld [vmem:[%s4171 + $0x6c] sm:$0xf]
    %v4200 = vld [vmem:[%s4171 + $0x70] sm:$0xf]
    %v4201 = vld [vmem:[%s4171 + $0x74] sm:$0xf]
    %v4202 = vld [vmem:[%s4171 + $0x78] sm:$0xf]
    %v4203 = vld [vmem:[%s4171 + $0x7c] sm:$0xf]
    %v4204 = vld [vmem:[%s4171 + $0x80] sm:$0xf]
    %v4205 = vld [vmem:[%s4171 + $0x84] sm:$0xf]
    %v4206 = vld [vmem:[%s4171 + $0x88] sm:$0xf]
    %v4207 = vld [vmem:[%s4171 + $0x8c] sm:$0xf]
    %v4208 = vld [vmem:[%s4171 + $0x90] sm:$0xf]
    %v4209 = vld [vmem:[%s4171 + $0x94] sm:$0xf]
    %v4210 = vld [vmem:[%s4171 + $0x98] sm:$0xf]
    %v4211 = vld [vmem:[%s4171 + $0x9c] sm:$0xf]
    %v4212 = vld [vmem:[%s4171 + $0xa0] sm:$0xf]
    %v4213 = vld [vmem:[%s4171 + $0xa4] sm:$0xf]
    %v4214 = vld [vmem:[%s4171 + $0xa8] sm:$0xf]
    %v4215 = vld [vmem:[%s4171 + $0xac] sm:$0xf]
    %v4216 = vld [vmem:[%s4171 + $0xb0] sm:$0xf]
    %v4217 = vld [vmem:[%s4171 + $0xb4] sm:$0xf]
    %v4218 = vld [vmem:[%s4171 + $0xb8] sm:$0xf]
    %v4219 = vld [vmem:[%s4171 + $0xbc] sm:$0xf]
    %v4220 = vld [vmem:[%s4171 + $0xc0] sm:$0xf]
    %v4221 = vld [vmem:[%s4171 + $0xc4] sm:$0xf]
    %v4222 = vld [vmem:[%s4171 + $0xc8] sm:$0xf]
    %v4223 = vld [vmem:[%s4171 + $0xcc] sm:$0xf]
    %v4224 = vld [vmem:[%s4171 + $0xd0] sm:$0xf]
    %v4225 = vld [vmem:[%s4171 + $0xd4] sm:$0xf]
    %v4226 = vld [vmem:[%s4171 + $0xd8] sm:$0xf]
    %v4227 = vld [vmem:[%s4171 + $0xdc] sm:$0xf]
    %v4228 = vld [vmem:[%s4171 + $0xe0] sm:$0xf]
    %v4229 = vld [vmem:[%s4171 + $0xe4] sm:$0xf]
    %v4230 = vld [vmem:[%s4171 + $0xe8] sm:$0xf]
    %v4231 = vld [vmem:[%s4171 + $0xec] sm:$0xf]
    %v4232 = vld [vmem:[%s4171 + $0xf0] sm:$0xf]
    %v4233 = vld [vmem:[%s4171 + $0xf4] sm:$0xf]
    %v4234 = vld [vmem:[%s4171 + $0xf8] sm:$0xf]
    %v4235 = vld [vmem:[%s4171 + $0xfc] sm:$0xf]
    %v4236 = vld [vmem:[%s4171 + $0x100] sm:$0xf]
    %v4237 = vld [vmem:[%s4171 + $0x104] sm:$0xf]
    %v4238 = vld [vmem:[%s4171 + $0x108] sm:$0xf]
    %v4239 = vld [vmem:[%s4171 + $0x10c] sm:$0xf]
    %v4240 = vld [vmem:[%s4171 + $0x110] sm:$0xf]
    %v4241 = vld [vmem:[%s4171 + $0x114] sm:$0xf]
    %v4242 = vld [vmem:[%s4171 + $0x118] sm:$0xf]
    %v4243 = vld [vmem:[%s4171 + $0x11c] sm:$0xf]
    %v4244 = vld [vmem:[%s4171 + $0x120] sm:$0xf]
    %v4245 = vld [vmem:[%s4171 + $0x124] sm:$0xf]
    %v4246 = vld [vmem:[%s4171 + $0x128] sm:$0xf]
    %v4247 = vld [vmem:[%s4171 + $0x12c] sm:$0xf]
    %v4248 = vld [vmem:[%s4171 + $0x130] sm:$0xf]
    %v4249 = vld [vmem:[%s4171 + $0x134] sm:$0xf]
    %v4250 = vld [vmem:[%s4171 + $0x138] sm:$0xf]
    %v4251 = vld [vmem:[%s4171 + $0x13c] sm:$0xf]
    %v4252 = vld [vmem:[%s4171 + $0x140] sm:$0xf]
    %v4253 = vld [vmem:[%s4171 + $0x144] sm:$0xf]
    %v4254 = vld [vmem:[%s4171 + $0x148] sm:$0xf]
    %v4255 = vld [vmem:[%s4171 + $0x14c] sm:$0xf]
    %v4256 = vld [vmem:[%s4171 + $0x150] sm:$0xf]
    %v4257 = vld [vmem:[%s4171 + $0x154] sm:$0xf]
    %v4258 = vld [vmem:[%s4171 + $0x158] sm:$0xf]
    %v4259 = vld [vmem:[%s4171 + $0x15c] sm:$0xf]
    %v4260 = vld [vmem:[%s4171 + $0x160] sm:$0xf]
    %v4261 = vld [vmem:[%s4171 + $0x164] sm:$0xf]
    %v4262 = vld [vmem:[%s4171 + $0x168] sm:$0xf]
    %v4263 = vld [vmem:[%s4171 + $0x16c] sm:$0xf]
    %v4264 = vld [vmem:[%s4171 + $0x170] sm:$0xf]
    %v4265 = vld [vmem:[%s4171 + $0x174] sm:$0xf]
    %v4266 = vld [vmem:[%s4171 + $0x178] sm:$0xf]
    %v4267 = vld [vmem:[%s4171 + $0x17c] sm:$0xf]
    %v4268 = vld [vmem:[%s4171 + $0x180] sm:$0xf]
    %v4269 = vld [vmem:[%s4171 + $0x184] sm:$0xf]
    %v4270 = vld [vmem:[%s4171 + $0x188] sm:$0xf]
    %v4271 = vld [vmem:[%s4171 + $0x18c] sm:$0xf]
    %v4272 = vld [vmem:[%s4171 + $0x190] sm:$0xf]
    %v4273 = vld [vmem:[%s4171 + $0x194] sm:$0xf]
    %v4274 = vld [vmem:[%s4171 + $0x198] sm:$0xf]
    %v4275 = vld [vmem:[%s4171 + $0x19c] sm:$0xf]
    %v4276 = vld [vmem:[%s4171 + $0x1a0] sm:$0xf]
    %v4277 = vld [vmem:[%s4171 + $0x1a4] sm:$0xf]
    %v4278 = vld [vmem:[%s4171 + $0x1a8] sm:$0xf]
    %v4279 = vld [vmem:[%s4171 + $0x1ac] sm:$0xf]
    %v4280 = vld [vmem:[%s4171 + $0x1b0] sm:$0xf]
    %v4281 = vld [vmem:[%s4171 + $0x1b4] sm:$0xf]
    %v4282 = vld [vmem:[%s4171 + $0x1b8] sm:$0xf]
    %v4283 = vld [vmem:[%s4171 + $0x1bc] sm:$0xf]
    %v4284 = vld [vmem:[%s4171 + $0x1c0] sm:$0xf]
    %v4285 = vld [vmem:[%s4171 + $0x1c4] sm:$0xf]
    %v4286 = vld [vmem:[%s4171 + $0x1c8] sm:$0xf]
    %v4287 = vld [vmem:[%s4171 + $0x1cc] sm:$0xf]
    %v4288 = vld [vmem:[%s4171 + $0x1d0] sm:$0xf]
    %v4289 = vld [vmem:[%s4171 + $0x1d4] sm:$0xf]
    %v4290 = vld [vmem:[%s4171 + $0x1d8] sm:$0xf]
    %v4291 = vld [vmem:[%s4171 + $0x1dc] sm:$0xf]
    %v4292 = vld [vmem:[%s4171 + $0x1e0] sm:$0xf]
    %v4293 = vld [vmem:[%s4171 + $0x1e4] sm:$0xf]
    %v4294 = vld [vmem:[%s4171 + $0x1e8] sm:$0xf]
    %v4295 = vld [vmem:[%s4171 + $0x1ec] sm:$0xf]
    %v4296 = vld [vmem:[%s4171 + $0x1f0] sm:$0xf]
    %v4297 = vld [vmem:[%s4171 + $0x1f4] sm:$0xf]
    %v4298 = vld [vmem:[%s4171 + $0x1f8] sm:$0xf]
    %v4299 = vld [vmem:[%s4171 + $0x1fc] sm:$0xf]
    %v4300 = vld [vmem:[%s4171 + $0x200] sm:$0xf]
    %v4301 = vld [vmem:[%s4171 + $0x204] sm:$0xf]
    %v4302 = vld [vmem:[%s4171 + $0x208] sm:$0xf]
    %v4303 = vld [vmem:[%s4171 + $0x20c] sm:$0xf]
    %v4304 = vld [vmem:[%s4171 + $0x210] sm:$0xf]
    %v4305 = vld [vmem:[%s4171 + $0x214] sm:$0xf]
    %v4306 = vld [vmem:[%s4171 + $0x218] sm:$0xf]
    %v4307 = vld [vmem:[%s4171 + $0x21c] sm:$0xf]
    %v4308 = vld [vmem:[%s4171 + $0x220] sm:$0xf]
    %v4309 = vld [vmem:[%s4171 + $0x224] sm:$0xf]
    %v4310 = vld [vmem:[%s4171 + $0x228] sm:$0xf]
    %v4311 = vld [vmem:[%s4171 + $0x22c] sm:$0xf]
    %v4312 = vld [vmem:[%s4171 + $0x230] sm:$0xf]
    %v4313 = vld [vmem:[%s4171 + $0x234] sm:$0xf]
    %v4314 = vld [vmem:[%s4171 + $0x238] sm:$0xf]
    %v4315 = vld [vmem:[%s4171 + $0x23c] sm:$0xf]
    %v4316 = vld [vmem:[%s4171 + $0x240] sm:$0xf]
    %v4317 = vld [vmem:[%s4171 + $0x244] sm:$0xf]
    %v4318 = vld [vmem:[%s4171 + $0x248] sm:$0xf]
    %v4319 = vld [vmem:[%s4171 + $0x24c] sm:$0xf]
    %v4320 = vld [vmem:[%s4171 + $0x250] sm:$0xf]
    %v4321 = vld [vmem:[%s4171 + $0x254] sm:$0xf]
    %v4322 = vld [vmem:[%s4171 + $0x258] sm:$0xf]
    %v4323 = vld [vmem:[%s4171 + $0x25c] sm:$0xf]
    %v4324 = vld [vmem:[%s4171 + $0x260] sm:$0xf]
    %v4325 = vld [vmem:[%s4171 + $0x264] sm:$0xf]
    %v4326 = vld [vmem:[%s4171 + $0x268] sm:$0xf]
    %v4327 = vld [vmem:[%s4171 + $0x26c] sm:$0xf]
    %v4328 = vld [vmem:[%s4171 + $0x270] sm:$0xf]
    %v4329 = vld [vmem:[%s4171 + $0x274] sm:$0xf]
    %v4330 = vld [vmem:[%s4171 + $0x278] sm:$0xf]
    %v4331 = vld [vmem:[%s4171 + $0x27c] sm:$0xf]
    %v4332 = vld [vmem:[%s4171 + $0x280] sm:$0xf]
    %v4333 = vld [vmem:[%s4171 + $0x284] sm:$0xf]
    %v4334 = vld [vmem:[%s4171 + $0x288] sm:$0xf]
    %v4335 = vld [vmem:[%s4171 + $0x28c] sm:$0xf]
    %v4336 = vld [vmem:[%s4171 + $0x290] sm:$0xf]
    %v4337 = vld [vmem:[%s4171 + $0x294] sm:$0xf]
    %v4338 = vld [vmem:[%s4171 + $0x298] sm:$0xf]
    %v4339 = vld [vmem:[%s4171 + $0x29c] sm:$0xf]
    %v4340 = vld [vmem:[%s4171 + $0x2a0] sm:$0xf]
    %v4341 = vld [vmem:[%s4171 + $0x2a4] sm:$0xf]
    %v4342 = vld [vmem:[%s4171 + $0x2a8] sm:$0xf]
    %v4343 = vld [vmem:[%s4171 + $0x2ac] sm:$0xf]
    %v4344 = vld [vmem:[%s4171 + $0x2b0] sm:$0xf]
    %v4345 = vld [vmem:[%s4171 + $0x2b4] sm:$0xf]
    %v4346 = vld [vmem:[%s4171 + $0x2b8] sm:$0xf]
    %v4347 = vld [vmem:[%s4171 + $0x2bc] sm:$0xf]
    %v4348 = vld [vmem:[%s4171 + $0x2c0] sm:$0xf]
    %v4349 = vld [vmem:[%s4171 + $0x2c4] sm:$0xf]
    %v4350 = vld [vmem:[%s4171 + $0x2c8] sm:$0xf]
    %v4351 = vld [vmem:[%s4171 + $0x2cc] sm:$0xf]
    %v4352 = vld [vmem:[%s4171 + $0x2d0] sm:$0xf]
    %v4353 = vld [vmem:[%s4171 + $0x2d4] sm:$0xf]
    %v4354 = vld [vmem:[%s4171 + $0x2d8] sm:$0xf]
    %v4355 = vld [vmem:[%s4171 + $0x2dc] sm:$0xf]
    %v4356 = vld [vmem:[%s4171 + $0x2e0] sm:$0xf]
    %v4357 = vld [vmem:[%s4171 + $0x2e4] sm:$0xf]
    %v4358 = vld [vmem:[%s4171 + $0x2e8] sm:$0xf]
    %v4359 = vld [vmem:[%s4171 + $0x2ec] sm:$0xf]
    %v4360 = vld [vmem:[%s4171 + $0x2f0] sm:$0xf]
    %v4361 = vld [vmem:[%s4171 + $0x2f4] sm:$0xf]
    %v4362 = vld [vmem:[%s4171 + $0x2f8] sm:$0xf]
    %v4363 = vld [vmem:[%s4171 + $0x2fc] sm:$0xf]
    %v4364 = vld [vmem:[%s4171 + $0x300] sm:$0xf]
    %v4365 = vld [vmem:[%s4171 + $0x304] sm:$0xf]
    %v4366 = vld [vmem:[%s4171 + $0x308] sm:$0xf]
    %v4367 = vld [vmem:[%s4171 + $0x30c] sm:$0xf]
    %v4368 = vld [vmem:[%s4171 + $0x310] sm:$0xf]
    %v4369 = vld [vmem:[%s4171 + $0x314] sm:$0xf]
    %v4370 = vld [vmem:[%s4171 + $0x318] sm:$0xf]
    %v4371 = vld [vmem:[%s4171 + $0x31c] sm:$0xf]
    %v4372 = vld [vmem:[%s4171 + $0x320] sm:$0xf]
    %v4373 = vld [vmem:[%s4171 + $0x324] sm:$0xf]
    %v4374 = vld [vmem:[%s4171 + $0x328] sm:$0xf]
    %v4375 = vld [vmem:[%s4171 + $0x32c] sm:$0xf]
    %v4376 = vld [vmem:[%s4171 + $0x330] sm:$0xf]
    %v4377 = vld [vmem:[%s4171 + $0x334] sm:$0xf]
    %v4378 = vld [vmem:[%s4171 + $0x338] sm:$0xf]
    %v4379 = vld [vmem:[%s4171 + $0x33c] sm:$0xf]
    %v4380 = vld [vmem:[%s4171 + $0x340] sm:$0xf]
    %v4381 = vld [vmem:[%s4171 + $0x344] sm:$0xf]
    %v4382 = vld [vmem:[%s4171 + $0x348] sm:$0xf]
    %v4383 = vld [vmem:[%s4171 + $0x34c] sm:$0xf]
    %v4384 = vld [vmem:[%s4171 + $0x350] sm:$0xf]
    %v4385 = vld [vmem:[%s4171 + $0x354] sm:$0xf]
    %v4386 = vld [vmem:[%s4171 + $0x358] sm:$0xf]
    %v4387 = vld [vmem:[%s4171 + $0x35c] sm:$0xf]
    %v4388 = vld [vmem:[%s4171 + $0x360] sm:$0xf]
    %v4389 = vld [vmem:[%s4171 + $0x364] sm:$0xf]
    %v4390 = vld [vmem:[%s4171 + $0x368] sm:$0xf]
    %v4391 = vld [vmem:[%s4171 + $0x36c] sm:$0xf]
    %v4392 = vld [vmem:[%s4171 + $0x370] sm:$0xf]
    %v4393 = vld [vmem:[%s4171 + $0x374] sm:$0xf]
    %v4394 = vld [vmem:[%s4171 + $0x378] sm:$0xf]
    %v4395 = vld [vmem:[%s4171 + $0x37c] sm:$0xf]
    %v4396 = vld [vmem:[%s4171 + $0x380] sm:$0xf]
    %v4397 = vld [vmem:[%s4171 + $0x384] sm:$0xf]
    %v4398 = vld [vmem:[%s4171 + $0x388] sm:$0xf]
    %v4399 = vld [vmem:[%s4171 + $0x38c] sm:$0xf]
    %v4400 = vld [vmem:[%s4171 + $0x390] sm:$0xf]
    %v4401 = vld [vmem:[%s4171 + $0x394] sm:$0xf]
    %v4402 = vld [vmem:[%s4171 + $0x398] sm:$0xf]
    %v4403 = vld [vmem:[%s4171 + $0x39c] sm:$0xf]
    %v4404 = vld [vmem:[%s4171 + $0x3a0] sm:$0xf]
    %v4405 = vld [vmem:[%s4171 + $0x3a4] sm:$0xf]
    %v4406 = vld [vmem:[%s4171 + $0x3a8] sm:$0xf]
    %v4407 = vld [vmem:[%s4171 + $0x3ac] sm:$0xf]
    %v4408 = vld [vmem:[%s4171 + $0x3b0] sm:$0xf]
    %v4409 = vld [vmem:[%s4171 + $0x3b4] sm:$0xf]
    %v4410 = vld [vmem:[%s4171 + $0x3b8] sm:$0xf]
    %v4411 = vld [vmem:[%s4171 + $0x3bc] sm:$0xf]
    %v4412 = vld [vmem:[%s4171 + $0x3c0] sm:$0xf]
    %v4413 = vld [vmem:[%s4171 + $0x3c4] sm:$0xf]
    %v4414 = vld [vmem:[%s4171 + $0x3c8] sm:$0xf]
    %v4415 = vld [vmem:[%s4171 + $0x3cc] sm:$0xf]
    %v4416 = vld [vmem:[%s4171 + $0x3d0] sm:$0xf]
    %v4417 = vld [vmem:[%s4171 + $0x3d4] sm:$0xf]
    %v4418 = vld [vmem:[%s4171 + $0x3d8] sm:$0xf]
    %v4419 = vld [vmem:[%s4171 + $0x3dc] sm:$0xf]
    %v4420 = vld [vmem:[%s4171 + $0x3e0] sm:$0xf]
    %v4421 = vld [vmem:[%s4171 + $0x3e4] sm:$0xf]
    %v4422 = vld [vmem:[%s4171 + $0x3e8] sm:$0xf]
    %v4423 = vld [vmem:[%s4171 + $0x3ec] sm:$0xf]
    %v4424 = vld [vmem:[%s4171 + $0x3f0] sm:$0xf]
    %v4425 = vld [vmem:[%s4171 + $0x3f4] sm:$0xf]
    %v4426 = vld [vmem:[%s4171 + $0x3f8] sm:$0xf]
    %v4427 = vld [vmem:[%s4171 + $0x3fc] sm:$0xf]
    %v4428 = vlaneseq
    %v4429 = vshrl.u32 %v4428, 7
    %v4430 = vsub.s32 6, %v4429
    %v4431 = vrot.slane %v2828, %v4430
    %v4688 = vunpack.c.l.b16 %v4172
    %v4689 = vunpack.c.l.b16 %v4173
    %v4690 = vunpack.c.l.b16 %v4174
    %v4691 = vunpack.c.l.b16 %v4175
    %v4692 = vunpack.c.l.b16 %v4176
    %v4693 = vunpack.c.l.b16 %v4177
    %v4694 = vunpack.c.l.b16 %v4178
    %v4695 = vunpack.c.l.b16 %v4179
    %v4696 = vunpack.c.l.b16 %v4180
    %v4697 = vunpack.c.l.b16 %v4181
    %v4698 = vunpack.c.l.b16 %v4182
    %v4699 = vunpack.c.l.b16 %v4183
    %v4700 = vunpack.c.l.b16 %v4184
    %v4701 = vunpack.c.l.b16 %v4185
    %v4702 = vunpack.c.l.b16 %v4186
    %v4703 = vunpack.c.l.b16 %v4187
    %v4704 = vunpack.c.l.b16 %v4188
    %v4705 = vunpack.c.l.b16 %v4189
    %v4706 = vunpack.c.l.b16 %v4190
    %v4707 = vunpack.c.l.b16 %v4191
    %v4708 = vunpack.c.l.b16 %v4192
    %v4709 = vunpack.c.l.b16 %v4193
    %v4710 = vunpack.c.l.b16 %v4194
    %v4711 = vunpack.c.l.b16 %v4195
    %v4712 = vunpack.c.l.b16 %v4196
    %v4713 = vunpack.c.l.b16 %v4197
    %v4714 = vunpack.c.l.b16 %v4198
    %v4715 = vunpack.c.l.b16 %v4199
    %v4716 = vunpack.c.l.b16 %v4200
    %v4717 = vunpack.c.l.b16 %v4201
    %v4718 = vunpack.c.l.b16 %v4202
    %v4719 = vunpack.c.l.b16 %v4203
    %v4720 = vunpack.c.l.b16 %v4204
    %v4721 = vunpack.c.l.b16 %v4205
    %v4722 = vunpack.c.l.b16 %v4206
    %v4723 = vunpack.c.l.b16 %v4207
    %v4724 = vunpack.c.l.b16 %v4208
    %v4725 = vunpack.c.l.b16 %v4209
    %v4726 = vunpack.c.l.b16 %v4210
    %v4727 = vunpack.c.l.b16 %v4211
    %v4728 = vunpack.c.l.b16 %v4212
    %v4729 = vunpack.c.l.b16 %v4213
    %v4730 = vunpack.c.l.b16 %v4214
    %v4731 = vunpack.c.l.b16 %v4215
    %v4732 = vunpack.c.l.b16 %v4216
    %v4733 = vunpack.c.l.b16 %v4217
    %v4734 = vunpack.c.l.b16 %v4218
    %v4735 = vunpack.c.l.b16 %v4219
    %v4736 = vunpack.c.l.b16 %v4220
    %v4737 = vunpack.c.l.b16 %v4221
    %v4738 = vunpack.c.l.b16 %v4222
    %v4739 = vunpack.c.l.b16 %v4223
    %v4740 = vunpack.c.l.b16 %v4224
    %v4741 = vunpack.c.l.b16 %v4225
    %v4742 = vunpack.c.l.b16 %v4226
    %v4743 = vunpack.c.l.b16 %v4227
    %v4744 = vunpack.c.l.b16 %v4228
    %v4745 = vunpack.c.l.b16 %v4229
    %v4746 = vunpack.c.l.b16 %v4230
    %v4747 = vunpack.c.l.b16 %v4231
    %v4748 = vunpack.c.l.b16 %v4232
    %v4749 = vunpack.c.l.b16 %v4233
    %v4750 = vunpack.c.l.b16 %v4234
    %v4751 = vunpack.c.l.b16 %v4235
    %v4752 = vunpack.c.l.b16 %v4236
    %v4753 = vunpack.c.l.b16 %v4237
    %v4754 = vunpack.c.l.b16 %v4238
    %v4755 = vunpack.c.l.b16 %v4239
    %v4756 = vunpack.c.l.b16 %v4240
    %v4757 = vunpack.c.l.b16 %v4241
    %v4758 = vunpack.c.l.b16 %v4242
    %v4759 = vunpack.c.l.b16 %v4243
    %v4760 = vunpack.c.l.b16 %v4244
    %v4761 = vunpack.c.l.b16 %v4245
    %v4762 = vunpack.c.l.b16 %v4246
    %v4763 = vunpack.c.l.b16 %v4247
    %v4764 = vunpack.c.l.b16 %v4248
    %v4765 = vunpack.c.l.b16 %v4249
    %v4766 = vunpack.c.l.b16 %v4250
    %v4767 = vunpack.c.l.b16 %v4251
    %v4768 = vunpack.c.l.b16 %v4252
    %v4769 = vunpack.c.l.b16 %v4253
    %v4770 = vunpack.c.l.b16 %v4254
    %v4771 = vunpack.c.l.b16 %v4255
    %v4772 = vunpack.c.l.b16 %v4256
    %v4773 = vunpack.c.l.b16 %v4257
    %v4774 = vunpack.c.l.b16 %v4258
    %v4775 = vunpack.c.l.b16 %v4259
    %v4776 = vunpack.c.l.b16 %v4260
    %v4777 = vunpack.c.l.b16 %v4261
    %v4778 = vunpack.c.l.b16 %v4262
    %v4779 = vunpack.c.l.b16 %v4263
    %v4780 = vunpack.c.l.b16 %v4264
    %v4781 = vunpack.c.l.b16 %v4265
    %v4782 = vunpack.c.l.b16 %v4266
    %v4783 = vunpack.c.l.b16 %v4267
    %v4784 = vunpack.c.l.b16 %v4268
    %v4785 = vunpack.c.l.b16 %v4269
    %v4786 = vunpack.c.l.b16 %v4270
    %v4787 = vunpack.c.l.b16 %v4271
    %v4788 = vunpack.c.l.b16 %v4272
    %v4789 = vunpack.c.l.b16 %v4273
    %v4790 = vunpack.c.l.b16 %v4274
    %v4791 = vunpack.c.l.b16 %v4275
    %v4792 = vunpack.c.l.b16 %v4276
    %v4793 = vunpack.c.l.b16 %v4277
    %v4794 = vunpack.c.l.b16 %v4278
    %v4795 = vunpack.c.l.b16 %v4279
    %v4796 = vunpack.c.l.b16 %v4280
    %v4797 = vunpack.c.l.b16 %v4281
    %v4798 = vunpack.c.l.b16 %v4282
    %v4799 = vunpack.c.l.b16 %v4283
    %v4800 = vunpack.c.l.b16 %v4284
    %v4801 = vunpack.c.l.b16 %v4285
    %v4802 = vunpack.c.l.b16 %v4286
    %v4803 = vunpack.c.l.b16 %v4287
    %v4804 = vunpack.c.l.b16 %v4288
    %v4805 = vunpack.c.l.b16 %v4289
    %v4806 = vunpack.c.l.b16 %v4290
    %v4807 = vunpack.c.l.b16 %v4291
    %v4808 = vunpack.c.l.b16 %v4292
    %v4809 = vunpack.c.l.b16 %v4293
    %v4810 = vunpack.c.l.b16 %v4294
    %v4811 = vunpack.c.l.b16 %v4295
    %v4812 = vunpack.c.l.b16 %v4296
    %v4813 = vunpack.c.l.b16 %v4297
    %v4814 = vunpack.c.l.b16 %v4298
    %v4815 = vunpack.c.l.b16 %v4299
    %v4816 = vunpack.c.l.b16 %v4300
    %v4817 = vunpack.c.l.b16 %v4301
    %v4818 = vunpack.c.l.b16 %v4302
    %v4819 = vunpack.c.l.b16 %v4303
    %v4820 = vunpack.c.l.b16 %v4304
    %v4821 = vunpack.c.l.b16 %v4305
    %v4822 = vunpack.c.l.b16 %v4306
    %v4823 = vunpack.c.l.b16 %v4307
    %v4824 = vunpack.c.l.b16 %v4308
    %v4825 = vunpack.c.l.b16 %v4309
    %v4826 = vunpack.c.l.b16 %v4310
    %v4827 = vunpack.c.l.b16 %v4311
    %v4828 = vunpack.c.l.b16 %v4312
    %v4829 = vunpack.c.l.b16 %v4313
    %v4830 = vunpack.c.l.b16 %v4314
    %v4831 = vunpack.c.l.b16 %v4315
    %v4832 = vunpack.c.l.b16 %v4316
    %v4833 = vunpack.c.l.b16 %v4317
    %v4834 = vunpack.c.l.b16 %v4318
    %v4835 = vunpack.c.l.b16 %v4319
    %v4836 = vunpack.c.l.b16 %v4320
    %v4837 = vunpack.c.l.b16 %v4321
    %v4838 = vunpack.c.l.b16 %v4322
    %v4839 = vunpack.c.l.b16 %v4323
    %v4840 = vunpack.c.l.b16 %v4324
    %v4841 = vunpack.c.l.b16 %v4325
    %v4842 = vunpack.c.l.b16 %v4326
    %v4843 = vunpack.c.l.b16 %v4327
    %v4844 = vunpack.c.l.b16 %v4328
    %v4845 = vunpack.c.l.b16 %v4329
    %v4846 = vunpack.c.l.b16 %v4330
    %v4847 = vunpack.c.l.b16 %v4331
    %v4848 = vunpack.c.l.b16 %v4332
    %v4849 = vunpack.c.l.b16 %v4333
    %v4850 = vunpack.c.l.b16 %v4334
    %v4851 = vunpack.c.l.b16 %v4335
    %v4852 = vunpack.c.l.b16 %v4336
    %v4853 = vunpack.c.l.b16 %v4337
    %v4854 = vunpack.c.l.b16 %v4338
    %v4855 = vunpack.c.l.b16 %v4339
    %v4856 = vunpack.c.l.b16 %v4340
    %v4857 = vunpack.c.l.b16 %v4341
    %v4858 = vunpack.c.l.b16 %v4342
    %v4859 = vunpack.c.l.b16 %v4343
    %v4860 = vunpack.c.l.b16 %v4344
    %v4861 = vunpack.c.l.b16 %v4345
    %v4862 = vunpack.c.l.b16 %v4346
    %v4863 = vunpack.c.l.b16 %v4347
    %v4864 = vunpack.c.l.b16 %v4348
    %v4865 = vunpack.c.l.b16 %v4349
    %v4866 = vunpack.c.l.b16 %v4350
    %v4867 = vunpack.c.l.b16 %v4351
    %v4868 = vunpack.c.l.b16 %v4352
    %v4869 = vunpack.c.l.b16 %v4353
    %v4870 = vunpack.c.l.b16 %v4354
    %v4871 = vunpack.c.l.b16 %v4355
    %v4872 = vunpack.c.l.b16 %v4356
    %v4873 = vunpack.c.l.b16 %v4357
    %v4874 = vunpack.c.l.b16 %v4358
    %v4875 = vunpack.c.l.b16 %v4359
    %v4876 = vunpack.c.l.b16 %v4360
    %v4877 = vunpack.c.l.b16 %v4361
    %v4878 = vunpack.c.l.b16 %v4362
    %v4879 = vunpack.c.l.b16 %v4363
    %v4880 = vunpack.c.l.b16 %v4364
    %v4881 = vunpack.c.l.b16 %v4365
    %v4882 = vunpack.c.l.b16 %v4366
    %v4883 = vunpack.c.l.b16 %v4367
    %v4884 = vunpack.c.l.b16 %v4368
    %v4885 = vunpack.c.l.b16 %v4369
    %v4886 = vunpack.c.l.b16 %v4370
    %v4887 = vunpack.c.l.b16 %v4371
    %v4888 = vunpack.c.l.b16 %v4372
    %v4889 = vunpack.c.l.b16 %v4373
    %v4890 = vunpack.c.l.b16 %v4374
    %v4891 = vunpack.c.l.b16 %v4375
    %v4892 = vunpack.c.l.b16 %v4376
    %v4893 = vunpack.c.l.b16 %v4377
    %v4894 = vunpack.c.l.b16 %v4378
    %v4895 = vunpack.c.l.b16 %v4379
    %v4896 = vunpack.c.l.b16 %v4380
    %v4897 = vunpack.c.l.b16 %v4381
    %v4898 = vunpack.c.l.b16 %v4382
    %v4899 = vunpack.c.l.b16 %v4383
    %v4900 = vunpack.c.l.b16 %v4384
    %v4901 = vunpack.c.l.b16 %v4385
    %v4902 = vunpack.c.l.b16 %v4386
    %v4903 = vunpack.c.l.b16 %v4387
    %v4904 = vunpack.c.l.b16 %v4388
    %v4905 = vunpack.c.l.b16 %v4389
    %v4906 = vunpack.c.l.b16 %v4390
    %v4907 = vunpack.c.l.b16 %v4391
    %v4908 = vunpack.c.l.b16 %v4392
    %v4909 = vunpack.c.l.b16 %v4393
    %v4910 = vunpack.c.l.b16 %v4394
    %v4911 = vunpack.c.l.b16 %v4395
    %v4912 = vunpack.c.l.b16 %v4396
    %v4913 = vunpack.c.l.b16 %v4397
    %v4914 = vunpack.c.l.b16 %v4398
    %v4915 = vunpack.c.l.b16 %v4399
    %v4916 = vunpack.c.l.b16 %v4400
    %v4917 = vunpack.c.l.b16 %v4401
    %v4918 = vunpack.c.l.b16 %v4402
    %v4919 = vunpack.c.l.b16 %v4403
    %v4920 = vunpack.c.l.b16 %v4404
    %v4921 = vunpack.c.l.b16 %v4405
    %v4922 = vunpack.c.l.b16 %v4406
    %v4923 = vunpack.c.l.b16 %v4407
    %v4924 = vunpack.c.l.b16 %v4408
    %v4925 = vunpack.c.l.b16 %v4409
    %v4926 = vunpack.c.l.b16 %v4410
    %v4927 = vunpack.c.l.b16 %v4411
    %v4928 = vunpack.c.l.b16 %v4412
    %v4929 = vunpack.c.l.b16 %v4413
    %v4930 = vunpack.c.l.b16 %v4414
    %v4931 = vunpack.c.l.b16 %v4415
    %v4932 = vunpack.c.l.b16 %v4416
    %v4933 = vunpack.c.l.b16 %v4417
    %v4934 = vunpack.c.l.b16 %v4418
    %v4935 = vunpack.c.l.b16 %v4419
    %v4936 = vunpack.c.l.b16 %v4420
    %v4937 = vunpack.c.l.b16 %v4421
    %v4938 = vunpack.c.l.b16 %v4422
    %v4939 = vunpack.c.l.b16 %v4423
    %v4940 = vunpack.c.l.b16 %v4424
    %v4941 = vunpack.c.l.b16 %v4425
    %v4942 = vunpack.c.l.b16 %v4426
    %v4943 = vunpack.c.l.b16 %v4427
    %v4944 = vpack.c.b16 %v4689, %v4688
    %v4945 = vpack.c.b16 %v4691, %v4690
    %v4946 = vpack.c.b16 %v4693, %v4692
    %v4947 = vpack.c.b16 %v4695, %v4694
    %v4948 = vpack.c.b16 %v4697, %v4696
    %v4949 = vpack.c.b16 %v4699, %v4698
    %v4950 = vpack.c.b16 %v4701, %v4700
    %v4951 = vpack.c.b16 %v4703, %v4702
    %v4952 = vpack.c.b16 %v4705, %v4704
    %v4953 = vpack.c.b16 %v4707, %v4706
    %v4954 = vpack.c.b16 %v4709, %v4708
    %v4955 = vpack.c.b16 %v4711, %v4710
    %v4956 = vpack.c.b16 %v4713, %v4712
    %v4957 = vpack.c.b16 %v4715, %v4714
    %v4958 = vpack.c.b16 %v4717, %v4716
    %v4959 = vpack.c.b16 %v4719, %v4718
    %v4960 = vpack.c.b16 %v4721, %v4720
    %v4961 = vpack.c.b16 %v4723, %v4722
    %v4962 = vpack.c.b16 %v4725, %v4724
    %v4963 = vpack.c.b16 %v4727, %v4726
    %v4964 = vpack.c.b16 %v4729, %v4728
    %v4965 = vpack.c.b16 %v4731, %v4730
    %v4966 = vpack.c.b16 %v4733, %v4732
    %v4967 = vpack.c.b16 %v4735, %v4734
    %v4968 = vpack.c.b16 %v4737, %v4736
    %v4969 = vpack.c.b16 %v4739, %v4738
    %v4970 = vpack.c.b16 %v4741, %v4740
    %v4971 = vpack.c.b16 %v4743, %v4742
    %v4972 = vpack.c.b16 %v4745, %v4744
    %v4973 = vpack.c.b16 %v4747, %v4746
    %v4974 = vpack.c.b16 %v4749, %v4748
    %v4975 = vpack.c.b16 %v4751, %v4750
    %v4976 = vpack.c.b16 %v4753, %v4752
    %v4977 = vpack.c.b16 %v4755, %v4754
    %v4978 = vpack.c.b16 %v4757, %v4756
    %v4979 = vpack.c.b16 %v4759, %v4758
    %v4980 = vpack.c.b16 %v4761, %v4760
    %v4981 = vpack.c.b16 %v4763, %v4762
    %v4982 = vpack.c.b16 %v4765, %v4764
    %v4983 = vpack.c.b16 %v4767, %v4766
    %v4984 = vpack.c.b16 %v4769, %v4768
    %v4985 = vpack.c.b16 %v4771, %v4770
    %v4986 = vpack.c.b16 %v4773, %v4772
    %v4987 = vpack.c.b16 %v4775, %v4774
    %v4988 = vpack.c.b16 %v4777, %v4776
    %v4989 = vpack.c.b16 %v4779, %v4778
    %v4990 = vpack.c.b16 %v4781, %v4780
    %v4991 = vpack.c.b16 %v4783, %v4782
    %v4992 = vpack.c.b16 %v4785, %v4784
    %v4993 = vpack.c.b16 %v4787, %v4786
    %v4994 = vpack.c.b16 %v4789, %v4788
    %v4995 = vpack.c.b16 %v4791, %v4790
    %v4996 = vpack.c.b16 %v4793, %v4792
    %v4997 = vpack.c.b16 %v4795, %v4794
    %v4998 = vpack.c.b16 %v4797, %v4796
    %v4999 = vpack.c.b16 %v4799, %v4798
    %v5000 = vpack.c.b16 %v4801, %v4800
    %v5001 = vpack.c.b16 %v4803, %v4802
    %v5002 = vpack.c.b16 %v4805, %v4804
    %v5003 = vpack.c.b16 %v4807, %v4806
    %v5004 = vpack.c.b16 %v4809, %v4808
    %v5005 = vpack.c.b16 %v4811, %v4810
    %v5006 = vpack.c.b16 %v4813, %v4812
    %v5007 = vpack.c.b16 %v4815, %v4814
    %v5008 = vpack.c.b16 %v4817, %v4816
    %v5009 = vpack.c.b16 %v4819, %v4818
    %v5010 = vpack.c.b16 %v4821, %v4820
    %v5011 = vpack.c.b16 %v4823, %v4822
    %v5012 = vpack.c.b16 %v4825, %v4824
    %v5013 = vpack.c.b16 %v4827, %v4826
    %v5014 = vpack.c.b16 %v4829, %v4828
    %v5015 = vpack.c.b16 %v4831, %v4830
    %v5016 = vpack.c.b16 %v4833, %v4832
    %v5017 = vpack.c.b16 %v4835, %v4834
    %v5018 = vpack.c.b16 %v4837, %v4836
    %v5019 = vpack.c.b16 %v4839, %v4838
    %v5020 = vpack.c.b16 %v4841, %v4840
    %v5021 = vpack.c.b16 %v4843, %v4842
    %v5022 = vpack.c.b16 %v4845, %v4844
    %v5023 = vpack.c.b16 %v4847, %v4846
    %v5024 = vpack.c.b16 %v4849, %v4848
    %v5025 = vpack.c.b16 %v4851, %v4850
    %v5026 = vpack.c.b16 %v4853, %v4852
    %v5027 = vpack.c.b16 %v4855, %v4854
    %v5028 = vpack.c.b16 %v4857, %v4856
    %v5029 = vpack.c.b16 %v4859, %v4858
    %v5030 = vpack.c.b16 %v4861, %v4860
    %v5031 = vpack.c.b16 %v4863, %v4862
    %v5032 = vpack.c.b16 %v4865, %v4864
    %v5033 = vpack.c.b16 %v4867, %v4866
    %v5034 = vpack.c.b16 %v4869, %v4868
    %v5035 = vpack.c.b16 %v4871, %v4870
    %v5036 = vpack.c.b16 %v4873, %v4872
    %v5037 = vpack.c.b16 %v4875, %v4874
    %v5038 = vpack.c.b16 %v4877, %v4876
    %v5039 = vpack.c.b16 %v4879, %v4878
    %v5040 = vpack.c.b16 %v4881, %v4880
    %v5041 = vpack.c.b16 %v4883, %v4882
    %v5042 = vpack.c.b16 %v4885, %v4884
    %v5043 = vpack.c.b16 %v4887, %v4886
    %v5044 = vpack.c.b16 %v4889, %v4888
    %v5045 = vpack.c.b16 %v4891, %v4890
    %v5046 = vpack.c.b16 %v4893, %v4892
    %v5047 = vpack.c.b16 %v4895, %v4894
    %v5048 = vpack.c.b16 %v4897, %v4896
    %v5049 = vpack.c.b16 %v4899, %v4898
    %v5050 = vpack.c.b16 %v4901, %v4900
    %v5051 = vpack.c.b16 %v4903, %v4902
    %v5052 = vpack.c.b16 %v4905, %v4904
    %v5053 = vpack.c.b16 %v4907, %v4906
    %v5054 = vpack.c.b16 %v4909, %v4908
    %v5055 = vpack.c.b16 %v4911, %v4910
    %v5056 = vpack.c.b16 %v4913, %v4912
    %v5057 = vpack.c.b16 %v4915, %v4914
    %v5058 = vpack.c.b16 %v4917, %v4916
    %v5059 = vpack.c.b16 %v4919, %v4918
    %v5060 = vpack.c.b16 %v4921, %v4920
    %v5061 = vpack.c.b16 %v4923, %v4922
    %v5062 = vpack.c.b16 %v4925, %v4924
    %v5063 = vpack.c.b16 %v4927, %v4926
    %v5064 = vpack.c.b16 %v4929, %v4928
    %v5065 = vpack.c.b16 %v4931, %v4930
    %v5066 = vpack.c.b16 %v4933, %v4932
    %v5067 = vpack.c.b16 %v4935, %v4934
    %v5068 = vpack.c.b16 %v4937, %v4936
    %v5069 = vpack.c.b16 %v4939, %v4938
    %v5070 = vpack.c.b16 %v4941, %v4940
    %v5071 = vpack.c.b16 %v4943, %v4942
    %5200 = vmatprep.subr.bf16.mxu0 0
    %5201 = vmatpush1.bf16.msra.mxu0 %v4944
    %5202 = vmatprep.subr.bf16.mxu0 0
    %5203 = vmatpush1.bf16.msra.mxu0 %v4945
    %5204 = vmatprep.subr.bf16.mxu0 0
    %5205 = vmatpush1.bf16.msra.mxu0 %v4946
    %5206 = vmatprep.subr.bf16.mxu0 0
    %5207 = vmatpush1.bf16.msra.mxu0 %v4947
    %5208 = vmatprep.subr.bf16.mxu0 0
    %5209 = vmatpush1.bf16.msra.mxu0 %v4948
    %5210 = vmatprep.subr.bf16.mxu0 0
    %5211 = vmatpush1.bf16.msra.mxu0 %v4949
    %5212 = vmatprep.subr.bf16.mxu0 0
    %5213 = vmatpush1.bf16.msra.mxu0 %v4950
    %5214 = vmatprep.subr.bf16.mxu0 0
    %5215 = vmatpush1.bf16.msra.mxu0 %v4951
    %5216 = vmatprep.subr.bf16.mxu0 0
    %5217 = vmatpush1.bf16.msra.mxu0 %v4952
    %5218 = vmatprep.subr.bf16.mxu0 0
    %5219 = vmatpush1.bf16.msra.mxu0 %v4953
    %5220 = vmatprep.subr.bf16.mxu0 0
    %5221 = vmatpush1.bf16.msra.mxu0 %v4954
    %5222 = vmatprep.subr.bf16.mxu0 0
    %5223 = vmatpush1.bf16.msra.mxu0 %v4955
    %5224 = vmatprep.subr.bf16.mxu0 0
    %5225 = vmatpush1.bf16.msra.mxu0 %v4956
    %5226 = vmatprep.subr.bf16.mxu0 0
    %5227 = vmatpush1.bf16.msra.mxu0 %v4957
    %5228 = vmatprep.subr.bf16.mxu0 0
    %5229 = vmatpush1.bf16.msra.mxu0 %v4958
    %5230 = vmatprep.subr.bf16.mxu0 0
    %5231 = vmatpush1.bf16.msra.mxu0 %v4959
    %5232 = vmatprep.mubr.bf16.mxu0 %v4156
    %5233 = vmatmul.mubr.bf16.gmra.mrb[0].mxu0 %v4155
    %v5234 = vpop.f32.mrb[0].mxu0
    %v5235 = vadd.f32 %v4431, %v5234
    %v5236 = vpop.f32.mrb[0].mxu0
    %v5237 = vpop.f32.mrb[0].mxu0
    %v5238 = vadd.f32 %v4431, %v5237
    %v5239 = vpop.f32.mrb[0].mxu0
    %5240 = vdwg.mxu0
    %5241 = vmatprep.subr.bf16.mxu0 0
    %5242 = vmatpush1.bf16.msra.mxu0 %v4960
    %5243 = vmatprep.subr.bf16.mxu0 0
    %5244 = vmatpush1.bf16.msra.mxu0 %v4961
    %5245 = vmatprep.subr.bf16.mxu0 0
    %5246 = vmatpush1.bf16.msra.mxu0 %v4962
    %5247 = vmatprep.subr.bf16.mxu0 0
    %5248 = vmatpush1.bf16.msra.mxu0 %v4963
    %5249 = vmatprep.subr.bf16.mxu0 0
    %5250 = vmatpush1.bf16.msra.mxu0 %v4964
    %5251 = vmatprep.subr.bf16.mxu0 0
    %5252 = vmatpush1.bf16.msra.mxu0 %v4965
    %5253 = vmatprep.subr.bf16.mxu0 0
    %5254 = vmatpush1.bf16.msra.mxu0 %v4966
    %5255 = vmatprep.subr.bf16.mxu0 0
    %5256 = vmatpush1.bf16.msra.mxu0 %v4967
    %5257 = vmatprep.subr.bf16.mxu0 0
    %5258 = vmatpush1.bf16.msra.mxu0 %v4968
    %5259 = vmatprep.subr.bf16.mxu0 0
    %5260 = vmatpush1.bf16.msra.mxu0 %v4969
    %5261 = vmatprep.subr.bf16.mxu0 0
    %5262 = vmatpush1.bf16.msra.mxu0 %v4970
    %5263 = vmatprep.subr.bf16.mxu0 0
    %5264 = vmatpush1.bf16.msra.mxu0 %v4971
    %5265 = vmatprep.subr.bf16.mxu0 0
    %5266 = vmatpush1.bf16.msra.mxu0 %v4972
    %5267 = vmatprep.subr.bf16.mxu0 0
    %5268 = vmatpush1.bf16.msra.mxu0 %v4973
    %5269 = vmatprep.subr.bf16.mxu0 0
    %5270 = vmatpush1.bf16.msra.mxu0 %v4974
    %5271 = vmatprep.subr.bf16.mxu0 0
    %5272 = vmatpush1.bf16.msra.mxu0 %v4975
    %5273 = vmatprep.mubr.bf16.mxu0 %v4158
    %5274 = vmatmul.mubr.bf16.gmra.mrb[0].mxu0 %v4157
    %v5275 = vpop.f32.mrb[0].mxu0
    %v5276 = vadd.f32 %v5235, %v5275
    %v5277 = vpop.f32.mrb[0].mxu0
    %v5278 = vpop.f32.mrb[0].mxu0
    %v5279 = vadd.f32 %v5238, %v5278
    %v5280 = vpop.f32.mrb[0].mxu0
    %5281 = vdwg.mxu0
    %5282 = vmatprep.subr.bf16.mxu0 0
    %5283 = vmatpush1.bf16.msra.mxu0 %v4976
    %5284 = vmatprep.subr.bf16.mxu0 0
    %5285 = vmatpush1.bf16.msra.mxu0 %v4977
    %5286 = vmatprep.subr.bf16.mxu0 0
    %5287 = vmatpush1.bf16.msra.mxu0 %v4978
    %5288 = vmatprep.subr.bf16.mxu0 0
    %5289 = vmatpush1.bf16.msra.mxu0 %v4979
    %5290 = vmatprep.subr.bf16.mxu0 0
    %5291 = vmatpush1.bf16.msra.mxu0 %v4980
    %5292 = vmatprep.subr.bf16.mxu0 0
    %5293 = vmatpush1.bf16.msra.mxu0 %v4981
    %5294 = vmatprep.subr.bf16.mxu0 0
    %5295 = vmatpush1.bf16.msra.mxu0 %v4982
    %5296 = vmatprep.subr.bf16.mxu0 0
    %5297 = vmatpush1.bf16.msra.mxu0 %v4983
    %5298 = vmatprep.subr.bf16.mxu0 0
    %5299 = vmatpush1.bf16.msra.mxu0 %v4984
    %5300 = vmatprep.subr.bf16.mxu0 0
    %5301 = vmatpush1.bf16.msra.mxu0 %v4985
    %5302 = vmatprep.subr.bf16.mxu0 0
    %5303 = vmatpush1.bf16.msra.mxu0 %v4986
    %5304 = vmatprep.subr.bf16.mxu0 0
    %5305 = vmatpush1.bf16.msra.mxu0 %v4987
    %5306 = vmatprep.subr.bf16.mxu0 0
    %5307 = vmatpush1.bf16.msra.mxu0 %v4988
    %5308 = vmatprep.subr.bf16.mxu0 0
    %5309 = vmatpush1.bf16.msra.mxu0 %v4989
    %5310 = vmatprep.subr.bf16.mxu0 0
    %5311 = vmatpush1.bf16.msra.mxu0 %v4990
    %5312 = vmatprep.subr.bf16.mxu0 0
    %5313 = vmatpush1.bf16.msra.mxu0 %v4991
    %5314 = vmatprep.mubr.bf16.mxu0 %v4160
    %5315 = vmatmul.mubr.bf16.gmra.mrb[0].mxu0 %v4159
    %v5316 = vpop.f32.mrb[0].mxu0
    %v5317 = vadd.f32 %v5276, %v5316
    %v5318 = vpop.f32.mrb[0].mxu0
    %v5319 = vpop.f32.mrb[0].mxu0
    %v5320 = vadd.f32 %v5279, %v5319
    %v5321 = vpop.f32.mrb[0].mxu0
    %5322 = vdwg.mxu0
    %5323 = vmatprep.subr.bf16.mxu0 0
    %5324 = vmatpush1.bf16.msra.mxu0 %v4992
    %5325 = vmatprep.subr.bf16.mxu0 0
    %5326 = vmatpush1.bf16.msra.mxu0 %v4993
    %5327 = vmatprep.subr.bf16.mxu0 0
    %5328 = vmatpush1.bf16.msra.mxu0 %v4994
    %5329 = vmatprep.subr.bf16.mxu0 0
    %5330 = vmatpush1.bf16.msra.mxu0 %v4995
    %5331 = vmatprep.subr.bf16.mxu0 0
    %5332 = vmatpush1.bf16.msra.mxu0 %v4996
    %5333 = vmatprep.subr.bf16.mxu0 0
    %5334 = vmatpush1.bf16.msra.mxu0 %v4997
    %5335 = vmatprep.subr.bf16.mxu0 0
    %5336 = vmatpush1.bf16.msra.mxu0 %v4998
    %5337 = vmatprep.subr.bf16.mxu0 0
    %5338 = vmatpush1.bf16.msra.mxu0 %v4999
    %5339 = vmatprep.subr.bf16.mxu0 0
    %5340 = vmatpush1.bf16.msra.mxu0 %v5000
    %5341 = vmatprep.subr.bf16.mxu0 0
    %5342 = vmatpush1.bf16.msra.mxu0 %v5001
    %5343 = vmatprep.subr.bf16.mxu0 0
    %5344 = vmatpush1.bf16.msra.mxu0 %v5002
    %5345 = vmatprep.subr.bf16.mxu0 0
    %5346 = vmatpush1.bf16.msra.mxu0 %v5003
    %5347 = vmatprep.subr.bf16.mxu0 0
    %5348 = vmatpush1.bf16.msra.mxu0 %v5004
    %5349 = vmatprep.subr.bf16.mxu0 0
    %5350 = vmatpush1.bf16.msra.mxu0 %v5005
    %5351 = vmatprep.subr.bf16.mxu0 0
    %5352 = vmatpush1.bf16.msra.mxu0 %v5006
    %5353 = vmatprep.subr.bf16.mxu0 0
    %5354 = vmatpush1.bf16.msra.mxu0 %v5007
    %5355 = vmatprep.mubr.bf16.mxu0 %v4162
    %5356 = vmatmul.mubr.bf16.gmra.mrb[0].mxu0 %v4161
    %v5357 = vpop.f32.mrb[0].mxu0
    %v5358 = vadd.f32 %v5317, %v5357
    %v5359 = vpop.f32.mrb[0].mxu0
    %v5360 = vpop.f32.mrb[0].mxu0
    %v5361 = vadd.f32 %v5320, %v5360
    %v5362 = vpop.f32.mrb[0].mxu0
    %5363 = vdwg.mxu0
    %5364 = vmatprep.subr.bf16.mxu0 0
    %5365 = vmatpush1.bf16.msra.mxu0 %v5008
    %5366 = vmatprep.subr.bf16.mxu0 0
    %5367 = vmatpush1.bf16.msra.mxu0 %v5009
    %5368 = vmatprep.subr.bf16.mxu0 0
    %5369 = vmatpush1.bf16.msra.mxu0 %v5010
    %5370 = vmatprep.subr.bf16.mxu0 0
    %5371 = vmatpush1.bf16.msra.mxu0 %v5011
    %5372 = vmatprep.subr.bf16.mxu0 0
    %5373 = vmatpush1.bf16.msra.mxu0 %v5012
    %5374 = vmatprep.subr.bf16.mxu0 0
    %5375 = vmatpush1.bf16.msra.mxu0 %v5013
    %5376 = vmatprep.subr.bf16.mxu0 0
    %5377 = vmatpush1.bf16.msra.mxu0 %v5014
    %5378 = vmatprep.subr.bf16.mxu0 0
    %5379 = vmatpush1.bf16.msra.mxu0 %v5015
    %5380 = vmatprep.subr.bf16.mxu0 0
    %5381 = vmatpush1.bf16.msra.mxu0 %v5016
    %5382 = vmatprep.subr.bf16.mxu0 0
    %5383 = vmatpush1.bf16.msra.mxu0 %v5017
    %5384 = vmatprep.subr.bf16.mxu0 0
    %5385 = vmatpush1.bf16.msra.mxu0 %v5018
    %5386 = vmatprep.subr.bf16.mxu0 0
    %5387 = vmatpush1.bf16.msra.mxu0 %v5019
    %5388 = vmatprep.subr.bf16.mxu0 0
    %5389 = vmatpush1.bf16.msra.mxu0 %v5020
    %5390 = vmatprep.subr.bf16.mxu0 0
    %5391 = vmatpush1.bf16.msra.mxu0 %v5021
    %5392 = vmatprep.subr.bf16.mxu0 0
    %5393 = vmatpush1.bf16.msra.mxu0 %v5022
    %5394 = vmatprep.subr.bf16.mxu0 0
    %5395 = vmatpush1.bf16.msra.mxu0 %v5023
    %5396 = vmatprep.mubr.bf16.mxu0 %v4164
    %5397 = vmatmul.mubr.bf16.gmra.mrb[0].mxu0 %v4163
    %v5398 = vpop.f32.mrb[0].mxu0
    %v5399 = vadd.f32 %v5358, %v5398
    %v5400 = vpop.f32.mrb[0].mxu0
    %v5401 = vpop.f32.mrb[0].mxu0
    %v5402 = vadd.f32 %v5361, %v5401
    %v5403 = vpop.f32.mrb[0].mxu0
    %5404 = vdwg.mxu0
    %5405 = vmatprep.subr.bf16.mxu0 0
    %5406 = vmatpush1.bf16.msra.mxu0 %v5024
    %5407 = vmatprep.subr.bf16.mxu0 0
    %5408 = vmatpush1.bf16.msra.mxu0 %v5025
    %5409 = vmatprep.subr.bf16.mxu0 0
    %5410 = vmatpush1.bf16.msra.mxu0 %v5026
    %5411 = vmatprep.subr.bf16.mxu0 0
    %5412 = vmatpush1.bf16.msra.mxu0 %v5027
    %5413 = vmatprep.subr.bf16.mxu0 0
    %5414 = vmatpush1.bf16.msra.mxu0 %v5028
    %5415 = vmatprep.subr.bf16.mxu0 0
    %5416 = vmatpush1.bf16.msra.mxu0 %v5029
    %5417 = vmatprep.subr.bf16.mxu0 0
    %5418 = vmatpush1.bf16.msra.mxu0 %v5030
    %5419 = vmatprep.subr.bf16.mxu0 0
    %5420 = vmatpush1.bf16.msra.mxu0 %v5031
    %5421 = vmatprep.subr.bf16.mxu0 0
    %5422 = vmatpush1.bf16.msra.mxu0 %v5032
    %5423 = vmatprep.subr.bf16.mxu0 0
    %5424 = vmatpush1.bf16.msra.mxu0 %v5033
    %5425 = vmatprep.subr.bf16.mxu0 0
    %5426 = vmatpush1.bf16.msra.mxu0 %v5034
    %5427 = vmatprep.subr.bf16.mxu0 0
    %5428 = vmatpush1.bf16.msra.mxu0 %v5035
    %5429 = vmatprep.subr.bf16.mxu0 0
    %5430 = vmatpush1.bf16.msra.mxu0 %v5036
    %5431 = vmatprep.subr.bf16.mxu0 0
    %5432 = vmatpush1.bf16.msra.mxu0 %v5037
    %5433 = vmatprep.subr.bf16.mxu0 0
    %5434 = vmatpush1.bf16.msra.mxu0 %v5038
    %5435 = vmatprep.subr.bf16.mxu0 0
    %5436 = vmatpush1.bf16.msra.mxu0 %v5039
    %5437 = vmatprep.mubr.bf16.mxu0 %v4166
    %5438 = vmatmul.mubr.bf16.gmra.mrb[0].mxu0 %v4165
    %v5439 = vpop.f32.mrb[0].mxu0
    %v5440 = vadd.f32 %v5399, %v5439
    %v5441 = vpop.f32.mrb[0].mxu0
    %v5442 = vpop.f32.mrb[0].mxu0
    %v5443 = vadd.f32 %v5402, %v5442
    %v5444 = vpop.f32.mrb[0].mxu0
    %5445 = vdwg.mxu0
    %5446 = vmatprep.subr.bf16.mxu0 0
    %5447 = vmatpush1.bf16.msra.mxu0 %v5040
    %5448 = vmatprep.subr.bf16.mxu0 0
    %5449 = vmatpush1.bf16.msra.mxu0 %v5041
    %5450 = vmatprep.subr.bf16.mxu0 0
    %5451 = vmatpush1.bf16.msra.mxu0 %v5042
    %5452 = vmatprep.subr.bf16.mxu0 0
    %5453 = vmatpush1.bf16.msra.mxu0 %v5043
    %5454 = vmatprep.subr.bf16.mxu0 0
    %5455 = vmatpush1.bf16.msra.mxu0 %v5044
    %5456 = vmatprep.subr.bf16.mxu0 0
    %5457 = vmatpush1.bf16.msra.mxu0 %v5045
    %5458 = vmatprep.subr.bf16.mxu0 0
    %5459 = vmatpush1.bf16.msra.mxu0 %v5046
    %5460 = vmatprep.subr.bf16.mxu0 0
    %5461 = vmatpush1.bf16.msra.mxu0 %v5047
    %5462 = vmatprep.subr.bf16.mxu0 0
    %5463 = vmatpush1.bf16.msra.mxu0 %v5048
    %5464 = vmatprep.subr.bf16.mxu0 0
    %5465 = vmatpush1.bf16.msra.mxu0 %v5049
    %5466 = vmatprep.subr.bf16.mxu0 0
    %5467 = vmatpush1.bf16.msra.mxu0 %v5050
    %5468 = vmatprep.subr.bf16.mxu0 0
    %5469 = vmatpush1.bf16.msra.mxu0 %v5051
    %5470 = vmatprep.subr.bf16.mxu0 0
    %5471 = vmatpush1.bf16.msra.mxu0 %v5052
    %5472 = vmatprep.subr.bf16.mxu0 0
    %5473 = vmatpush1.bf16.msra.mxu0 %v5053
    %5474 = vmatprep.subr.bf16.mxu0 0
    %5475 = vmatpush1.bf16.msra.mxu0 %v5054
    %5476 = vmatprep.subr.bf16.mxu0 0
    %5477 = vmatpush1.bf16.msra.mxu0 %v5055
    %5478 = vmatprep.mubr.bf16.mxu0 %v4168
    %5479 = vmatmul.mubr.bf16.gmra.mrb[0].mxu0 %v4167
    %v5480 = vpop.f32.mrb[0].mxu0
    %v5481 = vadd.f32 %v5440, %v5480
    %v5482 = vpop.f32.mrb[0].mxu0
    %v5483 = vpop.f32.mrb[0].mxu0
    %v5484 = vadd.f32 %v5443, %v5483
    %v5485 = vpop.f32.mrb[0].mxu0
    %5486 = vdwg.mxu0
    %5487 = vmatprep.subr.bf16.mxu0 0
    %5488 = vmatpush1.bf16.msra.mxu0 %v5056
    %5489 = vmatprep.subr.bf16.mxu0 0
    %5490 = vmatpush1.bf16.msra.mxu0 %v5057
    %5491 = vmatprep.subr.bf16.mxu0 0
    %5492 = vmatpush1.bf16.msra.mxu0 %v5058
    %5493 = vmatprep.subr.bf16.mxu0 0
    %5494 = vmatpush1.bf16.msra.mxu0 %v5059
    %5495 = vmatprep.subr.bf16.mxu0 0
    %5496 = vmatpush1.bf16.msra.mxu0 %v5060
    %5497 = vmatprep.subr.bf16.mxu0 0
    %5498 = vmatpush1.bf16.msra.mxu0 %v5061
    %5499 = vmatprep.subr.bf16.mxu0 0
    %5500 = vmatpush1.bf16.msra.mxu0 %v5062
    %5501 = vmatprep.subr.bf16.mxu0 0
    %5502 = vmatpush1.bf16.msra.mxu0 %v5063
    %5503 = vmatprep.subr.bf16.mxu0 0
    %5504 = vmatpush1.bf16.msra.mxu0 %v5064
    %5505 = vmatprep.subr.bf16.mxu0 0
    %5506 = vmatpush1.bf16.msra.mxu0 %v5065
    %5507 = vmatprep.subr.bf16.mxu0 0
    %5508 = vmatpush1.bf16.msra.mxu0 %v5066
    %5509 = vmatprep.subr.bf16.mxu0 0
    %5510 = vmatpush1.bf16.msra.mxu0 %v5067
    %5511 = vmatprep.subr.bf16.mxu0 0
    %5512 = vmatpush1.bf16.msra.mxu0 %v5068
    %5513 = vmatprep.subr.bf16.mxu0 0
    %5514 = vmatpush1.bf16.msra.mxu0 %v5069
    %5515 = vmatprep.subr.bf16.mxu0 0
    %5516 = vmatpush1.bf16.msra.mxu0 %v5070
    %5517 = vmatprep.subr.bf16.mxu0 0
    %5518 = vmatpush1.bf16.msra.mxu0 %v5071
    %5519 = vmatprep.mubr.bf16.mxu0 %v4170
    %5520 = vmatmul.mubr.bf16.gmra.mrb[0].mxu0 %v4169
    %v5521 = vpop.f32.mrb[0].mxu0
    %v5522 = vadd.f32 %v5481, %v5521
    %v5523 = vpop.f32.mrb[0].mxu0
    %v5524 = vpop.f32.mrb[0].mxu0
    %v5525 = vadd.f32 %v5484, %v5524
    %v5526 = vpop.f32.mrb[0].mxu0
    %5527 = vdwg.mxu0
    %v5528 = vadd.f32 %v3495, %v5522
    %v5529 = vadd.f32 %v3496, %v5525
    %v5530 = vsel %vm78, %v5528, 0.0
    %5531 = vadd.xlane.f32.xlu0 %v5530
    %v5532 = vpop.xlane.xlu0 %5531
    %v5533 = vsel %vm78, %v5529, 0.0
    %5534 = vadd.xlane.f32.xlu0 %v5533
    %v5535 = vpop.xlane.xlu0 %5534
    %v5536 = vmul.f32 %v5532, %v713
    %v5537 = vmul.f32 %v5535, %v713
    %v5538 = vsub.f32 %v5528, %v5536
    %v5539 = vsub.f32 %v5529, %v5537
    %v5540 = vmul.f32 %v5538, %v5538
    %v5541 = vmul.f32 %v5539, %v5539
    %v5542 = vsel %vm78, %v5540, 0.0
    %5543 = vadd.xlane.f32.xlu0 %v5542
    %v5544 = vpop.xlane.xlu0 %5543
    %v5545 = vsel %vm78, %v5541, 0.0
    %5546 = vadd.xlane.f32.xlu0 %v5545
    %v5547 = vpop.xlane.xlu0 %5546
    %v5548 = vmul.f32 %v5544, %v713
    %v5549 = vmul.f32 %v5547, %v713
    %v5550 = vadd.f32 %v5548, 1e-05
    %v5551 = vadd.f32 %v5549, 1e-05
    %v5552 = vrsqrt.pop %v5550
    %v5553 = vrsqrt.pop %v5551
    %v5554 = vmul.f32 %v5538, %v5552
    %v5555 = vmul.f32 %v5539, %v5553
    %v5556 = vlaneseq
    %v5557 = vshrl.u32 %v5556, 7
    %v5558 = vsub.s32 7, %v5557
    %v5559 = vrot.slane %v2828, %v5558
    %v5560 = vmul.f32 %v5554, %v5559
    %v5561 = vmul.f32 %v5555, %v5559
    %v5562 = vlaneseq
    %v5563 = vshrl.u32 %v5562, 7
    %v5564 = vsub.s32 0, %v5563
    %v5565 = vrot.slane %v2829, %v5564
    %v5566 = vadd.f32 %v5560, %v5565
    %v5567 = vadd.f32 %v5561, %v5565
    %v5568 = vpack.c.bf16 %v5567, %v5566
    %v5569 = vld [vmem:[%s9] sm:$0xf]
    %v5570 = vld [vmem:[%s9 + $0x4] sm:$0xf]
    %v5571 = vld [vmem:[%s9 + $0x8] sm:$0xf]
    %v5572 = vld [vmem:[%s9 + $0xc] sm:$0xf]
    %v5573 = vld [vmem:[%s10] sm:$0x1]
    %v5575 = vlaneseq
    %v5576 = vshrl.u32 %v5575, 7
    %v5577 = vsub.s32 0, %v5576
    %v5578 = vrot.slane %v5573, %v5577
    %v5584 = vunpack.c.l.b16 %v5569
    %v5585 = vunpack.c.l.b16 %v5570
    %v5586 = vunpack.c.l.b16 %v5571
    %v5587 = vunpack.c.l.b16 %v5572
    %v5588 = vpack.c.b16 %v5585, %v5584
    %v5589 = vpack.c.b16 %v5587, %v5586
    %v5593 = vsel %vm78, %v5568, 0
    %5595 = vmatprep.subr.bf16.mxu0 0
    %5596 = vmatpush1.bf16.msra.mxu0 %v5588
    %5597 = vmatprep.subr.bf16.mxu0 0
    %5598 = vmatpush1.bf16.msra.mxu0 %v5589
    %5599 = vmatprep.subr.bf16.mxu0 0
    %5600 = vmatpush1.bf16.msra.mxu0 0
    %5601 = vmatprep.subr.bf16.mxu0 0
    %5602 = vmatpush1.bf16.msra.mxu0 0
    %5603 = vmatprep.subr.bf16.mxu0 0
    %5604 = vmatpush1.bf16.msra.mxu0 0
    %5605 = vmatprep.subr.bf16.mxu0 0
    %5606 = vmatpush1.bf16.msra.mxu0 0
    %5607 = vmatprep.subr.bf16.mxu0 0
    %5608 = vmatpush1.bf16.msra.mxu0 0
    %5609 = vmatprep.subr.bf16.mxu0 0
    %5610 = vmatpush1.bf16.msra.mxu0 0
    %5611 = vmatprep.subr.bf16.mxu0 0
    %5612 = vmatpush1.bf16.msra.mxu0 0
    %5613 = vmatprep.subr.bf16.mxu0 0
    %5614 = vmatpush1.bf16.msra.mxu0 0
    %5615 = vmatprep.subr.bf16.mxu0 0
    %5616 = vmatpush1.bf16.msra.mxu0 0
    %5617 = vmatprep.subr.bf16.mxu0 0
    %5618 = vmatpush1.bf16.msra.mxu0 0
    %5619 = vmatprep.subr.bf16.mxu0 0
    %5620 = vmatpush1.bf16.msra.mxu0 0
    %5621 = vmatprep.subr.bf16.mxu0 0
    %5622 = vmatpush1.bf16.msra.mxu0 0
    %5623 = vmatprep.subr.bf16.mxu0 0
    %5624 = vmatpush1.bf16.msra.mxu0 0
    %5625 = vmatprep.subr.bf16.mxu0 0
    %5626 = vmatpush1.bf16.msra.mxu0 0
    %5627 = vmatprep.mubr.bf16.mxu0 0
    %5628 = vmatmul.mubr.bf16.gmra.mrb[0].mxu0 %v5593
    %v5629 = vpop.f32.mrb[0].mxu0
    %v5630 = vadd.f32 %v5578, %v5629
    %v5631 = vpop.f32.mrb[0].mxu0
    %v5632 = vpop.f32.mrb[0].mxu0
    %v5633 = vadd.f32 %v5578, %v5632
    %v5634 = vpop.f32.mrb[0].mxu0
    %5635 = vdwg.mxu0
    %5636 = vst [vmem:[#allocation2] sm:$0xff] %v5630
    %5637 = vst [vmem:[#allocation2 + $0x8] sm:$0xff] %v5633
    // Predicated region
    $region46: #{music_transformer_forward.1} parent=1 // pred_check
      _
    $region47: #{music_transformer_forward.1} parent=1 // pred_check_branch
      %5639 = sbr.rel (0) target = $region49
    $region48: #{music_transformer_forward.1} parent=1 // pred_region
      %s5641 = ssub.s32 256, 256
      %5642 = vsyncadd [#allocation3], %s5641
      %s5643 = sshll.u32 [#allocation2], 4
      %s5644 = int_to_ptr.vmem [resolvable:$true] %s5643
      %5649 = dma.vmem_to_hbm [thread:$0]  %s5644, 256, %s11, [#allocation3], 128, 128, 8
    $region49: #{music_transformer_forward.1} parent=1 // pred_fallthru
      _
    // Predicated region
    $region50: #{music_transformer_forward.1} parent=1 // pred_check
      _
    $region51: #{music_transformer_forward.1} parent=1 // pred_check_branch
      %5651 = sbr.rel (0) target = $region53
    $region52: #{music_transformer_forward.1} parent=1 // pred_region
      %5652 = dma.done [#allocation3], 256
    $region53: #{music_transformer_forward.1} parent=1 // pred_fallthru
      _
    %5653 = vsyncpa [#allocation3], 1

</llo_original>
